<compile_context>
chip_gen: v7x
topology: tpu7x:2x2x1
jax: 0.10.0
libtpu: 0.0.40
codegen_flags: <defaults>
</compile_context>

<pallas_src>
import jax
import jax.numpy as jnp
from jax.experimental import pallas as pl
from jax.experimental.pallas import tpu as pltpu


# ----------------------------------------------------------------------------
# Pallas kernel: full sequence for one layer.  grid = (B, T); h/c in VMEM.
# ----------------------------------------------------------------------------
def _make_layer_kernel(H, W, Cin, Chid, kh, kw):
    PH, PW = kh // 2, kw // 2
    C4 = 4 * Chid
    HW = H * W

    def kernel(x_ref, wx_ref, wh_ref, b_ref, hseq_ref, clast_ref,
               padx_ref, padh_ref, c_ref):
        t = pl.program_id(1)

        # (Re)initialize recurrent state and padded-buffer halos once per batch
        # element; scratch persists across the (B, T) grid, the interiors are
        # fully rewritten each step so the halo stays zero afterwards.
        @pl.when(t == 0)
        def _init():
            padx_ref[...] = jnp.zeros_like(padx_ref)
            padh_ref[...] = jnp.zeros_like(padh_ref)   # interior == h_0 == 0
            c_ref[...] = jnp.zeros_like(c_ref)

        # Stream the current frame into the interior of the padded-x buffer.
        padx_ref[PH:PH + H, PW:PW + W, :] = x_ref[0]

        # im2col: gather all kh*kw taps along the lane axis, one matmul per
        # branch (conv(concat([x, h])) == conv_x(x) + conv_h(h)).
        cols_x = jnp.concatenate(
            [padx_ref[ky:ky + H, kx:kx + W, :]
             for ky in range(kh) for kx in range(kw)],
            axis=-1).reshape(HW, kh * kw * Cin).astype(jnp.bfloat16)
        cols_h = jnp.concatenate(
            [padh_ref[ky:ky + H, kx:kx + W, :]
             for ky in range(kh) for kx in range(kw)],
            axis=-1).reshape(HW, kh * kw * Chid).astype(jnp.bfloat16)

        gates = (jnp.dot(cols_x, wx_ref[...], preferred_element_type=jnp.float32)
                 + jnp.dot(cols_h, wh_ref[...], preferred_element_type=jnp.float32)
                 + b_ref[...])                                    # (HW, 4*Chid) f32

        # Full-lane-width nonlinearities: sigmoid on i/f/o lanes, tanh on g lanes.
        lane = jax.lax.broadcasted_iota(jnp.int32, (HW, C4), 1)
        act = jnp.where(lane < 3 * Chid, jax.nn.sigmoid(gates), jnp.tanh(gates))
        gi = act[:, 0 * Chid:1 * Chid]
        gf = act[:, 1 * Chid:2 * Chid]
        go = act[:, 2 * Chid:3 * Chid]
        gg = act[:, 3 * Chid:4 * Chid]

        c_next = gf * c_ref[...] + gi * gg            # (HW, Chid) f32
        h_next = go * jnp.tanh(c_next)
        c_ref[...] = c_next

        h_hw = h_next.reshape(H, W, Chid)
        # Stash h into the padded-h buffer for the next timestep's convolution
        # (the recurrence never leaves VMEM).
        padh_ref[PH:PH + H, PW:PW + W, :] = h_hw
        hseq_ref[0] = h_hw

        @pl.when(t == pl.num_programs(1) - 1)
        def _final():
            clast_ref[0] = c_next.reshape(H, W, Chid)

    return kernel


def convlstm_layer(x_seq, wx, wh, bias, kh, kw, Chid):
    """One ConvLSTM layer over a full sequence.

    x_seq: (B, T, H, W, Cin) f32
    wx:    (kh*kw*Cin,  4*Chid) bf16
    wh:    (kh*kw*Chid, 4*Chid) bf16
    bias:  (1, 4*Chid) f32
    Returns (h_seq (B,T,H,W,Chid) f32, c_last (B,H,W,Chid) f32).
    """
    B, T, H, W, Cin = x_seq.shape
    C4 = 4 * Chid
    x_flat = x_seq.reshape(B * T, H, W, Cin)

    kernel = _make_layer_kernel(H, W, Cin, Chid, kh, kw)

    grid_spec = pltpu.PrefetchScalarGridSpec(
        num_scalar_prefetch=0,
        grid=(B, T),
        in_specs=[
            pl.BlockSpec((1, H, W, Cin), lambda b, t: (b * T + t, 0, 0, 0)),
            pl.BlockSpec((kh * kw * Cin, C4), lambda b, t: (0, 0)),
            pl.BlockSpec((kh * kw * Chid, C4), lambda b, t: (0, 0)),
            pl.BlockSpec((1, C4), lambda b, t: (0, 0)),
        ],
        out_specs=[
            pl.BlockSpec((1, H, W, Chid), lambda b, t: (b * T + t, 0, 0, 0)),
            pl.BlockSpec((1, H, W, Chid), lambda b, t: (b, 0, 0, 0)),
        ],
        scratch_shapes=[
            pltpu.VMEM((H + kh - 1, W + kw - 1, Cin), jnp.float32),   # padded x
            pltpu.VMEM((H + kh - 1, W + kw - 1, Chid), jnp.float32),  # padded h
            pltpu.VMEM((H * W, Chid), jnp.float32),                   # cell state c
        ],
    )

    h_flat, c_last = pl.pallas_call(
        kernel,
        out_shape=(jax.ShapeDtypeStruct((B * T, H, W, Chid), jnp.float32),
                   jax.ShapeDtypeStruct((B, H, W, Chid), jnp.float32)),
        grid_spec=grid_spec,
        compiler_params=pltpu.CompilerParams(
            dimension_semantics=("parallel", "arbitrary")),
    )(x_flat, wx, wh, bias)

    return h_flat.reshape(B, T, H, W, Chid), c_last


# ----------------------------------------------------------------------------
# ConvLSTM module (parameter setup + layer loop = plain-JAX glue)
# ----------------------------------------------------------------------------
class ConvLSTMPallas:
    def __init__(self, input_dim, hidden_dim, kernel_size, num_layers,
                 batch_first=False, bias=True, return_all_layers=False,
                 key=jax.random.PRNGKey(0)):
        if not isinstance(hidden_dim, list):
            hidden_dim = [hidden_dim] * num_layers
        if not isinstance(kernel_size, list):
            kernel_size = [kernel_size] * num_layers
        assert len(hidden_dim) == len(kernel_size) == num_layers

        self.input_dim = input_dim
        self.hidden_dim = hidden_dim
        self.kernel_size = kernel_size
        self.num_layers = num_layers
        self.batch_first = batch_first
        self.bias = bias
        self.return_all_layers = return_all_layers

        # Deterministic parameter init (mirrors nn.Conv2d default uniform init).
        self.params = []          # (wx_flat bf16, wh_flat bf16, bias f32) per layer
        self.params_pt = []       # (weight_OIHW, bias) f32 for the reference check
        for li in range(num_layers):
            cur_in = input_dim if li == 0 else hidden_dim[li - 1]
            hid = hidden_dim[li]
            kh, kw = kernel_size[li]
            ctot = cur_in + hid
            fan_in = ctot * kh * kw
            bound = 1.0 / (fan_in ** 0.5)
            key, kw_key, kb_key = jax.random.split(key, 3)
            w_pt = jax.random.uniform(kw_key, (4 * hid, ctot, kh, kw),
                                      jnp.float32, -bound, bound)
            b_pt = (jax.random.uniform(kb_key, (4 * hid,), jnp.float32,
                                       -bound, bound)
                    if bias else jnp.zeros((4 * hid,), jnp.float32))
            # split into x / h branches, flatten to ((ky*kw+kx)*C + c, 4*hid)
            wx = jnp.transpose(w_pt[:, :cur_in], (2, 3, 1, 0)) \
                    .reshape(kh * kw * cur_in, 4 * hid).astype(jnp.bfloat16)
            wh = jnp.transpose(w_pt[:, cur_in:], (2, 3, 1, 0)) \
                    .reshape(kh * kw * hid, 4 * hid).astype(jnp.bfloat16)
            self.params.append((wx, wh, b_pt.reshape(1, 4 * hid)))
            self.params_pt.append((w_pt, b_pt))

    def __call__(self, input_tensor):
        # input_tensor: (B,T,C,H,W) if batch_first else (T,B,C,H,W)
        if not self.batch_first:
            input_tensor = jnp.transpose(input_tensor, (1, 0, 2, 3, 4))
        # NCHW frames -> NHWC frames for the kernel
        cur = jnp.transpose(input_tensor, (0, 1, 3, 4, 2)).astype(jnp.float32)

        layer_output_list, last_state_list = [], []
        for li in range(self.num_layers):
            hid = self.hidden_dim[li]
            kh, kw = self.kernel_size[li]
            wx, wh, b = self.params[li]
            h_seq, c_last = convlstm_layer(cur, wx, wh, b, kh, kw, hid)
            cur = h_seq                                        # (B,T,H,W,hid)
            # back to PyTorch NCHW convention
            layer_output_list.append(jnp.transpose(h_seq, (0, 1, 4, 2, 3)))
            last_state_list.append([jnp.transpose(h_seq[:, -1], (0, 3, 1, 2)),
                                    jnp.transpose(c_last, (0, 3, 1, 2))])

        if not self.return_all_layers:
            layer_output_list = layer_output_list[-1:]
            last_state_list = last_state_list[-1:]
        return layer_output_list, last_state_list


# ----------------------------------------------------------------------------
# Pure-JAX reference (mirrors the PyTorch forward) for a correctness check
# ----------------------------------------------------------------------------
def _ref_forward(model, x):
    if not model.batch_first:
        x = jnp.transpose(x, (1, 0, 2, 3, 4))
    B, T, _, H, W = x.shape
    cur = x
    layer_outs, last_states = [], []
    for li in range(model.num_layers):
        hid = model.hidden_dim[li]
        w_pt, b_pt = model.params_pt[li]
        h = jnp.zeros((B, hid, H, W), jnp.float32)
        c = jnp.zeros((B, hid, H, W), jnp.float32)
        outs = []
        for t in range(T):
            combined = jnp.concatenate([cur[:, t], h], axis=1)
            conv = jax.lax.conv_general_dilated(
                combined, w_pt, (1, 1), "SAME",
                dimension_numbers=("NCHW", "OIHW", "NCHW"))
            conv = conv + b_pt[None, :, None, None]
            cc_i, cc_f, cc_o, cc_g = jnp.split(conv, 4, axis=1)
            i = jax.nn.sigmoid(cc_i)
            f = jax.nn.sigmoid(cc_f)
            o = jax.nn.sigmoid(cc_o)
            g = jnp.tanh(cc_g)
            c = f * c + i * g
            h = o * jnp.tanh(c)
            outs.append(h)
        cur = jnp.stack(outs, axis=1)
        layer_outs.append(cur)
        last_states.append([h, c])
    if not model.return_all_layers:
        layer_outs, last_states = layer_outs[-1:], last_states[-1:]
    return layer_outs, last_states


if __name__ == "__main__":
    # small shapes: ConvLSTM(input_dim=4, hidden_dim=32, kernel=(3,3), 1 layer)
    B, T, C, H, W = 2, 8, 4, 16, 16
    HID = 32

    key = jax.random.PRNGKey(0)
    kx, kp = jax.random.split(key)
    x = jax.random.normal(kx, (B, T, C, H, W), jnp.float32)

    model = ConvLSTMPallas(input_dim=C, hidden_dim=HID, kernel_size=(3, 3),
                           num_layers=1, batch_first=True, bias=True,
                           return_all_layers=False, key=kp)

    layer_outputs, last_states = model(x)
    out = jax.block_until_ready(layer_outputs[0])
    h_last = jax.block_until_ready(last_states[0][0])
    c_last = jax.block_until_ready(last_states[0][1])

    # correctness check against a pure-JAX f32 reference of the PyTorch forward
    # (tolerance relaxed because the kernel uses bf16 matmul operands).
    ref_outputs, ref_states = _ref_forward(model, x)
    assert out.shape == (B, T, HID, H, W)
    assert jnp.allclose(out, ref_outputs[0], atol=3e-2, rtol=3e-2)
    assert jnp.allclose(h_last, ref_states[0][0], atol=3e-2, rtol=3e-2)
    assert jnp.allclose(c_last, ref_states[0][1], atol=3e-2, rtol=3e-2)

    print("KERNEL_OK")
</pallas_src>

<mosaic_0001>
module attributes {stable_mosaic.version = 11 : i64} {
  func.func @kernel(%arg0: i32, %arg1: i32, %arg2: memref<1x16x16x4xf32, #tpu.memory_space<vmem>>, %arg3: memref<36x128xbf16, #tpu.memory_space<vmem>>, %arg4: memref<288x128xbf16, #tpu.memory_space<vmem>>, %arg5: memref<1x128xf32, #tpu.memory_space<vmem>>, %arg6: memref<1x16x16x32xf32, #tpu.memory_space<vmem>>, %arg7: memref<1x16x16x32xf32, #tpu.memory_space<vmem>>, %arg8: memref<18x18x4xf32, #tpu.memory_space<vmem>>, %arg9: memref<18x18x32xf32, #tpu.memory_space<vmem>>, %arg10: memref<256x32xf32, #tpu.memory_space<vmem>>) attributes {dimension_semantics = [#tpu.dimension_semantics<parallel>, #tpu.dimension_semantics<arbitrary>], iteration_bounds = array<i64: 2, 8>, scalar_prefetch = 0 : i64, scratch_operands = 3 : i64, tpu.core_type = #tpu.core_type<tc>, window_params = [{transform_indices = @transform_0, window_bounds = array<i64: 1, 16, 16, 4>}, {pipeline_mode = #tpu.pipeline_mode<synchronous>, transform_indices = @transform_1, window_bounds = array<i64: 36, 128>}, {pipeline_mode = #tpu.pipeline_mode<synchronous>, transform_indices = @transform_2, window_bounds = array<i64: 288, 128>}, {pipeline_mode = #tpu.pipeline_mode<synchronous>, transform_indices = @transform_3, window_bounds = array<i64: 1, 128>}, {transform_indices = @transform_4, window_bounds = array<i64: 1, 16, 16, 32>}, {transform_indices = @transform_5, window_bounds = array<i64: 1, 16, 16, 32>}]} {
    %c0_i32 = arith.constant 0 : i32
    %0 = arith.cmpi eq, %arg1, %c0_i32 : i32
    %1 = arith.extui %0 : i1 to i32
    %c0_i32_0 = arith.constant 0 : i32
    %2 = arith.cmpi ne, %1, %c0_i32_0 : i32
    scf.if %2 {
      %cst_79 = arith.constant 0.000000e+00 : f32
      %67 = vector.broadcast %cst_79 : f32 to vector<18x18x4xf32>
      %c0_80 = arith.constant 0 : index
      %c0_81 = arith.constant 0 : index
      %c0_82 = arith.constant 0 : index
      %68 = vector.load %arg8[%c0_80, %c0_81, %c0_82] : memref<18x18x4xf32, #tpu.memory_space<vmem>>, vector<18x18x4xf32>
      tpu.vector_store %arg8[%c0_80, %c0_81, %c0_82], %67 {strides = array<i32>} : memref<18x18x4xf32, #tpu.memory_space<vmem>>, vector<18x18x4xf32>,
      %cst_83 = arith.constant 0.000000e+00 : f32
      %69 = vector.broadcast %cst_83 : f32 to vector<18x18x32xf32>
      %c0_84 = arith.constant 0 : index
      %c0_85 = arith.constant 0 : index
      %c0_86 = arith.constant 0 : index
      %70 = vector.load %arg9[%c0_84, %c0_85, %c0_86] : memref<18x18x32xf32, #tpu.memory_space<vmem>>, vector<18x18x32xf32>
      tpu.vector_store %arg9[%c0_84, %c0_85, %c0_86], %69 {strides = array<i32>} : memref<18x18x32xf32, #tpu.memory_space<vmem>>, vector<18x18x32xf32>,
      %cst_87 = arith.constant 0.000000e+00 : f32
      %71 = vector.broadcast %cst_87 : f32 to vector<256x32xf32>
      %c0_88 = arith.constant 0 : index
      %c0_89 = arith.constant 0 : index
      %72 = vector.load %arg10[%c0_88, %c0_89] : memref<256x32xf32, #tpu.memory_space<vmem>>, vector<256x32xf32>
      tpu.vector_store %arg10[%c0_88, %c0_89], %71 {strides = array<i32>} : memref<256x32xf32, #tpu.memory_space<vmem>>, vector<256x32xf32>,
    } else {
    }
    %c0 = arith.constant 0 : index
    %c0_1 = arith.constant 0 : index
    %c0_2 = arith.constant 0 : index
    %c0_3 = arith.constant 0 : index
    %3 = vector.load %arg2[%c0, %c0_1, %c0_2, %c0_3] : memref<1x16x16x4xf32, #tpu.memory_space<vmem>>, vector<1x16x16x4xf32>
    %4 = vector.shape_cast %3 : vector<1x16x16x4xf32> to vector<16x16x4xf32>
    %c1 = arith.constant 1 : index
    %c1_4 = arith.constant 1 : index
    %c0_5 = arith.constant 0 : index
    %5 = vector.load %arg8[%c1, %c1_4, %c0_5] : memref<18x18x4xf32, #tpu.memory_space<vmem>>, vector<16x16x4xf32>
    tpu.vector_store %arg8[%c1, %c1_4, %c0_5], %4 {strides = array<i32>} : memref<18x18x4xf32, #tpu.memory_space<vmem>>, vector<16x16x4xf32>,
    %c0_6 = arith.constant 0 : index
    %c0_7 = arith.constant 0 : index
    %c0_8 = arith.constant 0 : index
    %6 = vector.load %arg8[%c0_6, %c0_7, %c0_8] : memref<18x18x4xf32, #tpu.memory_space<vmem>>, vector<16x16x4xf32>
    %c0_9 = arith.constant 0 : index
    %c1_10 = arith.constant 1 : index
    %c0_11 = arith.constant 0 : index
    %7 = vector.load %arg8[%c0_9, %c1_10, %c0_11] : memref<18x18x4xf32, #tpu.memory_space<vmem>>, vector<16x16x4xf32>
    %c0_12 = arith.constant 0 : index
    %c2 = arith.constant 2 : index
    %c0_13 = arith.constant 0 : index
    %8 = vector.load %arg8[%c0_12, %c2, %c0_13] : memref<18x18x4xf32, #tpu.memory_space<vmem>>, vector<16x16x4xf32>
    %c1_14 = arith.constant 1 : index
    %c0_15 = arith.constant 0 : index
    %c0_16 = arith.constant 0 : index
    %9 = vector.load %arg8[%c1_14, %c0_15, %c0_16] : memref<18x18x4xf32, #tpu.memory_space<vmem>>, vector<16x16x4xf32>
    %c1_17 = arith.constant 1 : index
    %c1_18 = arith.constant 1 : index
    %c0_19 = arith.constant 0 : index
    %10 = vector.load %arg8[%c1_17, %c1_18, %c0_19] : memref<18x18x4xf32, #tpu.memory_space<vmem>>, vector<16x16x4xf32>
    %c1_20 = arith.constant 1 : index
    %c2_21 = arith.constant 2 : index
    %c0_22 = arith.constant 0 : index
    %11 = vector.load %arg8[%c1_20, %c2_21, %c0_22] : memref<18x18x4xf32, #tpu.memory_space<vmem>>, vector<16x16x4xf32>
    %c2_23 = arith.constant 2 : index
    %c0_24 = arith.constant 0 : index
    %c0_25 = arith.constant 0 : index
    %12 = vector.load %arg8[%c2_23, %c0_24, %c0_25] : memref<18x18x4xf32, #tpu.memory_space<vmem>>, vector<16x16x4xf32>
    %c2_26 = arith.constant 2 : index
    %c1_27 = arith.constant 1 : index
    %c0_28 = arith.constant 0 : index
    %13 = vector.load %arg8[%c2_26, %c1_27, %c0_28] : memref<18x18x4xf32, #tpu.memory_space<vmem>>, vector<16x16x4xf32>
    %c2_29 = arith.constant 2 : index
    %c2_30 = arith.constant 2 : index
    %c0_31 = arith.constant 0 : index
    %14 = vector.load %arg8[%c2_29, %c2_30, %c0_31] : memref<18x18x4xf32, #tpu.memory_space<vmem>>, vector<16x16x4xf32>
    %15 = tpu.concatenate %6, %7, %8, %9, %10, %11, %12, %13, %14 in 2 : vector<16x16x4xf32>, vector<16x16x4xf32>, vector<16x16x4xf32>, vector<16x16x4xf32>, vector<16x16x4xf32>, vector<16x16x4xf32>, vector<16x16x4xf32>, vector<16x16x4xf32>, vector<16x16x4xf32> -> vector<16x16x36xf32>
    %16 = vector.shape_cast %15 : vector<16x16x36xf32> to vector<256x36xf32>
    %17 = arith.truncf %16 : vector<256x36xf32> to vector<256x36xbf16>
    %c0_32 = arith.constant 0 : index
    %c0_33 = arith.constant 0 : index
    %c0_34 = arith.constant 0 : index
    %18 = vector.load %arg9[%c0_32, %c0_33, %c0_34] : memref<18x18x32xf32, #tpu.memory_space<vmem>>, vector<16x16x32xf32>
    %c0_35 = arith.constant 0 : index
    %c1_36 = arith.constant 1 : index
    %c0_37 = arith.constant 0 : index
    %19 = vector.load %arg9[%c0_35, %c1_36, %c0_37] : memref<18x18x32xf32, #tpu.memory_space<vmem>>, vector<16x16x32xf32>
    %c0_38 = arith.constant 0 : index
    %c2_39 = arith.constant 2 : index
    %c0_40 = arith.constant 0 : index
    %20 = vector.load %arg9[%c0_38, %c2_39, %c0_40] : memref<18x18x32xf32, #tpu.memory_space<vmem>>, vector<16x16x32xf32>
    %c1_41 = arith.constant 1 : index
    %c0_42 = arith.constant 0 : index
    %c0_43 = arith.constant 0 : index
    %21 = vector.load %arg9[%c1_41, %c0_42, %c0_43] : memref<18x18x32xf32, #tpu.memory_space<vmem>>, vector<16x16x32xf32>
    %c1_44 = arith.constant 1 : index
    %c1_45 = arith.constant 1 : index
    %c0_46 = arith.constant 0 : index
    %22 = vector.load %arg9[%c1_44, %c1_45, %c0_46] : memref<18x18x32xf32, #tpu.memory_space<vmem>>, vector<16x16x32xf32>
    %c1_47 = arith.constant 1 : index
    %c2_48 = arith.constant 2 : index
    %c0_49 = arith.constant 0 : index
    %23 = vector.load %arg9[%c1_47, %c2_48, %c0_49] : memref<18x18x32xf32, #tpu.memory_space<vmem>>, vector<16x16x32xf32>
    %c2_50 = arith.constant 2 : index
    %c0_51 = arith.constant 0 : index
    %c0_52 = arith.constant 0 : index
    %24 = vector.load %arg9[%c2_50, %c0_51, %c0_52] : memref<18x18x32xf32, #tpu.memory_space<vmem>>, vector<16x16x32xf32>
    %c2_53 = arith.constant 2 : index
    %c1_54 = arith.constant 1 : index
    %c0_55 = arith.constant 0 : index
    %25 = vector.load %arg9[%c2_53, %c1_54, %c0_55] : memref<18x18x32xf32, #tpu.memory_space<vmem>>, vector<16x16x32xf32>
    %c2_56 = arith.constant 2 : index
    %c2_57 = arith.constant 2 : index
    %c0_58 = arith.constant 0 : index
    %26 = vector.load %arg9[%c2_56, %c2_57, %c0_58] : memref<18x18x32xf32, #tpu.memory_space<vmem>>, vector<16x16x32xf32>
    %27 = tpu.concatenate %18, %19, %20, %21, %22, %23, %24, %25, %26 in 2 : vector<16x16x32xf32>, vector<16x16x32xf32>, vector<16x16x32xf32>, vector<16x16x32xf32>, vector<16x16x32xf32>, vector<16x16x32xf32>, vector<16x16x32xf32>, vector<16x16x32xf32>, vector<16x16x32xf32> -> vector<16x16x288xf32>
    %28 = vector.shape_cast %27 : vector<16x16x288xf32> to vector<256x288xf32>
    %29 = arith.truncf %28 : vector<256x288xf32> to vector<256x288xbf16>
    %c0_59 = arith.constant 0 : index
    %c0_60 = arith.constant 0 : index
    %30 = vector.load %arg3[%c0_59, %c0_60] : memref<36x128xbf16, #tpu.memory_space<vmem>>, vector<36x128xbf16>
    %cst = arith.constant dense<0.000000e+00> : vector<256x128xf32>
    %31 = tpu.matmul %17, %30, %cst {dimension_numbers = #tpu.dot_dimension_numbers<[1], [0], [0], [1], [0, 0, 1, 1], [], []>} : vector<256x36xbf16>, vector<36x128xbf16>, vector<256x128xf32> -> vector<256x128xf32>
    %c0_61 = arith.constant 0 : index
    %c0_62 = arith.constant 0 : index
    %32 = vector.load %arg4[%c0_61, %c0_62] : memref<288x128xbf16, #tpu.memory_space<vmem>>, vector<288x128xbf16>
    %cst_63 = arith.constant dense<0.000000e+00> : vector<256x128xf32>
    %33 = tpu.matmul %29, %32, %cst_63 {dimension_numbers = #tpu.dot_dimension_numbers<[1], [0], [0], [1], [0, 0, 1, 1], [], []>} : vector<256x288xbf16>, vector<288x128xbf16>, vector<256x128xf32> -> vector<256x128xf32>
    %34 = arith.addf %31, %33 : vector<256x128xf32>
    %c0_64 = arith.constant 0 : index
    %c0_65 = arith.constant 0 : index
    %35 = vector.load %arg5[%c0_64, %c0_65] : memref<1x128xf32, #tpu.memory_space<vmem>>, vector<1x128xf32>
    %36 = vector.broadcast %35 : vector<1x128xf32> to vector<256x128xf32>
    %37 = arith.addf %34, %36 : vector<256x128xf32>
    %38 = tpu.iota {dimensions = array<i32: 1>} : vector<256x128xi32>
    %c96_i32 = arith.constant 96 : i32
    %39 = vector.broadcast %c96_i32 : i32 to vector<256x128xi32>
    %40 = arith.cmpi slt, %38, %39 : vector<256x128xi32>
    %41 = arith.negf %37 : vector<256x128xf32>
    %42 = math.exp %41 : vector<256x128xf32>
    %cst_66 = arith.constant 1.000000e+00 : f32
    %43 = vector.broadcast %cst_66 : f32 to vector<256x128xf32>
    %44 = arith.addf %43, %42 : vector<256x128xf32>
    %45 = arith.divf %43, %44 : vector<256x128xf32>
    %46 = math.tanh %37 : vector<256x128xf32>
    %47 = arith.select %40, %45, %46 : vector<256x128xi1>, vector<256x128xf32>
    %48 = vector.extract_strided_slice %47 {offsets = [0, 0], sizes = [256, 32], strides = [1, 1]} : vector<256x128xf32> to vector<256x32xf32>
    %49 = vector.extract_strided_slice %47 {offsets = [0, 32], sizes = [256, 32], strides = [1, 1]} : vector<256x128xf32> to vector<256x32xf32>
    %50 = vector.extract_strided_slice %47 {offsets = [0, 64], sizes = [256, 32], strides = [1, 1]} : vector<256x128xf32> to vector<256x32xf32>
    %51 = vector.extract_strided_slice %47 {offsets = [0, 96], sizes = [256, 32], strides = [1, 1]} : vector<256x128xf32> to vector<256x32xf32>
    %c0_67 = arith.constant 0 : index
    %c0_68 = arith.constant 0 : index
    %52 = vector.load %arg10[%c0_67, %c0_68] : memref<256x32xf32, #tpu.memory_space<vmem>>, vector<256x32xf32>
    %53 = arith.mulf %49, %52 : vector<256x32xf32>
    %54 = arith.mulf %48, %51 : vector<256x32xf32>
    %55 = arith.addf %53, %54 : vector<256x32xf32>
    %56 = math.tanh %55 : vector<256x32xf32>
    %57 = arith.mulf %50, %56 : vector<256x32xf32>
    %c0_69 = arith.constant 0 : index
    %c0_70 = arith.constant 0 : index
    %58 = vector.load %arg10[%c0_69, %c0_70] : memref<256x32xf32, #tpu.memory_space<vmem>>, vector<256x32xf32>
    tpu.vector_store %arg10[%c0_69, %c0_70], %55 {strides = array<i32>} : memref<256x32xf32, #tpu.memory_space<vmem>>, vector<256x32xf32>,
    %59 = vector.shape_cast %57 : vector<256x32xf32> to vector<16x16x32xf32>
    %c1_71 = arith.constant 1 : index
    %c1_72 = arith.constant 1 : index
    %c0_73 = arith.constant 0 : index
    %60 = vector.load %arg9[%c1_71, %c1_72, %c0_73] : memref<18x18x32xf32, #tpu.memory_space<vmem>>, vector<16x16x32xf32>
    tpu.vector_store %arg9[%c1_71, %c1_72, %c0_73], %59 {strides = array<i32>} : memref<18x18x32xf32, #tpu.memory_space<vmem>>, vector<16x16x32xf32>,
    %c0_74 = arith.constant 0 : index
    %c0_75 = arith.constant 0 : index
    %c0_76 = arith.constant 0 : index
    %c0_77 = arith.constant 0 : index
    %61 = vector.load %arg6[%c0_74, %c0_75, %c0_76, %c0_77] : memref<1x16x16x32xf32, #tpu.memory_space<vmem>>, vector<1x16x16x32xf32>
    %62 = vector.shape_cast %61 : vector<1x16x16x32xf32> to vector<16x16x32xf32>
    %63 = vector.shape_cast %59 : vector<16x16x32xf32> to vector<1x16x16x32xf32>
    tpu.vector_store %arg6[%c0_74, %c0_75, %c0_76, %c0_77], %63 {strides = array<i32>} : memref<1x16x16x32xf32, #tpu.memory_space<vmem>>, vector<1x16x16x32xf32>,
    %c7_i32 = arith.constant 7 : i32
    %64 = arith.cmpi eq, %arg1, %c7_i32 : i32
    %65 = arith.extui %64 : i1 to i32
    %c0_i32_78 = arith.constant 0 : i32
    %66 = arith.cmpi ne, %65, %c0_i32_78 : i32
    scf.if %66 {
      %67 = vector.shape_cast %55 : vector<256x32xf32> to vector<16x16x32xf32>
      %c0_79 = arith.constant 0 : index
      %c0_80 = arith.constant 0 : index
      %c0_81 = arith.constant 0 : index
      %c0_82 = arith.constant 0 : index
      %68 = vector.load %arg7[%c0_79, %c0_80, %c0_81, %c0_82] : memref<1x16x16x32xf32, #tpu.memory_space<vmem>>, vector<1x16x16x32xf32>
      %69 = vector.shape_cast %68 : vector<1x16x16x32xf32> to vector<16x16x32xf32>
      %70 = vector.shape_cast %67 : vector<16x16x32xf32> to vector<1x16x16x32xf32>
      tpu.vector_store %arg7[%c0_79, %c0_80, %c0_81, %c0_82], %70 {strides = array<i32>} : memref<1x16x16x32xf32, #tpu.memory_space<vmem>>, vector<1x16x16x32xf32>,
    } else {
    }
    return
  }
  func.func @transform_0(%arg0: i32, %arg1: i32) -> (i32, i32, i32, i32) {
    %c8_i32 = arith.constant 8 : i32
    %0 = arith.muli %arg0, %c8_i32 : i32
    %1 = arith.addi %0, %arg1 : i32
    %c0_i32 = arith.constant 0 : i32
    %c0_i32_0 = arith.constant 0 : i32
    %c0_i32_1 = arith.constant 0 : i32
    %c0_i32_2 = arith.constant 0 : i32
    return %1, %c0_i32, %c0_i32_0, %c0_i32_1 : i32, i32, i32, i32
  }
  func.func @transform_1(%arg0: i32, %arg1: i32) -> (i32, i32) {
    %c0_i32 = arith.constant 0 : i32
    %c0_i32_0 = arith.constant 0 : i32
    %c0_i32_1 = arith.constant 0 : i32
    return %c0_i32, %c0_i32_0 : i32, i32
  }
  func.func @transform_2(%arg0: i32, %arg1: i32) -> (i32, i32) {
    %c0_i32 = arith.constant 0 : i32
    %c0_i32_0 = arith.constant 0 : i32
    %c0_i32_1 = arith.constant 0 : i32
    return %c0_i32, %c0_i32_0 : i32, i32
  }
  func.func @transform_3(%arg0: i32, %arg1: i32) -> (i32, i32) {
    %c0_i32 = arith.constant 0 : i32
    %c0_i32_0 = arith.constant 0 : i32
    %c0_i32_1 = arith.constant 0 : i32
    return %c0_i32, %c0_i32_0 : i32, i32
  }
  func.func @transform_4(%arg0: i32, %arg1: i32) -> (i32, i32, i32, i32) {
    %c8_i32 = arith.constant 8 : i32
    %0 = arith.muli %arg0, %c8_i32 : i32
    %1 = arith.addi %0, %arg1 : i32
    %c0_i32 = arith.constant 0 : i32
    %c0_i32_0 = arith.constant 0 : i32
    %c0_i32_1 = arith.constant 0 : i32
    %c0_i32_2 = arith.constant 0 : i32
    return %1, %c0_i32, %c0_i32_0, %c0_i32_1 : i32, i32, i32, i32
  }
  func.func @transform_5(%arg0: i32, %arg1: i32) -> (i32, i32, i32, i32) {
    %c0_i32 = arith.constant 0 : i32
    %c0_i32_0 = arith.constant 0 : i32
    %c0_i32_1 = arith.constant 0 : i32
    %c0_i32_2 = arith.constant 0 : i32
    return %arg0, %c0_i32, %c0_i32_0, %c0_i32_1 : i32, i32, i32, i32
  }
}

</mosaic_0001>

<llo_original>
// kernel: tpu_custom_call.1
$region0: #{tpu_custom_call.1}
  #allocation0 [shape = 'u32[]', space=smem, size = 0x4, offset = 0x4, fixed_abs, tag = 'smem constant byte address 0x4 - core index']
  #allocation1 [shape = 'u32[144,128]{1,0:T(1,128)}', space=vmem, size = 0x12000, scoped, tag = 'internal scratch']
  #allocation2 [shape = 'f32[18,18,4]{2,1,0:T(8,128)}', space=vmem, size = 0x36000, scoped, tag = 'scratch operand']
  #allocation3 [shape = 'f32[18,18,32]{2,1,0:T(8,128)}', space=vmem, size = 0x36000, scoped, tag = 'scratch operand']
  #allocation4 [shape = 'f32[256,32]{1,0:T(8,128)}', space=vmem, size = 0x20000, scoped, tag = 'scratch operand']
  %s0 = inlined_call_operand.vmem [shape: f32[16,16,16,4], index: 0, kind: input, shape index: {}]
  %s1 = inlined_call_operand.vmem [shape: bf16[36,128], index: 1, kind: input, shape index: {}]
  %s2 = inlined_call_operand.vmem [shape: bf16[288,128], index: 2, kind: input, shape index: {}]
  %s3 = inlined_call_operand.vmem [shape: f32[1,128], index: 3, kind: input, shape index: {}]
  %s4 = inlined_call_operand.hbm [shape: f32[16,16,16,32], index: 4, kind: output, shape index: {0}]
  %s5 = inlined_call_operand.hbm [shape: f32[2,16,16,32], index: 5, kind: output, shape index: {1}]
  %6 = xla_tuple %s4, %s5
  %s7 = sld [smem:[#allocation0]]
  $region65: #{tpu_custom_call.1} parent=0
    _
  %s9 = ssub.s32 1, %s7
  %s10 = scalar_select 0, %s9, %s7
  $region1: #{tpu_custom_call.1} parent=0
    #allocation5 [shape = 'u8[262144]{0}', space=vmem, size = 0x40000, scoped, tag = 'output window, operand 0']
    #allocation6 [shape = 's32[2]{0}', space=sflag, size = 0x8, scoped, tag = 'scoped memory for tpu_custom_call.1']
    #allocation7 [shape = 'u8[262144]{0}', space=vmem, size = 0x40000, scoped, tag = 'output window, operand 1']
    #allocation8 [shape = 's32[2]{0}', space=sflag, size = 0x8, scoped, tag = 'scoped memory for tpu_custom_call.1']
    %11 = vsyncpa [#allocation6], 0
    %s12 = scalar_lea.sflag [#allocation6], 1
    %13 = vsyncpa %s12, 0
    %14 = vsyncpa [#allocation8], 0
    %s15 = scalar_lea.sflag [#allocation8], 1
    %16 = vsyncpa %s15, 0
    loop: start=0, step=1, limit=18
    $region2: #{tpu_custom_call.1} parent=1 // loop_pre_header
      _
    $region3: #{tpu_custom_call.1} parent=1 // loop_header
      %s18 = sphi 0, %s22
      %p19 = scmp.ge.s32.totalorder %s18, 18
      %s25 = sphi 0, %s37
      %s26 = sphi 0, %s33
      %s27 = sphi 0, %s25
      %s28 = sphi 0, %s26
      %s29 = sphi 0, %s27
      %s30 = sphi 0, %s28
      %s44 = sphi 0, %s46
      %s47 = sphi 0, %s44
      %s48 = sphi 0, %s47
      %s64 = sphi 0, %s48
      %s68 = sphi 0, %s68
      %s70 = sphi 0, %s68
      %s71 = sphi 0, %s70
      %s85 = sphi 0, %s71
      %s89 = sphi 0, %s89
      %s91 = sphi 0, %s89
      %s92 = sphi 0, %s91
      %s106 = sphi 0, %s92
      %s110 = sphi 0, %s110
      %s112 = sphi 0, %s110
      %s113 = sphi 0, %s112
      %s127 = sphi 0, %s113
      %s137 = sphi 0, %s139
      %s140 = sphi 0, %s137
      %s141 = sphi 0, %s140
      %s157 = sphi 0, %s141
      %s163 = sphi 0, %s165
      %s166 = sphi 0, %s163
      %s167 = sphi 0, %s166
      %s183 = sphi 0, %s167
    $region4: #{tpu_custom_call.1} parent=1 // loop_header_branch
      %21 = sbr.rel (%p19) target = $region8
    $region5: #{tpu_custom_call.1} parent=1 // loop_body
      %s23 = ssub.s32 %s18, 1
      %s24 = ssub.s32 %s18, 2
      %s31 = sadd.s32 1, %s26
      %p32 = scmp.ge.s32.totalorder %s31, 8
      %s33 = scalar_select %p32, 0, %s31
      %s34 = sadd.s32 1, %s25
      %s35 = scalar_select %p32, %s34, %s25
      %p36 = scmp.ge.s32.totalorder %s35, 2
      %s37 = scalar_select %p36, 0, %s35
      %s38 = smul.u32 %s25, 8
      %s39 = sadd.s32 %s38, %s26
      %s40 = smul.u32 %s37, 8
      %s41 = sadd.s32 %s40, %s33
      %s42 = ssub.s32 %s39, %s41
      %p43 = scmp.eq.s32.totalorder %s42, 0
      %s45 = sadd.s32 %s44, 1
      %s46 = scalar_select %p43, %s44, %s45
      %p49 = pneg %p43
      %p50 = scmp.eq.s32.totalorder %s18, 15
      %p51 = por %p49, %p50
      %p52 = scmp.ne.s32.totalorder %s44, %s47
      %p53 = scmp.eq.s32.totalorder %s18, 0
      %p54 = por %p52, %p53
      %p55 = scmp.ne.s32.totalorder %s44, %s47
      %p56 = scmp.eq.s32.totalorder %s23, 15
      %p57 = por %p55, %p56
      %p58 = scmp.ne.s32.totalorder %s47, %s48
      %p59 = scmp.eq.s32.totalorder %s23, 0
      %p60 = por %p58, %p59
      %p61 = scmp.ne.s32.totalorder %s47, %s48
      %p62 = scmp.eq.s32.totalorder %s24, 15
      %p63 = por %p61, %p62
      %p65 = scmp.ne.s32.totalorder %s48, %s64
      %p66 = scmp.eq.s32.totalorder %s24, 0
      %p67 = por %p65, %p66
      %s69 = sadd.s32 %s68, 1
      %p72 = scmp.eq.s32.totalorder %s18, 15
      %p73 = scmp.ne.s32.totalorder %s68, %s70
      %p74 = scmp.eq.s32.totalorder %s18, 0
      %p75 = por %p73, %p74
      %p76 = scmp.ne.s32.totalorder %s68, %s70
      %p77 = scmp.eq.s32.totalorder %s23, 15
      %p78 = por %p76, %p77
      %p79 = scmp.ne.s32.totalorder %s70, %s71
      %p80 = scmp.eq.s32.totalorder %s23, 0
      %p81 = por %p79, %p80
      %p82 = scmp.ne.s32.totalorder %s70, %s71
      %p83 = scmp.eq.s32.totalorder %s24, 15
      %p84 = por %p82, %p83
      %p86 = scmp.ne.s32.totalorder %s71, %s85
      %p87 = scmp.eq.s32.totalorder %s24, 0
      %p88 = por %p86, %p87
      %s90 = sadd.s32 %s89, 1
      %p93 = scmp.eq.s32.totalorder %s18, 15
      %p94 = scmp.ne.s32.totalorder %s89, %s91
      %p95 = scmp.eq.s32.totalorder %s18, 0
      %p96 = por %p94, %p95
      %p97 = scmp.ne.s32.totalorder %s89, %s91
      %p98 = scmp.eq.s32.totalorder %s23, 15
      %p99 = por %p97, %p98
      %p100 = scmp.ne.s32.totalorder %s91, %s92
      %p101 = scmp.eq.s32.totalorder %s23, 0
      %p102 = por %p100, %p101
      %p103 = scmp.ne.s32.totalorder %s91, %s92
      %p104 = scmp.eq.s32.totalorder %s24, 15
      %p105 = por %p103, %p104
      %p107 = scmp.ne.s32.totalorder %s92, %s106
      %p108 = scmp.eq.s32.totalorder %s24, 0
      %p109 = por %p107, %p108
      %s111 = sadd.s32 %s110, 1
      %p114 = scmp.eq.s32.totalorder %s18, 15
      %p115 = scmp.ne.s32.totalorder %s110, %s112
      %p116 = scmp.eq.s32.totalorder %s18, 0
      %p117 = por %p115, %p116
      %p118 = scmp.ne.s32.totalorder %s110, %s112
      %p119 = scmp.eq.s32.totalorder %s23, 15
      %p120 = por %p118, %p119
      %p121 = scmp.ne.s32.totalorder %s112, %s113
      %p122 = scmp.eq.s32.totalorder %s23, 0
      %p123 = por %p121, %p122
      %p124 = scmp.ne.s32.totalorder %s112, %s113
      %p125 = scmp.eq.s32.totalorder %s24, 15
      %p126 = por %p124, %p125
      %p128 = scmp.ne.s32.totalorder %s113, %s127
      %p129 = scmp.eq.s32.totalorder %s24, 0
      %p130 = por %p128, %p129
      %s131 = smul.u32 %s25, 8
      %s132 = sadd.s32 %s131, %s26
      %s133 = smul.u32 %s37, 8
      %s134 = sadd.s32 %s133, %s33
      %s135 = ssub.s32 %s132, %s134
      %p136 = scmp.eq.s32.totalorder %s135, 0
      %s138 = sadd.s32 %s137, 1
      %s139 = scalar_select %p136, %s137, %s138
      %p142 = pneg %p136
      %p143 = scmp.eq.s32.totalorder %s18, 15
      %p144 = por %p142, %p143
      %p145 = scmp.ne.s32.totalorder %s137, %s140
      %p146 = scmp.eq.s32.totalorder %s18, 0
      %p147 = por %p145, %p146
      %p148 = scmp.ne.s32.totalorder %s137, %s140
      %p149 = scmp.eq.s32.totalorder %s23, 15
      %p150 = por %p148, %p149
      %p151 = scmp.ne.s32.totalorder %s140, %s141
      %p152 = scmp.eq.s32.totalorder %s23, 0
      %p153 = por %p151, %p152
      %p154 = scmp.ne.s32.totalorder %s140, %s141
      %p155 = scmp.eq.s32.totalorder %s24, 15
      %p156 = por %p154, %p155
      %p158 = scmp.ne.s32.totalorder %s141, %s157
      %p159 = scmp.eq.s32.totalorder %s24, 0
      %p160 = por %p158, %p159
      %s161 = ssub.s32 %s25, %s37
      %p162 = scmp.eq.s32.totalorder %s161, 0
      %s164 = sadd.s32 %s163, 1
      %s165 = scalar_select %p162, %s163, %s164
      %p168 = pneg %p162
      %p169 = scmp.eq.s32.totalorder %s18, 15
      %p170 = por %p168, %p169
      %p171 = scmp.ne.s32.totalorder %s163, %s166
      %p172 = scmp.eq.s32.totalorder %s18, 0
      %p173 = por %p171, %p172
      %p174 = scmp.ne.s32.totalorder %s163, %s166
      %p175 = scmp.eq.s32.totalorder %s23, 15
      %p176 = por %p174, %p175
      %p177 = scmp.ne.s32.totalorder %s166, %s167
      %p178 = scmp.eq.s32.totalorder %s23, 0
      %p179 = por %p177, %p178
      %p180 = scmp.ne.s32.totalorder %s166, %s167
      %p181 = scmp.eq.s32.totalorder %s24, 15
      %p182 = por %p180, %p181
      %p184 = scmp.ne.s32.totalorder %s167, %s183
      %p185 = scmp.eq.s32.totalorder %s24, 0
      %p186 = por %p184, %p185
      %p187 = scmp.le.s32.totalorder 1, %s18
      %p188 = scmp.lt.s32.totalorder %s18, 17
      %p189 = pnand %p187, %p188
      %p190 = pneg %p189
      // Predicated region
      $region9: #{tpu_custom_call.1} parent=5 // pred_check
        _
      $region10: #{tpu_custom_call.1} parent=5 // pred_check_branch
        %192 = sbr.rel (%p189) target = $region12
      $region11: #{tpu_custom_call.1} parent=5 // pred_region
        %s193 = ssub.s32 %s18, 1
        // Predicated region
        $region13: #{tpu_custom_call.1} parent=11 // pred_check
          %p194 = pneg %p81
        $region14: #{tpu_custom_call.1} parent=11 // pred_check_branch
          %196 = sbr.rel (%p194) target = $region16
        $region15: #{tpu_custom_call.1} parent=11 // pred_region
          _
        $region16: #{tpu_custom_call.1} parent=11 // pred_fallthru
          _
        // Predicated region
        $region17: #{tpu_custom_call.1} parent=11 // pred_check
          %p197 = pneg %p102
        $region18: #{tpu_custom_call.1} parent=11 // pred_check_branch
          %199 = sbr.rel (%p197) target = $region20
        $region19: #{tpu_custom_call.1} parent=11 // pred_region
          _
        $region20: #{tpu_custom_call.1} parent=11 // pred_fallthru
          _
        // Predicated region
        $region21: #{tpu_custom_call.1} parent=11 // pred_check
          %p200 = pneg %p123
        $region22: #{tpu_custom_call.1} parent=11 // pred_check_branch
          %202 = sbr.rel (%p200) target = $region24
        $region23: #{tpu_custom_call.1} parent=11 // pred_region
          _
        $region24: #{tpu_custom_call.1} parent=11 // pred_fallthru
          _
      $region12: #{tpu_custom_call.1} parent=5 // pred_fallthru
        _
      %p203 = scmp.lt.s32.totalorder %s18, 16
      // Predicated region
      $region25: #{tpu_custom_call.1} parent=5 // pred_check
        %p204 = pneg %p203
      $region26: #{tpu_custom_call.1} parent=5 // pred_check_branch
        %206 = sbr.rel (%p204) target = $region28
      $region27: #{tpu_custom_call.1} parent=5 // pred_region
        // Predicated region
        $region29: #{tpu_custom_call.1} parent=27 // pred_check
          %p207 = pneg %p54
        $region30: #{tpu_custom_call.1} parent=27 // pred_check_branch
          %209 = sbr.rel (%p207) target = $region32
        $region31: #{tpu_custom_call.1} parent=27 // pred_region
          %s210 = smul.u32 %s25, 8
          %s211 = sadd.s32 %s210, %s26
          %p212 = scmp.lt.s32.totalorder %s211, 15
          %s213 = scalar_select %p212, %s211, 15
          %s214 = smul.addr %s213, 32
          %s215 = smul.addr %s214, 8
          %s216 = scalar_lea.vmem %s0, %s215
          %s217 = smul.u32 %s25, 8
          %s218 = sadd.s32 %s217, %s26
        $region32: #{tpu_custom_call.1} parent=27 // pred_fallthru
          _
      $region28: #{tpu_custom_call.1} parent=5 // pred_fallthru
        _
      %p219 = scmp.le.s32.totalorder 1, %s18
      %p220 = scmp.lt.s32.totalorder %s18, 17
      %p221 = pnand %p219, %p220
      %p222 = pneg %p221
      // Predicated region
      $region33: #{tpu_custom_call.1} parent=5 // pred_check
        _
      $region34: #{tpu_custom_call.1} parent=5 // pred_check_branch
        %224 = sbr.rel (%p221) target = $region36
      $region35: #{tpu_custom_call.1} parent=5 // pred_region
        %s225 = ssub.s32 %s18, 1
        %s226 = smul.u32 %s27, 8
        %s227 = sadd.s32 %s226, %s28
        %p228 = scmp.lt.s32.totalorder %s227, 15
        %s229 = scalar_select %p228, %s227, 15
        %s230 = smul.addr %s229, 32
        %s231 = smul.addr %s230, 8
        %s232 = scalar_lea.vmem %s0, %s231
        %p233 = pneg %p60
        %p234 = pneg %p57
        %p235 = pneg %p81
        %p236 = pneg %p78
        %p237 = pneg %p102
        %p238 = pneg %p99
        %p239 = pneg %p123
        %p240 = pneg %p120
        %p241 = pneg %p153
        %p242 = pneg %p150
        %s243 = sand.u32 %s140, 1
        %s244 = scalar_lea.sflag [#allocation6], %s243
        %s245 = sand.u32 %s140, 1
        %s246 = smul.addr %s245, 256
        %s247 = scalar_lea.vmem [#allocation5], %s246
        %p248 = pneg %p179
        %p249 = pneg %p176
        %s250 = sand.u32 %s166, 1
        %s251 = scalar_lea.sflag [#allocation8], %s250
        %s252 = sand.u32 %s166, 1
        %s253 = smul.addr %s252, 256
        %s254 = scalar_lea.vmem [#allocation7], %s253
        %s255 = smul.u32 %s27, 8
        %s256 = sadd.s32 %s255, %s28
        %p257 = scmp.lt.s32.totalorder %s256, 15
        %s258 = scalar_select %p257, %s256, 15
        %s259 = smul.addr %s258, 32
        %s260 = smul.addr %s259, 8
        %s261 = scalar_lea.vmem %s0, %s260
        %s262 = smul.u32 %s27, 8
        %s263 = sadd.s32 %s262, %s28
        %s264 = smul.u32 %s27, 8
        %s265 = sadd.s32 %s264, %s28
        %p267 = scmp.eq.s32.totalorder %s28, 0
        // Predicated region
        $region37: #{tpu_custom_call.1} parent=35 // pred_check
          %p268 = pneg %p267
        $region38: #{tpu_custom_call.1} parent=35 // pred_check_branch
          %270 = sbr.rel (%p268) target = $region40
        $region39: #{tpu_custom_call.1} parent=35 // pred_region
          %vm271 = vcmask 31744
          %272 = vst.msk [vmem:[#allocation2] sm:$0xff] %vm271, 0.0
          %273 = vst.msk [vmem:[#allocation2 + $0x8] sm:$0xff] %vm271, 0.0
          %vm274 = vcmask 25600
          %275 = vst.msk [vmem:[#allocation2 + $0x10] sm:$0x3] %vm274, 0.0
          %276 = vst.msk [vmem:[#allocation2 + $0x18] sm:$0xff] %vm271, 0.0
          %277 = vst.msk [vmem:[#allocation2 + $0x20] sm:$0xff] %vm271, 0.0
          %278 = vst.msk [vmem:[#allocation2 + $0x28] sm:$0x3] %vm274, 0.0
          %279 = vst.msk [vmem:[#allocation2 + $0x30] sm:$0xff] %vm271, 0.0
          %280 = vst.msk [vmem:[#allocation2 + $0x38] sm:$0xff] %vm271, 0.0
          %281 = vst.msk [vmem:[#allocation2 + $0x40] sm:$0x3] %vm274, 0.0
          %282 = vst.msk [vmem:[#allocation2 + $0x48] sm:$0xff] %vm271, 0.0
          %283 = vst.msk [vmem:[#allocation2 + $0x50] sm:$0xff] %vm271, 0.0
          %284 = vst.msk [vmem:[#allocation2 + $0x58] sm:$0x3] %vm274, 0.0
          %285 = vst.msk [vmem:[#allocation2 + $0x60] sm:$0xff] %vm271, 0.0
          %286 = vst.msk [vmem:[#allocation2 + $0x68] sm:$0xff] %vm271, 0.0
          %287 = vst.msk [vmem:[#allocation2 + $0x70] sm:$0x3] %vm274, 0.0
          %288 = vst.msk [vmem:[#allocation2 + $0x78] sm:$0xff] %vm271, 0.0
          %289 = vst.msk [vmem:[#allocation2 + $0x80] sm:$0xff] %vm271, 0.0
          %290 = vst.msk [vmem:[#allocation2 + $0x88] sm:$0x3] %vm274, 0.0
          %291 = vst.msk [vmem:[#allocation2 + $0x90] sm:$0xff] %vm271, 0.0
          %292 = vst.msk [vmem:[#allocation2 + $0x98] sm:$0xff] %vm271, 0.0
          %293 = vst.msk [vmem:[#allocation2 + $0xa0] sm:$0x3] %vm274, 0.0
          %294 = vst.msk [vmem:[#allocation2 + $0xa8] sm:$0xff] %vm271, 0.0
          %295 = vst.msk [vmem:[#allocation2 + $0xb0] sm:$0xff] %vm271, 0.0
          %296 = vst.msk [vmem:[#allocation2 + $0xb8] sm:$0x3] %vm274, 0.0
          %297 = vst.msk [vmem:[#allocation2 + $0xc0] sm:$0xff] %vm271, 0.0
          %298 = vst.msk [vmem:[#allocation2 + $0xc8] sm:$0xff] %vm271, 0.0
          %299 = vst.msk [vmem:[#allocation2 + $0xd0] sm:$0x3] %vm274, 0.0
          %300 = vst.msk [vmem:[#allocation2 + $0xd8] sm:$0xff] %vm271, 0.0
          %301 = vst.msk [vmem:[#allocation2 + $0xe0] sm:$0xff] %vm271, 0.0
          %302 = vst.msk [vmem:[#allocation2 + $0xe8] sm:$0x3] %vm274, 0.0
          %303 = vst.msk [vmem:[#allocation2 + $0xf0] sm:$0xff] %vm271, 0.0
          %304 = vst.msk [vmem:[#allocation2 + $0xf8] sm:$0xff] %vm271, 0.0
          %305 = vst.msk [vmem:[#allocation2 + $0x100] sm:$0x3] %vm274, 0.0
          %306 = vst.msk [vmem:[#allocation2 + $0x108] sm:$0xff] %vm271, 0.0
          %307 = vst.msk [vmem:[#allocation2 + $0x110] sm:$0xff] %vm271, 0.0
          %308 = vst.msk [vmem:[#allocation2 + $0x118] sm:$0x3] %vm274, 0.0
          %309 = vst.msk [vmem:[#allocation2 + $0x120] sm:$0xff] %vm271, 0.0
          %310 = vst.msk [vmem:[#allocation2 + $0x128] sm:$0xff] %vm271, 0.0
          %311 = vst.msk [vmem:[#allocation2 + $0x130] sm:$0x3] %vm274, 0.0
          %312 = vst.msk [vmem:[#allocation2 + $0x138] sm:$0xff] %vm271, 0.0
          %313 = vst.msk [vmem:[#allocation2 + $0x140] sm:$0xff] %vm271, 0.0
          %314 = vst.msk [vmem:[#allocation2 + $0x148] sm:$0x3] %vm274, 0.0
          %315 = vst.msk [vmem:[#allocation2 + $0x150] sm:$0xff] %vm271, 0.0
          %316 = vst.msk [vmem:[#allocation2 + $0x158] sm:$0xff] %vm271, 0.0
          %317 = vst.msk [vmem:[#allocation2 + $0x160] sm:$0x3] %vm274, 0.0
          %318 = vst.msk [vmem:[#allocation2 + $0x168] sm:$0xff] %vm271, 0.0
          %319 = vst.msk [vmem:[#allocation2 + $0x170] sm:$0xff] %vm271, 0.0
          %320 = vst.msk [vmem:[#allocation2 + $0x178] sm:$0x3] %vm274, 0.0
          %321 = vst.msk [vmem:[#allocation2 + $0x180] sm:$0xff] %vm271, 0.0
          %322 = vst.msk [vmem:[#allocation2 + $0x188] sm:$0xff] %vm271, 0.0
          %323 = vst.msk [vmem:[#allocation2 + $0x190] sm:$0x3] %vm274, 0.0
          %324 = vst.msk [vmem:[#allocation2 + $0x198] sm:$0xff] %vm271, 0.0
          %325 = vst.msk [vmem:[#allocation2 + $0x1a0] sm:$0xff] %vm271, 0.0
          %326 = vst.msk [vmem:[#allocation2 + $0x1a8] sm:$0x3] %vm274, 0.0
          %vm327 = vcmask 261120
          %328 = vst.msk [vmem:[#allocation3] sm:$0xff] %vm327, 0.0
          %329 = vst.msk [vmem:[#allocation3 + $0x8] sm:$0xff] %vm327, 0.0
          %vm330 = vcmask 254976
          %331 = vst.msk [vmem:[#allocation3 + $0x10] sm:$0x3] %vm330, 0.0
          %332 = vst.msk [vmem:[#allocation3 + $0x18] sm:$0xff] %vm327, 0.0
          %333 = vst.msk [vmem:[#allocation3 + $0x20] sm:$0xff] %vm327, 0.0
          %334 = vst.msk [vmem:[#allocation3 + $0x28] sm:$0x3] %vm330, 0.0
          %335 = vst.msk [vmem:[#allocation3 + $0x30] sm:$0xff] %vm327, 0.0
          %336 = vst.msk [vmem:[#allocation3 + $0x38] sm:$0xff] %vm327, 0.0
          %337 = vst.msk [vmem:[#allocation3 + $0x40] sm:$0x3] %vm330, 0.0
          %338 = vst.msk [vmem:[#allocation3 + $0x48] sm:$0xff] %vm327, 0.0
          %339 = vst.msk [vmem:[#allocation3 + $0x50] sm:$0xff] %vm327, 0.0
          %340 = vst.msk [vmem:[#allocation3 + $0x58] sm:$0x3] %vm330, 0.0
          %341 = vst.msk [vmem:[#allocation3 + $0x60] sm:$0xff] %vm327, 0.0
          %342 = vst.msk [vmem:[#allocation3 + $0x68] sm:$0xff] %vm327, 0.0
          %343 = vst.msk [vmem:[#allocation3 + $0x70] sm:$0x3] %vm330, 0.0
          %344 = vst.msk [vmem:[#allocation3 + $0x78] sm:$0xff] %vm327, 0.0
          %345 = vst.msk [vmem:[#allocation3 + $0x80] sm:$0xff] %vm327, 0.0
          %346 = vst.msk [vmem:[#allocation3 + $0x88] sm:$0x3] %vm330, 0.0
          %347 = vst.msk [vmem:[#allocation3 + $0x90] sm:$0xff] %vm327, 0.0
          %348 = vst.msk [vmem:[#allocation3 + $0x98] sm:$0xff] %vm327, 0.0
          %349 = vst.msk [vmem:[#allocation3 + $0xa0] sm:$0x3] %vm330, 0.0
          %350 = vst.msk [vmem:[#allocation3 + $0xa8] sm:$0xff] %vm327, 0.0
          %351 = vst.msk [vmem:[#allocation3 + $0xb0] sm:$0xff] %vm327, 0.0
          %352 = vst.msk [vmem:[#allocation3 + $0xb8] sm:$0x3] %vm330, 0.0
          %353 = vst.msk [vmem:[#allocation3 + $0xc0] sm:$0xff] %vm327, 0.0
          %354 = vst.msk [vmem:[#allocation3 + $0xc8] sm:$0xff] %vm327, 0.0
          %355 = vst.msk [vmem:[#allocation3 + $0xd0] sm:$0x3] %vm330, 0.0
          %356 = vst.msk [vmem:[#allocation3 + $0xd8] sm:$0xff] %vm327, 0.0
          %357 = vst.msk [vmem:[#allocation3 + $0xe0] sm:$0xff] %vm327, 0.0
          %358 = vst.msk [vmem:[#allocation3 + $0xe8] sm:$0x3] %vm330, 0.0
          %359 = vst.msk [vmem:[#allocation3 + $0xf0] sm:$0xff] %vm327, 0.0
          %360 = vst.msk [vmem:[#allocation3 + $0xf8] sm:$0xff] %vm327, 0.0
          %361 = vst.msk [vmem:[#allocation3 + $0x100] sm:$0x3] %vm330, 0.0
          %362 = vst.msk [vmem:[#allocation3 + $0x108] sm:$0xff] %vm327, 0.0
          %363 = vst.msk [vmem:[#allocation3 + $0x110] sm:$0xff] %vm327, 0.0
          %364 = vst.msk [vmem:[#allocation3 + $0x118] sm:$0x3] %vm330, 0.0
          %365 = vst.msk [vmem:[#allocation3 + $0x120] sm:$0xff] %vm327, 0.0
          %366 = vst.msk [vmem:[#allocation3 + $0x128] sm:$0xff] %vm327, 0.0
          %367 = vst.msk [vmem:[#allocation3 + $0x130] sm:$0x3] %vm330, 0.0
          %368 = vst.msk [vmem:[#allocation3 + $0x138] sm:$0xff] %vm327, 0.0
          %369 = vst.msk [vmem:[#allocation3 + $0x140] sm:$0xff] %vm327, 0.0
          %370 = vst.msk [vmem:[#allocation3 + $0x148] sm:$0x3] %vm330, 0.0
          %371 = vst.msk [vmem:[#allocation3 + $0x150] sm:$0xff] %vm327, 0.0
          %372 = vst.msk [vmem:[#allocation3 + $0x158] sm:$0xff] %vm327, 0.0
          %373 = vst.msk [vmem:[#allocation3 + $0x160] sm:$0x3] %vm330, 0.0
          %374 = vst.msk [vmem:[#allocation3 + $0x168] sm:$0xff] %vm327, 0.0
          %375 = vst.msk [vmem:[#allocation3 + $0x170] sm:$0xff] %vm327, 0.0
          %376 = vst.msk [vmem:[#allocation3 + $0x178] sm:$0x3] %vm330, 0.0
          %377 = vst.msk [vmem:[#allocation3 + $0x180] sm:$0xff] %vm327, 0.0
          %378 = vst.msk [vmem:[#allocation3 + $0x188] sm:$0xff] %vm327, 0.0
          %379 = vst.msk [vmem:[#allocation3 + $0x190] sm:$0x3] %vm330, 0.0
          %380 = vst.msk [vmem:[#allocation3 + $0x198] sm:$0xff] %vm327, 0.0
          %381 = vst.msk [vmem:[#allocation3 + $0x1a0] sm:$0xff] %vm327, 0.0
          %382 = vst.msk [vmem:[#allocation3 + $0x1a8] sm:$0x3] %vm330, 0.0
          %383 = vst.msk [vmem:[#allocation4] sm:$0xff] %vm327, 0.0
          %384 = vst.msk [vmem:[#allocation4 + $0x8] sm:$0xff] %vm327, 0.0
          %385 = vst.msk [vmem:[#allocation4 + $0x10] sm:$0xff] %vm327, 0.0
          %386 = vst.msk [vmem:[#allocation4 + $0x18] sm:$0xff] %vm327, 0.0
          %387 = vst.msk [vmem:[#allocation4 + $0x20] sm:$0xff] %vm327, 0.0
          %388 = vst.msk [vmem:[#allocation4 + $0x28] sm:$0xff] %vm327, 0.0
          %389 = vst.msk [vmem:[#allocation4 + $0x30] sm:$0xff] %vm327, 0.0
          %390 = vst.msk [vmem:[#allocation4 + $0x38] sm:$0xff] %vm327, 0.0
          %391 = vst.msk [vmem:[#allocation4 + $0x40] sm:$0xff] %vm327, 0.0
          %392 = vst.msk [vmem:[#allocation4 + $0x48] sm:$0xff] %vm327, 0.0
          %393 = vst.msk [vmem:[#allocation4 + $0x50] sm:$0xff] %vm327, 0.0
          %394 = vst.msk [vmem:[#allocation4 + $0x58] sm:$0xff] %vm327, 0.0
          %395 = vst.msk [vmem:[#allocation4 + $0x60] sm:$0xff] %vm327, 0.0
          %396 = vst.msk [vmem:[#allocation4 + $0x68] sm:$0xff] %vm327, 0.0
          %397 = vst.msk [vmem:[#allocation4 + $0x70] sm:$0xff] %vm327, 0.0
          %398 = vst.msk [vmem:[#allocation4 + $0x78] sm:$0xff] %vm327, 0.0
          %399 = vst.msk [vmem:[#allocation4 + $0x80] sm:$0xff] %vm327, 0.0
          %400 = vst.msk [vmem:[#allocation4 + $0x88] sm:$0xff] %vm327, 0.0
          %401 = vst.msk [vmem:[#allocation4 + $0x90] sm:$0xff] %vm327, 0.0
          %402 = vst.msk [vmem:[#allocation4 + $0x98] sm:$0xff] %vm327, 0.0
          %403 = vst.msk [vmem:[#allocation4 + $0xa0] sm:$0xff] %vm327, 0.0
          %404 = vst.msk [vmem:[#allocation4 + $0xa8] sm:$0xff] %vm327, 0.0
          %405 = vst.msk [vmem:[#allocation4 + $0xb0] sm:$0xff] %vm327, 0.0
          %406 = vst.msk [vmem:[#allocation4 + $0xb8] sm:$0xff] %vm327, 0.0
          %407 = vst.msk [vmem:[#allocation4 + $0xc0] sm:$0xff] %vm327, 0.0
          %408 = vst.msk [vmem:[#allocation4 + $0xc8] sm:$0xff] %vm327, 0.0
          %409 = vst.msk [vmem:[#allocation4 + $0xd0] sm:$0xff] %vm327, 0.0
          %410 = vst.msk [vmem:[#allocation4 + $0xd8] sm:$0xff] %vm327, 0.0
          %411 = vst.msk [vmem:[#allocation4 + $0xe0] sm:$0xff] %vm327, 0.0
          %412 = vst.msk [vmem:[#allocation4 + $0xe8] sm:$0xff] %vm327, 0.0
          %413 = vst.msk [vmem:[#allocation4 + $0xf0] sm:$0xff] %vm327, 0.0
          %414 = vst.msk [vmem:[#allocation4 + $0xf8] sm:$0xff] %vm327, 0.0
        $region40: #{tpu_custom_call.1} parent=35 // pred_fallthru
          _
        %v415 = vld [vmem:[%s261] sm:$0xff]
        %v416 = vld [vmem:[%s261 + $0x8] sm:$0xff]
        %v417 = vld [vmem:[%s261 + $0x10] sm:$0xff]
        %v418 = vld [vmem:[%s261 + $0x18] sm:$0xff]
        %v419 = vld [vmem:[%s261 + $0x20] sm:$0xff]
        %v420 = vld [vmem:[%s261 + $0x28] sm:$0xff]
        %v421 = vld [vmem:[%s261 + $0x30] sm:$0xff]
        %v422 = vld [vmem:[%s261 + $0x38] sm:$0xff]
        %v423 = vld [vmem:[%s261 + $0x40] sm:$0xff]
        %v424 = vld [vmem:[%s261 + $0x48] sm:$0xff]
        %v425 = vld [vmem:[%s261 + $0x50] sm:$0xff]
        %v426 = vld [vmem:[%s261 + $0x58] sm:$0xff]
        %v427 = vld [vmem:[%s261 + $0x60] sm:$0xff]
        %v428 = vld [vmem:[%s261 + $0x68] sm:$0xff]
        %v429 = vld [vmem:[%s261 + $0x70] sm:$0xff]
        %v430 = vld [vmem:[%s261 + $0x78] sm:$0xff]
        %v431 = vld [vmem:[%s261 + $0x80] sm:$0xff]
        %v432 = vld [vmem:[%s261 + $0x88] sm:$0xff]
        %v433 = vld [vmem:[%s261 + $0x90] sm:$0xff]
        %v434 = vld [vmem:[%s261 + $0x98] sm:$0xff]
        %v435 = vld [vmem:[%s261 + $0xa0] sm:$0xff]
        %v436 = vld [vmem:[%s261 + $0xa8] sm:$0xff]
        %v437 = vld [vmem:[%s261 + $0xb0] sm:$0xff]
        %v438 = vld [vmem:[%s261 + $0xb8] sm:$0xff]
        %v439 = vld [vmem:[%s261 + $0xc0] sm:$0xff]
        %v440 = vld [vmem:[%s261 + $0xc8] sm:$0xff]
        %v441 = vld [vmem:[%s261 + $0xd0] sm:$0xff]
        %v442 = vld [vmem:[%s261 + $0xd8] sm:$0xff]
        %v443 = vld [vmem:[%s261 + $0xe0] sm:$0xff]
        %v444 = vld [vmem:[%s261 + $0xe8] sm:$0xff]
        %v445 = vld [vmem:[%s261 + $0xf0] sm:$0xff]
        %v446 = vld [vmem:[%s261 + $0xf8] sm:$0xff]
        %s447 = scalar_lea.vmem [#allocation2], 24
        %vm448 = vcmask 31744
        %449 = vst.msk [vmem:[%s447 + $0x1] sm:$0xff] %vm448, %v415
        %450 = vst.msk [vmem:[%s447 + $0x9] sm:$0xff] %vm448, %v416
        %451 = vst.msk [vmem:[%s447 + $0x19] sm:$0xff] %vm448, %v417
        %452 = vst.msk [vmem:[%s447 + $0x21] sm:$0xff] %vm448, %v418
        %453 = vst.msk [vmem:[%s447 + $0x31] sm:$0xff] %vm448, %v419
        %454 = vst.msk [vmem:[%s447 + $0x39] sm:$0xff] %vm448, %v420
        %455 = vst.msk [vmem:[%s447 + $0x49] sm:$0xff] %vm448, %v421
        %456 = vst.msk [vmem:[%s447 + $0x51] sm:$0xff] %vm448, %v422
        %457 = vst.msk [vmem:[%s447 + $0x61] sm:$0xff] %vm448, %v423
        %458 = vst.msk [vmem:[%s447 + $0x69] sm:$0xff] %vm448, %v424
        %459 = vst.msk [vmem:[%s447 + $0x79] sm:$0xff] %vm448, %v425
        %460 = vst.msk [vmem:[%s447 + $0x81] sm:$0xff] %vm448, %v426
        %461 = vst.msk [vmem:[%s447 + $0x91] sm:$0xff] %vm448, %v427
        %462 = vst.msk [vmem:[%s447 + $0x99] sm:$0xff] %vm448, %v428
        %463 = vst.msk [vmem:[%s447 + $0xa9] sm:$0xff] %vm448, %v429
        %464 = vst.msk [vmem:[%s447 + $0xb1] sm:$0xff] %vm448, %v430
        %465 = vst.msk [vmem:[%s447 + $0xc1] sm:$0xff] %vm448, %v431
        %466 = vst.msk [vmem:[%s447 + $0xc9] sm:$0xff] %vm448, %v432
        %467 = vst.msk [vmem:[%s447 + $0xd9] sm:$0xff] %vm448, %v433
        %468 = vst.msk [vmem:[%s447 + $0xe1] sm:$0xff] %vm448, %v434
        %469 = vst.msk [vmem:[%s447 + $0xf1] sm:$0xff] %vm448, %v435
        %470 = vst.msk [vmem:[%s447 + $0xf9] sm:$0xff] %vm448, %v436
        %471 = vst.msk [vmem:[%s447 + $0x109] sm:$0xff] %vm448, %v437
        %472 = vst.msk [vmem:[%s447 + $0x111] sm:$0xff] %vm448, %v438
        %473 = vst.msk [vmem:[%s447 + $0x121] sm:$0xff] %vm448, %v439
        %474 = vst.msk [vmem:[%s447 + $0x129] sm:$0xff] %vm448, %v440
        %475 = vst.msk [vmem:[%s447 + $0x139] sm:$0xff] %vm448, %v441
        %476 = vst.msk [vmem:[%s447 + $0x141] sm:$0xff] %vm448, %v442
        %477 = vst.msk [vmem:[%s447 + $0x151] sm:$0xff] %vm448, %v443
        %478 = vst.msk [vmem:[%s447 + $0x159] sm:$0xff] %vm448, %v444
        %479 = vst.msk [vmem:[%s447 + $0x169] sm:$0xff] %vm448, %v445
        %480 = vst.msk [vmem:[%s447 + $0x171] sm:$0xff] %vm448, %v446
        %v481 = vld [vmem:[#allocation2] sm:$0xff]
        %v482 = vld [vmem:[#allocation2 + $0x8] sm:$0xff]
        %v483 = vld [vmem:[#allocation2 + $0x18] sm:$0xff]
        %v484 = vld [vmem:[#allocation2 + $0x20] sm:$0xff]
        %v485 = vld [vmem:[#allocation2 + $0x30] sm:$0xff]
        %v486 = vld [vmem:[#allocation2 + $0x38] sm:$0xff]
        %v487 = vld [vmem:[#allocation2 + $0x48] sm:$0xff]
        %v488 = vld [vmem:[#allocation2 + $0x50] sm:$0xff]
        %v489 = vld [vmem:[#allocation2 + $0x60] sm:$0xff]
        %v490 = vld [vmem:[#allocation2 + $0x68] sm:$0xff]
        %v491 = vld [vmem:[#allocation2 + $0x78] sm:$0xff]
        %v492 = vld [vmem:[#allocation2 + $0x80] sm:$0xff]
        %v493 = vld [vmem:[#allocation2 + $0x90] sm:$0xff]
        %v494 = vld [vmem:[#allocation2 + $0x98] sm:$0xff]
        %v495 = vld [vmem:[#allocation2 + $0xa8] sm:$0xff]
        %v496 = vld [vmem:[#allocation2 + $0xb0] sm:$0xff]
        %v497 = vld [vmem:[#allocation2 + $0xc0] sm:$0xff]
        %v498 = vld [vmem:[#allocation2 + $0xc8] sm:$0xff]
        %v499 = vld [vmem:[#allocation2 + $0xd8] sm:$0xff]
        %v500 = vld [vmem:[#allocation2 + $0xe0] sm:$0xff]
        %v501 = vld [vmem:[#allocation2 + $0xf0] sm:$0xff]
        %v502 = vld [vmem:[#allocation2 + $0xf8] sm:$0xff]
        %v503 = vld [vmem:[#allocation2 + $0x108] sm:$0xff]
        %v504 = vld [vmem:[#allocation2 + $0x110] sm:$0xff]
        %v505 = vld [vmem:[#allocation2 + $0x120] sm:$0xff]
        %v506 = vld [vmem:[#allocation2 + $0x128] sm:$0xff]
        %v507 = vld [vmem:[#allocation2 + $0x138] sm:$0xff]
        %v508 = vld [vmem:[#allocation2 + $0x140] sm:$0xff]
        %v509 = vld [vmem:[#allocation2 + $0x150] sm:$0xff]
        %v510 = vld [vmem:[#allocation2 + $0x158] sm:$0xff]
        %v511 = vld [vmem:[#allocation2 + $0x168] sm:$0xff]
        %v512 = vld [vmem:[#allocation2 + $0x170] sm:$0xff]
        %v513 = vld [vmem:[#allocation2 + $0x1] sm:$0xff]
        %v514 = vld [vmem:[#allocation2 + $0x9] sm:$0xff]
        %v515 = vld [vmem:[#allocation2 + $0x19] sm:$0xff]
        %v516 = vld [vmem:[#allocation2 + $0x21] sm:$0xff]
        %v517 = vld [vmem:[#allocation2 + $0x31] sm:$0xff]
        %v518 = vld [vmem:[#allocation2 + $0x39] sm:$0xff]
        %v519 = vld [vmem:[#allocation2 + $0x49] sm:$0xff]
        %v520 = vld [vmem:[#allocation2 + $0x51] sm:$0xff]
        %v521 = vld [vmem:[#allocation2 + $0x61] sm:$0xff]
        %v522 = vld [vmem:[#allocation2 + $0x69] sm:$0xff]
        %v523 = vld [vmem:[#allocation2 + $0x79] sm:$0xff]
        %v524 = vld [vmem:[#allocation2 + $0x81] sm:$0xff]
        %v525 = vld [vmem:[#allocation2 + $0x91] sm:$0xff]
        %v526 = vld [vmem:[#allocation2 + $0x99] sm:$0xff]
        %v527 = vld [vmem:[#allocation2 + $0xa9] sm:$0xff]
        %v528 = vld [vmem:[#allocation2 + $0xb1] sm:$0xff]
        %v529 = vld [vmem:[#allocation2 + $0xc1] sm:$0xff]
        %v530 = vld [vmem:[#allocation2 + $0xc9] sm:$0xff]
        %v531 = vld [vmem:[#allocation2 + $0xd9] sm:$0xff]
        %v532 = vld [vmem:[#allocation2 + $0xe1] sm:$0xff]
        %v533 = vld [vmem:[#allocation2 + $0xf1] sm:$0xff]
        %v534 = vld [vmem:[#allocation2 + $0xf9] sm:$0xff]
        %v535 = vld [vmem:[#allocation2 + $0x109] sm:$0xff]
        %v536 = vld [vmem:[#allocation2 + $0x111] sm:$0xff]
        %v537 = vld [vmem:[#allocation2 + $0x121] sm:$0xff]
        %v538 = vld [vmem:[#allocation2 + $0x129] sm:$0xff]
        %v539 = vld [vmem:[#allocation2 + $0x139] sm:$0xff]
        %v540 = vld [vmem:[#allocation2 + $0x141] sm:$0xff]
        %v541 = vld [vmem:[#allocation2 + $0x151] sm:$0xff]
        %v542 = vld [vmem:[#allocation2 + $0x159] sm:$0xff]
        %v543 = vld [vmem:[#allocation2 + $0x169] sm:$0xff]
        %v544 = vld [vmem:[#allocation2 + $0x171] sm:$0xff]
        %v545 = vld [vmem:[#allocation2 + $0x2] sm:$0xff]
        %v546 = vld [vmem:[#allocation2 + $0xa] sm:$0xff]
        %v547 = vld [vmem:[#allocation2 + $0x1a] sm:$0xff]
        %v548 = vld [vmem:[#allocation2 + $0x22] sm:$0xff]
        %v549 = vld [vmem:[#allocation2 + $0x32] sm:$0xff]
        %v550 = vld [vmem:[#allocation2 + $0x3a] sm:$0xff]
        %v551 = vld [vmem:[#allocation2 + $0x4a] sm:$0xff]
        %v552 = vld [vmem:[#allocation2 + $0x52] sm:$0xff]
        %v553 = vld [vmem:[#allocation2 + $0x62] sm:$0xff]
        %v554 = vld [vmem:[#allocation2 + $0x6a] sm:$0xff]
        %v555 = vld [vmem:[#allocation2 + $0x7a] sm:$0xff]
        %v556 = vld [vmem:[#allocation2 + $0x82] sm:$0xff]
        %v557 = vld [vmem:[#allocation2 + $0x92] sm:$0xff]
        %v558 = vld [vmem:[#allocation2 + $0x9a] sm:$0xff]
        %v559 = vld [vmem:[#allocation2 + $0xaa] sm:$0xff]
        %v560 = vld [vmem:[#allocation2 + $0xb2] sm:$0xff]
        %v561 = vld [vmem:[#allocation2 + $0xc2] sm:$0xff]
        %v562 = vld [vmem:[#allocation2 + $0xca] sm:$0xff]
        %v563 = vld [vmem:[#allocation2 + $0xda] sm:$0xff]
        %v564 = vld [vmem:[#allocation2 + $0xe2] sm:$0xff]
        %v565 = vld [vmem:[#allocation2 + $0xf2] sm:$0xff]
        %v566 = vld [vmem:[#allocation2 + $0xfa] sm:$0xff]
        %v567 = vld [vmem:[#allocation2 + $0x10a] sm:$0xff]
        %v568 = vld [vmem:[#allocation2 + $0x112] sm:$0xff]
        %v569 = vld [vmem:[#allocation2 + $0x122] sm:$0xff]
        %v570 = vld [vmem:[#allocation2 + $0x12a] sm:$0xff]
        %v571 = vld [vmem:[#allocation2 + $0x13a] sm:$0xff]
        %v572 = vld [vmem:[#allocation2 + $0x142] sm:$0xff]
        %v573 = vld [vmem:[#allocation2 + $0x152] sm:$0xff]
        %v574 = vld [vmem:[#allocation2 + $0x15a] sm:$0xff]
        %v575 = vld [vmem:[#allocation2 + $0x16a] sm:$0xff]
        %v576 = vld [vmem:[#allocation2 + $0x172] sm:$0xff]
        %v577 = vld [vmem:[%s447] sm:$0xff]
        %v578 = vld [vmem:[%s447 + $0x8] sm:$0xff]
        %v579 = vld [vmem:[%s447 + $0x18] sm:$0xff]
        %v580 = vld [vmem:[%s447 + $0x20] sm:$0xff]
        %v581 = vld [vmem:[%s447 + $0x30] sm:$0xff]
        %v582 = vld [vmem:[%s447 + $0x38] sm:$0xff]
        %v583 = vld [vmem:[%s447 + $0x48] sm:$0xff]
        %v584 = vld [vmem:[%s447 + $0x50] sm:$0xff]
        %v585 = vld [vmem:[%s447 + $0x60] sm:$0xff]
        %v586 = vld [vmem:[%s447 + $0x68] sm:$0xff]
        %v587 = vld [vmem:[%s447 + $0x78] sm:$0xff]
        %v588 = vld [vmem:[%s447 + $0x80] sm:$0xff]
        %v589 = vld [vmem:[%s447 + $0x90] sm:$0xff]
        %v590 = vld [vmem:[%s447 + $0x98] sm:$0xff]
        %v591 = vld [vmem:[%s447 + $0xa8] sm:$0xff]
        %v592 = vld [vmem:[%s447 + $0xb0] sm:$0xff]
        %v593 = vld [vmem:[%s447 + $0xc0] sm:$0xff]
        %v594 = vld [vmem:[%s447 + $0xc8] sm:$0xff]
        %v595 = vld [vmem:[%s447 + $0xd8] sm:$0xff]
        %v596 = vld [vmem:[%s447 + $0xe0] sm:$0xff]
        %v597 = vld [vmem:[%s447 + $0xf0] sm:$0xff]
        %v598 = vld [vmem:[%s447 + $0xf8] sm:$0xff]
        %v599 = vld [vmem:[%s447 + $0x108] sm:$0xff]
        %v600 = vld [vmem:[%s447 + $0x110] sm:$0xff]
        %v601 = vld [vmem:[%s447 + $0x120] sm:$0xff]
        %v602 = vld [vmem:[%s447 + $0x128] sm:$0xff]
        %v603 = vld [vmem:[%s447 + $0x138] sm:$0xff]
        %v604 = vld [vmem:[%s447 + $0x140] sm:$0xff]
        %v605 = vld [vmem:[%s447 + $0x150] sm:$0xff]
        %v606 = vld [vmem:[%s447 + $0x158] sm:$0xff]
        %v607 = vld [vmem:[%s447 + $0x168] sm:$0xff]
        %v608 = vld [vmem:[%s447 + $0x170] sm:$0xff]
        %v609 = vld [vmem:[%s447 + $0x1] sm:$0xff]
        %v610 = vld [vmem:[%s447 + $0x9] sm:$0xff]
        %v611 = vld [vmem:[%s447 + $0x19] sm:$0xff]
        %v612 = vld [vmem:[%s447 + $0x21] sm:$0xff]
        %v613 = vld [vmem:[%s447 + $0x31] sm:$0xff]
        %v614 = vld [vmem:[%s447 + $0x39] sm:$0xff]
        %v615 = vld [vmem:[%s447 + $0x49] sm:$0xff]
        %v616 = vld [vmem:[%s447 + $0x51] sm:$0xff]
        %v617 = vld [vmem:[%s447 + $0x61] sm:$0xff]
        %v618 = vld [vmem:[%s447 + $0x69] sm:$0xff]
        %v619 = vld [vmem:[%s447 + $0x79] sm:$0xff]
        %v620 = vld [vmem:[%s447 + $0x81] sm:$0xff]
        %v621 = vld [vmem:[%s447 + $0x91] sm:$0xff]
        %v622 = vld [vmem:[%s447 + $0x99] sm:$0xff]
        %v623 = vld [vmem:[%s447 + $0xa9] sm:$0xff]
        %v624 = vld [vmem:[%s447 + $0xb1] sm:$0xff]
        %v625 = vld [vmem:[%s447 + $0xc1] sm:$0xff]
        %v626 = vld [vmem:[%s447 + $0xc9] sm:$0xff]
        %v627 = vld [vmem:[%s447 + $0xd9] sm:$0xff]
        %v628 = vld [vmem:[%s447 + $0xe1] sm:$0xff]
        %v629 = vld [vmem:[%s447 + $0xf1] sm:$0xff]
        %v630 = vld [vmem:[%s447 + $0xf9] sm:$0xff]
        %v631 = vld [vmem:[%s447 + $0x109] sm:$0xff]
        %v632 = vld [vmem:[%s447 + $0x111] sm:$0xff]
        %v633 = vld [vmem:[%s447 + $0x121] sm:$0xff]
        %v634 = vld [vmem:[%s447 + $0x129] sm:$0xff]
        %v635 = vld [vmem:[%s447 + $0x139] sm:$0xff]
        %v636 = vld [vmem:[%s447 + $0x141] sm:$0xff]
        %v637 = vld [vmem:[%s447 + $0x151] sm:$0xff]
        %v638 = vld [vmem:[%s447 + $0x159] sm:$0xff]
        %v639 = vld [vmem:[%s447 + $0x169] sm:$0xff]
        %v640 = vld [vmem:[%s447 + $0x171] sm:$0xff]
        %v641 = vld [vmem:[%s447 + $0x2] sm:$0xff]
        %v642 = vld [vmem:[%s447 + $0xa] sm:$0xff]
        %v643 = vld [vmem:[%s447 + $0x1a] sm:$0xff]
        %v644 = vld [vmem:[%s447 + $0x22] sm:$0xff]
        %v645 = vld [vmem:[%s447 + $0x32] sm:$0xff]
        %v646 = vld [vmem:[%s447 + $0x3a] sm:$0xff]
        %v647 = vld [vmem:[%s447 + $0x4a] sm:$0xff]
        %v648 = vld [vmem:[%s447 + $0x52] sm:$0xff]
        %v649 = vld [vmem:[%s447 + $0x62] sm:$0xff]
        %v650 = vld [vmem:[%s447 + $0x6a] sm:$0xff]
        %v651 = vld [vmem:[%s447 + $0x7a] sm:$0xff]
        %v652 = vld [vmem:[%s447 + $0x82] sm:$0xff]
        %v653 = vld [vmem:[%s447 + $0x92] sm:$0xff]
        %v654 = vld [vmem:[%s447 + $0x9a] sm:$0xff]
        %v655 = vld [vmem:[%s447 + $0xaa] sm:$0xff]
        %v656 = vld [vmem:[%s447 + $0xb2] sm:$0xff]
        %v657 = vld [vmem:[%s447 + $0xc2] sm:$0xff]
        %v658 = vld [vmem:[%s447 + $0xca] sm:$0xff]
        %v659 = vld [vmem:[%s447 + $0xda] sm:$0xff]
        %v660 = vld [vmem:[%s447 + $0xe2] sm:$0xff]
        %v661 = vld [vmem:[%s447 + $0xf2] sm:$0xff]
        %v662 = vld [vmem:[%s447 + $0xfa] sm:$0xff]
        %v663 = vld [vmem:[%s447 + $0x10a] sm:$0xff]
        %v664 = vld [vmem:[%s447 + $0x112] sm:$0xff]
        %v665 = vld [vmem:[%s447 + $0x122] sm:$0xff]
        %v666 = vld [vmem:[%s447 + $0x12a] sm:$0xff]
        %v667 = vld [vmem:[%s447 + $0x13a] sm:$0xff]
        %v668 = vld [vmem:[%s447 + $0x142] sm:$0xff]
        %v669 = vld [vmem:[%s447 + $0x152] sm:$0xff]
        %v670 = vld [vmem:[%s447 + $0x15a] sm:$0xff]
        %v671 = vld [vmem:[%s447 + $0x16a] sm:$0xff]
        %v672 = vld [vmem:[%s447 + $0x172] sm:$0xff]
        %s673 = scalar_lea.vmem [#allocation2], 48
        %v674 = vld [vmem:[%s673] sm:$0xff]
        %v675 = vld [vmem:[%s673 + $0x8] sm:$0xff]
        %v676 = vld [vmem:[%s673 + $0x18] sm:$0xff]
        %v677 = vld [vmem:[%s673 + $0x20] sm:$0xff]
        %v678 = vld [vmem:[%s673 + $0x30] sm:$0xff]
        %v679 = vld [vmem:[%s673 + $0x38] sm:$0xff]
        %v680 = vld [vmem:[%s673 + $0x48] sm:$0xff]
        %v681 = vld [vmem:[%s673 + $0x50] sm:$0xff]
        %v682 = vld [vmem:[%s673 + $0x60] sm:$0xff]
        %v683 = vld [vmem:[%s673 + $0x68] sm:$0xff]
        %v684 = vld [vmem:[%s673 + $0x78] sm:$0xff]
        %v685 = vld [vmem:[%s673 + $0x80] sm:$0xff]
        %v686 = vld [vmem:[%s673 + $0x90] sm:$0xff]
        %v687 = vld [vmem:[%s673 + $0x98] sm:$0xff]
        %v688 = vld [vmem:[%s673 + $0xa8] sm:$0xff]
        %v689 = vld [vmem:[%s673 + $0xb0] sm:$0xff]
        %v690 = vld [vmem:[%s673 + $0xc0] sm:$0xff]
        %v691 = vld [vmem:[%s673 + $0xc8] sm:$0xff]
        %v692 = vld [vmem:[%s673 + $0xd8] sm:$0xff]
        %v693 = vld [vmem:[%s673 + $0xe0] sm:$0xff]
        %v694 = vld [vmem:[%s673 + $0xf0] sm:$0xff]
        %v695 = vld [vmem:[%s673 + $0xf8] sm:$0xff]
        %v696 = vld [vmem:[%s673 + $0x108] sm:$0xff]
        %v697 = vld [vmem:[%s673 + $0x110] sm:$0xff]
        %v698 = vld [vmem:[%s673 + $0x120] sm:$0xff]
        %v699 = vld [vmem:[%s673 + $0x128] sm:$0xff]
        %v700 = vld [vmem:[%s673 + $0x138] sm:$0xff]
        %v701 = vld [vmem:[%s673 + $0x140] sm:$0xff]
        %v702 = vld [vmem:[%s673 + $0x150] sm:$0xff]
        %v703 = vld [vmem:[%s673 + $0x158] sm:$0xff]
        %v704 = vld [vmem:[%s673 + $0x168] sm:$0xff]
        %v705 = vld [vmem:[%s673 + $0x170] sm:$0xff]
        %v706 = vld [vmem:[%s673 + $0x1] sm:$0xff]
        %v707 = vld [vmem:[%s673 + $0x9] sm:$0xff]
        %v708 = vld [vmem:[%s673 + $0x19] sm:$0xff]
        %v709 = vld [vmem:[%s673 + $0x21] sm:$0xff]
        %v710 = vld [vmem:[%s673 + $0x31] sm:$0xff]
        %v711 = vld [vmem:[%s673 + $0x39] sm:$0xff]
        %v712 = vld [vmem:[%s673 + $0x49] sm:$0xff]
        %v713 = vld [vmem:[%s673 + $0x51] sm:$0xff]
        %v714 = vld [vmem:[%s673 + $0x61] sm:$0xff]
        %v715 = vld [vmem:[%s673 + $0x69] sm:$0xff]
        %v716 = vld [vmem:[%s673 + $0x79] sm:$0xff]
        %v717 = vld [vmem:[%s673 + $0x81] sm:$0xff]
        %v718 = vld [vmem:[%s673 + $0x91] sm:$0xff]
        %v719 = vld [vmem:[%s673 + $0x99] sm:$0xff]
        %v720 = vld [vmem:[%s673 + $0xa9] sm:$0xff]
        %v721 = vld [vmem:[%s673 + $0xb1] sm:$0xff]
        %v722 = vld [vmem:[%s673 + $0xc1] sm:$0xff]
        %v723 = vld [vmem:[%s673 + $0xc9] sm:$0xff]
        %v724 = vld [vmem:[%s673 + $0xd9] sm:$0xff]
        %v725 = vld [vmem:[%s673 + $0xe1] sm:$0xff]
        %v726 = vld [vmem:[%s673 + $0xf1] sm:$0xff]
        %v727 = vld [vmem:[%s673 + $0xf9] sm:$0xff]
        %v728 = vld [vmem:[%s673 + $0x109] sm:$0xff]
        %v729 = vld [vmem:[%s673 + $0x111] sm:$0xff]
        %v730 = vld [vmem:[%s673 + $0x121] sm:$0xff]
        %v731 = vld [vmem:[%s673 + $0x129] sm:$0xff]
        %v732 = vld [vmem:[%s673 + $0x139] sm:$0xff]
        %v733 = vld [vmem:[%s673 + $0x141] sm:$0xff]
        %v734 = vld [vmem:[%s673 + $0x151] sm:$0xff]
        %v735 = vld [vmem:[%s673 + $0x159] sm:$0xff]
        %v736 = vld [vmem:[%s673 + $0x169] sm:$0xff]
        %v737 = vld [vmem:[%s673 + $0x171] sm:$0xff]
        %v738 = vld [vmem:[%s673 + $0x2] sm:$0xff]
        %v739 = vld [vmem:[%s673 + $0xa] sm:$0xff]
        %v740 = vld [vmem:[%s673 + $0x1a] sm:$0xff]
        %v741 = vld [vmem:[%s673 + $0x22] sm:$0xff]
        %v742 = vld [vmem:[%s673 + $0x32] sm:$0xff]
        %v743 = vld [vmem:[%s673 + $0x3a] sm:$0xff]
        %v744 = vld [vmem:[%s673 + $0x4a] sm:$0xff]
        %v745 = vld [vmem:[%s673 + $0x52] sm:$0xff]
        %v746 = vld [vmem:[%s673 + $0x62] sm:$0xff]
        %v747 = vld [vmem:[%s673 + $0x6a] sm:$0xff]
        %v748 = vld [vmem:[%s673 + $0x7a] sm:$0xff]
        %v749 = vld [vmem:[%s673 + $0x82] sm:$0xff]
        %v750 = vld [vmem:[%s673 + $0x92] sm:$0xff]
        %v751 = vld [vmem:[%s673 + $0x9a] sm:$0xff]
        %v752 = vld [vmem:[%s673 + $0xaa] sm:$0xff]
        %v753 = vld [vmem:[%s673 + $0xb2] sm:$0xff]
        %v754 = vld [vmem:[%s673 + $0xc2] sm:$0xff]
        %v755 = vld [vmem:[%s673 + $0xca] sm:$0xff]
        %v756 = vld [vmem:[%s673 + $0xda] sm:$0xff]
        %v757 = vld [vmem:[%s673 + $0xe2] sm:$0xff]
        %v758 = vld [vmem:[%s673 + $0xf2] sm:$0xff]
        %v759 = vld [vmem:[%s673 + $0xfa] sm:$0xff]
        %v760 = vld [vmem:[%s673 + $0x10a] sm:$0xff]
        %v761 = vld [vmem:[%s673 + $0x112] sm:$0xff]
        %v762 = vld [vmem:[%s673 + $0x122] sm:$0xff]
        %v763 = vld [vmem:[%s673 + $0x12a] sm:$0xff]
        %v764 = vld [vmem:[%s673 + $0x13a] sm:$0xff]
        %v765 = vld [vmem:[%s673 + $0x142] sm:$0xff]
        %v766 = vld [vmem:[%s673 + $0x152] sm:$0xff]
        %v767 = vld [vmem:[%s673 + $0x15a] sm:$0xff]
        %v768 = vld [vmem:[%s673 + $0x16a] sm:$0xff]
        %v769 = vld [vmem:[%s673 + $0x172] sm:$0xff]
        %802 = vrot.lane.b32.xlu0 %v513, 4
        %v803 = vpop.permute.xlu0 %802
        %804 = vrot.lane.b32.xlu0 %v514, 4
        %v805 = vpop.permute.xlu0 %804
        %806 = vrot.lane.b32.xlu0 %v515, 4
        %v807 = vpop.permute.xlu0 %806
        %808 = vrot.lane.b32.xlu0 %v516, 4
        %v809 = vpop.permute.xlu0 %808
        %810 = vrot.lane.b32.xlu0 %v517, 4
        %v811 = vpop.permute.xlu0 %810
        %812 = vrot.lane.b32.xlu0 %v518, 4
        %v813 = vpop.permute.xlu0 %812
        %814 = vrot.lane.b32.xlu0 %v519, 4
        %v815 = vpop.permute.xlu0 %814
        %816 = vrot.lane.b32.xlu0 %v520, 4
        %v817 = vpop.permute.xlu0 %816
        %818 = vrot.lane.b32.xlu0 %v521, 4
        %v819 = vpop.permute.xlu0 %818
        %820 = vrot.lane.b32.xlu0 %v522, 4
        %v821 = vpop.permute.xlu0 %820
        %822 = vrot.lane.b32.xlu0 %v523, 4
        %v823 = vpop.permute.xlu0 %822
        %824 = vrot.lane.b32.xlu0 %v524, 4
        %v825 = vpop.permute.xlu0 %824
        %826 = vrot.lane.b32.xlu0 %v525, 4
        %v827 = vpop.permute.xlu0 %826
        %828 = vrot.lane.b32.xlu0 %v526, 4
        %v829 = vpop.permute.xlu0 %828
        %830 = vrot.lane.b32.xlu0 %v527, 4
        %v831 = vpop.permute.xlu0 %830
        %832 = vrot.lane.b32.xlu0 %v528, 4
        %v833 = vpop.permute.xlu0 %832
        %834 = vrot.lane.b32.xlu0 %v529, 4
        %v835 = vpop.permute.xlu0 %834
        %836 = vrot.lane.b32.xlu0 %v530, 4
        %v837 = vpop.permute.xlu0 %836
        %838 = vrot.lane.b32.xlu0 %v531, 4
        %v839 = vpop.permute.xlu0 %838
        %840 = vrot.lane.b32.xlu0 %v532, 4
        %v841 = vpop.permute.xlu0 %840
        %842 = vrot.lane.b32.xlu0 %v533, 4
        %v843 = vpop.permute.xlu0 %842
        %844 = vrot.lane.b32.xlu0 %v534, 4
        %v845 = vpop.permute.xlu0 %844
        %846 = vrot.lane.b32.xlu0 %v535, 4
        %v847 = vpop.permute.xlu0 %846
        %848 = vrot.lane.b32.xlu0 %v536, 4
        %v849 = vpop.permute.xlu0 %848
        %850 = vrot.lane.b32.xlu0 %v537, 4
        %v851 = vpop.permute.xlu0 %850
        %852 = vrot.lane.b32.xlu0 %v538, 4
        %v853 = vpop.permute.xlu0 %852
        %854 = vrot.lane.b32.xlu0 %v539, 4
        %v855 = vpop.permute.xlu0 %854
        %856 = vrot.lane.b32.xlu0 %v540, 4
        %v857 = vpop.permute.xlu0 %856
        %858 = vrot.lane.b32.xlu0 %v541, 4
        %v859 = vpop.permute.xlu0 %858
        %860 = vrot.lane.b32.xlu0 %v542, 4
        %v861 = vpop.permute.xlu0 %860
        %862 = vrot.lane.b32.xlu0 %v543, 4
        %v863 = vpop.permute.xlu0 %862
        %864 = vrot.lane.b32.xlu0 %v544, 4
        %v865 = vpop.permute.xlu0 %864
        %930 = vrot.lane.b32.xlu0 %v545, 8
        %v931 = vpop.permute.xlu0 %930
        %932 = vrot.lane.b32.xlu0 %v546, 8
        %v933 = vpop.permute.xlu0 %932
        %934 = vrot.lane.b32.xlu0 %v547, 8
        %v935 = vpop.permute.xlu0 %934
        %936 = vrot.lane.b32.xlu0 %v548, 8
        %v937 = vpop.permute.xlu0 %936
        %938 = vrot.lane.b32.xlu0 %v549, 8
        %v939 = vpop.permute.xlu0 %938
        %940 = vrot.lane.b32.xlu0 %v550, 8
        %v941 = vpop.permute.xlu0 %940
        %942 = vrot.lane.b32.xlu0 %v551, 8
        %v943 = vpop.permute.xlu0 %942
        %944 = vrot.lane.b32.xlu0 %v552, 8
        %v945 = vpop.permute.xlu0 %944
        %946 = vrot.lane.b32.xlu0 %v553, 8
        %v947 = vpop.permute.xlu0 %946
        %948 = vrot.lane.b32.xlu0 %v554, 8
        %v949 = vpop.permute.xlu0 %948
        %950 = vrot.lane.b32.xlu0 %v555, 8
        %v951 = vpop.permute.xlu0 %950
        %952 = vrot.lane.b32.xlu0 %v556, 8
        %v953 = vpop.permute.xlu0 %952
        %954 = vrot.lane.b32.xlu0 %v557, 8
        %v955 = vpop.permute.xlu0 %954
        %956 = vrot.lane.b32.xlu0 %v558, 8
        %v957 = vpop.permute.xlu0 %956
        %958 = vrot.lane.b32.xlu0 %v559, 8
        %v959 = vpop.permute.xlu0 %958
        %960 = vrot.lane.b32.xlu0 %v560, 8
        %v961 = vpop.permute.xlu0 %960
        %962 = vrot.lane.b32.xlu0 %v561, 8
        %v963 = vpop.permute.xlu0 %962
        %964 = vrot.lane.b32.xlu0 %v562, 8
        %v965 = vpop.permute.xlu0 %964
        %966 = vrot.lane.b32.xlu0 %v563, 8
        %v967 = vpop.permute.xlu0 %966
        %968 = vrot.lane.b32.xlu0 %v564, 8
        %v969 = vpop.permute.xlu0 %968
        %970 = vrot.lane.b32.xlu0 %v565, 8
        %v971 = vpop.permute.xlu0 %970
        %972 = vrot.lane.b32.xlu0 %v566, 8
        %v973 = vpop.permute.xlu0 %972
        %974 = vrot.lane.b32.xlu0 %v567, 8
        %v975 = vpop.permute.xlu0 %974
        %976 = vrot.lane.b32.xlu0 %v568, 8
        %v977 = vpop.permute.xlu0 %976
        %978 = vrot.lane.b32.xlu0 %v569, 8
        %v979 = vpop.permute.xlu0 %978
        %980 = vrot.lane.b32.xlu0 %v570, 8
        %v981 = vpop.permute.xlu0 %980
        %982 = vrot.lane.b32.xlu0 %v571, 8
        %v983 = vpop.permute.xlu0 %982
        %984 = vrot.lane.b32.xlu0 %v572, 8
        %v985 = vpop.permute.xlu0 %984
        %986 = vrot.lane.b32.xlu0 %v573, 8
        %v987 = vpop.permute.xlu0 %986
        %988 = vrot.lane.b32.xlu0 %v574, 8
        %v989 = vpop.permute.xlu0 %988
        %990 = vrot.lane.b32.xlu0 %v575, 8
        %v991 = vpop.permute.xlu0 %990
        %992 = vrot.lane.b32.xlu0 %v576, 8
        %v993 = vpop.permute.xlu0 %992
        %1058 = vrot.lane.b32.xlu0 %v577, 12
        %v1059 = vpop.permute.xlu0 %1058
        %1060 = vrot.lane.b32.xlu0 %v578, 12
        %v1061 = vpop.permute.xlu0 %1060
        %1062 = vrot.lane.b32.xlu0 %v579, 12
        %v1063 = vpop.permute.xlu0 %1062
        %1064 = vrot.lane.b32.xlu0 %v580, 12
        %v1065 = vpop.permute.xlu0 %1064
        %1066 = vrot.lane.b32.xlu0 %v581, 12
        %v1067 = vpop.permute.xlu0 %1066
        %1068 = vrot.lane.b32.xlu0 %v582, 12
        %v1069 = vpop.permute.xlu0 %1068
        %1070 = vrot.lane.b32.xlu0 %v583, 12
        %v1071 = vpop.permute.xlu0 %1070
        %1072 = vrot.lane.b32.xlu0 %v584, 12
        %v1073 = vpop.permute.xlu0 %1072
        %1074 = vrot.lane.b32.xlu0 %v585, 12
        %v1075 = vpop.permute.xlu0 %1074
        %1076 = vrot.lane.b32.xlu0 %v586, 12
        %v1077 = vpop.permute.xlu0 %1076
        %1078 = vrot.lane.b32.xlu0 %v587, 12
        %v1079 = vpop.permute.xlu0 %1078
        %1080 = vrot.lane.b32.xlu0 %v588, 12
        %v1081 = vpop.permute.xlu0 %1080
        %1082 = vrot.lane.b32.xlu0 %v589, 12
        %v1083 = vpop.permute.xlu0 %1082
        %1084 = vrot.lane.b32.xlu0 %v590, 12
        %v1085 = vpop.permute.xlu0 %1084
        %1086 = vrot.lane.b32.xlu0 %v591, 12
        %v1087 = vpop.permute.xlu0 %1086
        %1088 = vrot.lane.b32.xlu0 %v592, 12
        %v1089 = vpop.permute.xlu0 %1088
        %1090 = vrot.lane.b32.xlu0 %v593, 12
        %v1091 = vpop.permute.xlu0 %1090
        %1092 = vrot.lane.b32.xlu0 %v594, 12
        %v1093 = vpop.permute.xlu0 %1092
        %1094 = vrot.lane.b32.xlu0 %v595, 12
        %v1095 = vpop.permute.xlu0 %1094
        %1096 = vrot.lane.b32.xlu0 %v596, 12
        %v1097 = vpop.permute.xlu0 %1096
        %1098 = vrot.lane.b32.xlu0 %v597, 12
        %v1099 = vpop.permute.xlu0 %1098
        %1100 = vrot.lane.b32.xlu0 %v598, 12
        %v1101 = vpop.permute.xlu0 %1100
        %1102 = vrot.lane.b32.xlu0 %v599, 12
        %v1103 = vpop.permute.xlu0 %1102
        %1104 = vrot.lane.b32.xlu0 %v600, 12
        %v1105 = vpop.permute.xlu0 %1104
        %1106 = vrot.lane.b32.xlu0 %v601, 12
        %v1107 = vpop.permute.xlu0 %1106
        %1108 = vrot.lane.b32.xlu0 %v602, 12
        %v1109 = vpop.permute.xlu0 %1108
        %1110 = vrot.lane.b32.xlu0 %v603, 12
        %v1111 = vpop.permute.xlu0 %1110
        %1112 = vrot.lane.b32.xlu0 %v604, 12
        %v1113 = vpop.permute.xlu0 %1112
        %1114 = vrot.lane.b32.xlu0 %v605, 12
        %v1115 = vpop.permute.xlu0 %1114
        %1116 = vrot.lane.b32.xlu0 %v606, 12
        %v1117 = vpop.permute.xlu0 %1116
        %1118 = vrot.lane.b32.xlu0 %v607, 12
        %v1119 = vpop.permute.xlu0 %1118
        %1120 = vrot.lane.b32.xlu0 %v608, 12
        %v1121 = vpop.permute.xlu0 %1120
        %1186 = vrot.lane.b32.xlu0 %v609, 16
        %v1187 = vpop.permute.xlu0 %1186
        %1188 = vrot.lane.b32.xlu0 %v610, 16
        %v1189 = vpop.permute.xlu0 %1188
        %1190 = vrot.lane.b32.xlu0 %v611, 16
        %v1191 = vpop.permute.xlu0 %1190
        %1192 = vrot.lane.b32.xlu0 %v612, 16
        %v1193 = vpop.permute.xlu0 %1192
        %1194 = vrot.lane.b32.xlu0 %v613, 16
        %v1195 = vpop.permute.xlu0 %1194
        %1196 = vrot.lane.b32.xlu0 %v614, 16
        %v1197 = vpop.permute.xlu0 %1196
        %1198 = vrot.lane.b32.xlu0 %v615, 16
        %v1199 = vpop.permute.xlu0 %1198
        %1200 = vrot.lane.b32.xlu0 %v616, 16
        %v1201 = vpop.permute.xlu0 %1200
        %1202 = vrot.lane.b32.xlu0 %v617, 16
        %v1203 = vpop.permute.xlu0 %1202
        %1204 = vrot.lane.b32.xlu0 %v618, 16
        %v1205 = vpop.permute.xlu0 %1204
        %1206 = vrot.lane.b32.xlu0 %v619, 16
        %v1207 = vpop.permute.xlu0 %1206
        %1208 = vrot.lane.b32.xlu0 %v620, 16
        %v1209 = vpop.permute.xlu0 %1208
        %1210 = vrot.lane.b32.xlu0 %v621, 16
        %v1211 = vpop.permute.xlu0 %1210
        %1212 = vrot.lane.b32.xlu0 %v622, 16
        %v1213 = vpop.permute.xlu0 %1212
        %1214 = vrot.lane.b32.xlu0 %v623, 16
        %v1215 = vpop.permute.xlu0 %1214
        %1216 = vrot.lane.b32.xlu0 %v624, 16
        %v1217 = vpop.permute.xlu0 %1216
        %1218 = vrot.lane.b32.xlu0 %v625, 16
        %v1219 = vpop.permute.xlu0 %1218
        %1220 = vrot.lane.b32.xlu0 %v626, 16
        %v1221 = vpop.permute.xlu0 %1220
        %1222 = vrot.lane.b32.xlu0 %v627, 16
        %v1223 = vpop.permute.xlu0 %1222
        %1224 = vrot.lane.b32.xlu0 %v628, 16
        %v1225 = vpop.permute.xlu0 %1224
        %1226 = vrot.lane.b32.xlu0 %v629, 16
        %v1227 = vpop.permute.xlu0 %1226
        %1228 = vrot.lane.b32.xlu0 %v630, 16
        %v1229 = vpop.permute.xlu0 %1228
        %1230 = vrot.lane.b32.xlu0 %v631, 16
        %v1231 = vpop.permute.xlu0 %1230
        %1232 = vrot.lane.b32.xlu0 %v632, 16
        %v1233 = vpop.permute.xlu0 %1232
        %1234 = vrot.lane.b32.xlu0 %v633, 16
        %v1235 = vpop.permute.xlu0 %1234
        %1236 = vrot.lane.b32.xlu0 %v634, 16
        %v1237 = vpop.permute.xlu0 %1236
        %1238 = vrot.lane.b32.xlu0 %v635, 16
        %v1239 = vpop.permute.xlu0 %1238
        %1240 = vrot.lane.b32.xlu0 %v636, 16
        %v1241 = vpop.permute.xlu0 %1240
        %1242 = vrot.lane.b32.xlu0 %v637, 16
        %v1243 = vpop.permute.xlu0 %1242
        %1244 = vrot.lane.b32.xlu0 %v638, 16
        %v1245 = vpop.permute.xlu0 %1244
        %1246 = vrot.lane.b32.xlu0 %v639, 16
        %v1247 = vpop.permute.xlu0 %1246
        %1248 = vrot.lane.b32.xlu0 %v640, 16
        %v1249 = vpop.permute.xlu0 %1248
        %1314 = vrot.lane.b32.xlu0 %v641, 20
        %v1315 = vpop.permute.xlu0 %1314
        %1316 = vrot.lane.b32.xlu0 %v642, 20
        %v1317 = vpop.permute.xlu0 %1316
        %1318 = vrot.lane.b32.xlu0 %v643, 20
        %v1319 = vpop.permute.xlu0 %1318
        %1320 = vrot.lane.b32.xlu0 %v644, 20
        %v1321 = vpop.permute.xlu0 %1320
        %1322 = vrot.lane.b32.xlu0 %v645, 20
        %v1323 = vpop.permute.xlu0 %1322
        %1324 = vrot.lane.b32.xlu0 %v646, 20
        %v1325 = vpop.permute.xlu0 %1324
        %1326 = vrot.lane.b32.xlu0 %v647, 20
        %v1327 = vpop.permute.xlu0 %1326
        %1328 = vrot.lane.b32.xlu0 %v648, 20
        %v1329 = vpop.permute.xlu0 %1328
        %1330 = vrot.lane.b32.xlu0 %v649, 20
        %v1331 = vpop.permute.xlu0 %1330
        %1332 = vrot.lane.b32.xlu0 %v650, 20
        %v1333 = vpop.permute.xlu0 %1332
        %1334 = vrot.lane.b32.xlu0 %v651, 20
        %v1335 = vpop.permute.xlu0 %1334
        %1336 = vrot.lane.b32.xlu0 %v652, 20
        %v1337 = vpop.permute.xlu0 %1336
        %1338 = vrot.lane.b32.xlu0 %v653, 20
        %v1339 = vpop.permute.xlu0 %1338
        %1340 = vrot.lane.b32.xlu0 %v654, 20
        %v1341 = vpop.permute.xlu0 %1340
        %1342 = vrot.lane.b32.xlu0 %v655, 20
        %v1343 = vpop.permute.xlu0 %1342
        %1344 = vrot.lane.b32.xlu0 %v656, 20
        %v1345 = vpop.permute.xlu0 %1344
        %1346 = vrot.lane.b32.xlu0 %v657, 20
        %v1347 = vpop.permute.xlu0 %1346
        %1348 = vrot.lane.b32.xlu0 %v658, 20
        %v1349 = vpop.permute.xlu0 %1348
        %1350 = vrot.lane.b32.xlu0 %v659, 20
        %v1351 = vpop.permute.xlu0 %1350
        %1352 = vrot.lane.b32.xlu0 %v660, 20
        %v1353 = vpop.permute.xlu0 %1352
        %1354 = vrot.lane.b32.xlu0 %v661, 20
        %v1355 = vpop.permute.xlu0 %1354
        %1356 = vrot.lane.b32.xlu0 %v662, 20
        %v1357 = vpop.permute.xlu0 %1356
        %1358 = vrot.lane.b32.xlu0 %v663, 20
        %v1359 = vpop.permute.xlu0 %1358
        %1360 = vrot.lane.b32.xlu0 %v664, 20
        %v1361 = vpop.permute.xlu0 %1360
        %1362 = vrot.lane.b32.xlu0 %v665, 20
        %v1363 = vpop.permute.xlu0 %1362
        %1364 = vrot.lane.b32.xlu0 %v666, 20
        %v1365 = vpop.permute.xlu0 %1364
        %1366 = vrot.lane.b32.xlu0 %v667, 20
        %v1367 = vpop.permute.xlu0 %1366
        %1368 = vrot.lane.b32.xlu0 %v668, 20
        %v1369 = vpop.permute.xlu0 %1368
        %1370 = vrot.lane.b32.xlu0 %v669, 20
        %v1371 = vpop.permute.xlu0 %1370
        %1372 = vrot.lane.b32.xlu0 %v670, 20
        %v1373 = vpop.permute.xlu0 %1372
        %1374 = vrot.lane.b32.xlu0 %v671, 20
        %v1375 = vpop.permute.xlu0 %1374
        %1376 = vrot.lane.b32.xlu0 %v672, 20
        %v1377 = vpop.permute.xlu0 %1376
        %1442 = vrot.lane.b32.xlu0 %v674, 24
        %v1443 = vpop.permute.xlu0 %1442
        %1444 = vrot.lane.b32.xlu0 %v675, 24
        %v1445 = vpop.permute.xlu0 %1444
        %1446 = vrot.lane.b32.xlu0 %v676, 24
        %v1447 = vpop.permute.xlu0 %1446
        %1448 = vrot.lane.b32.xlu0 %v677, 24
        %v1449 = vpop.permute.xlu0 %1448
        %1450 = vrot.lane.b32.xlu0 %v678, 24
        %v1451 = vpop.permute.xlu0 %1450
        %1452 = vrot.lane.b32.xlu0 %v679, 24
        %v1453 = vpop.permute.xlu0 %1452
        %1454 = vrot.lane.b32.xlu0 %v680, 24
        %v1455 = vpop.permute.xlu0 %1454
        %1456 = vrot.lane.b32.xlu0 %v681, 24
        %v1457 = vpop.permute.xlu0 %1456
        %1458 = vrot.lane.b32.xlu0 %v682, 24
        %v1459 = vpop.permute.xlu0 %1458
        %1460 = vrot.lane.b32.xlu0 %v683, 24
        %v1461 = vpop.permute.xlu0 %1460
        %1462 = vrot.lane.b32.xlu0 %v684, 24
        %v1463 = vpop.permute.xlu0 %1462
        %1464 = vrot.lane.b32.xlu0 %v685, 24
        %v1465 = vpop.permute.xlu0 %1464
        %1466 = vrot.lane.b32.xlu0 %v686, 24
        %v1467 = vpop.permute.xlu0 %1466
        %1468 = vrot.lane.b32.xlu0 %v687, 24
        %v1469 = vpop.permute.xlu0 %1468
        %1470 = vrot.lane.b32.xlu0 %v688, 24
        %v1471 = vpop.permute.xlu0 %1470
        %1472 = vrot.lane.b32.xlu0 %v689, 24
        %v1473 = vpop.permute.xlu0 %1472
        %1474 = vrot.lane.b32.xlu0 %v690, 24
        %v1475 = vpop.permute.xlu0 %1474
        %1476 = vrot.lane.b32.xlu0 %v691, 24
        %v1477 = vpop.permute.xlu0 %1476
        %1478 = vrot.lane.b32.xlu0 %v692, 24
        %v1479 = vpop.permute.xlu0 %1478
        %1480 = vrot.lane.b32.xlu0 %v693, 24
        %v1481 = vpop.permute.xlu0 %1480
        %1482 = vrot.lane.b32.xlu0 %v694, 24
        %v1483 = vpop.permute.xlu0 %1482
        %1484 = vrot.lane.b32.xlu0 %v695, 24
        %v1485 = vpop.permute.xlu0 %1484
        %1486 = vrot.lane.b32.xlu0 %v696, 24
        %v1487 = vpop.permute.xlu0 %1486
        %1488 = vrot.lane.b32.xlu0 %v697, 24
        %v1489 = vpop.permute.xlu0 %1488
        %1490 = vrot.lane.b32.xlu0 %v698, 24
        %v1491 = vpop.permute.xlu0 %1490
        %1492 = vrot.lane.b32.xlu0 %v699, 24
        %v1493 = vpop.permute.xlu0 %1492
        %1494 = vrot.lane.b32.xlu0 %v700, 24
        %v1495 = vpop.permute.xlu0 %1494
        %1496 = vrot.lane.b32.xlu0 %v701, 24
        %v1497 = vpop.permute.xlu0 %1496
        %1498 = vrot.lane.b32.xlu0 %v702, 24
        %v1499 = vpop.permute.xlu0 %1498
        %1500 = vrot.lane.b32.xlu0 %v703, 24
        %v1501 = vpop.permute.xlu0 %1500
        %1502 = vrot.lane.b32.xlu0 %v704, 24
        %v1503 = vpop.permute.xlu0 %1502
        %1504 = vrot.lane.b32.xlu0 %v705, 24
        %v1505 = vpop.permute.xlu0 %1504
        %1570 = vrot.lane.b32.xlu0 %v706, 28
        %v1571 = vpop.permute.xlu0 %1570
        %1572 = vrot.lane.b32.xlu0 %v707, 28
        %v1573 = vpop.permute.xlu0 %1572
        %1574 = vrot.lane.b32.xlu0 %v708, 28
        %v1575 = vpop.permute.xlu0 %1574
        %1576 = vrot.lane.b32.xlu0 %v709, 28
        %v1577 = vpop.permute.xlu0 %1576
        %1578 = vrot.lane.b32.xlu0 %v710, 28
        %v1579 = vpop.permute.xlu0 %1578
        %1580 = vrot.lane.b32.xlu0 %v711, 28
        %v1581 = vpop.permute.xlu0 %1580
        %1582 = vrot.lane.b32.xlu0 %v712, 28
        %v1583 = vpop.permute.xlu0 %1582
        %1584 = vrot.lane.b32.xlu0 %v713, 28
        %v1585 = vpop.permute.xlu0 %1584
        %1586 = vrot.lane.b32.xlu0 %v714, 28
        %v1587 = vpop.permute.xlu0 %1586
        %1588 = vrot.lane.b32.xlu0 %v715, 28
        %v1589 = vpop.permute.xlu0 %1588
        %1590 = vrot.lane.b32.xlu0 %v716, 28
        %v1591 = vpop.permute.xlu0 %1590
        %1592 = vrot.lane.b32.xlu0 %v717, 28
        %v1593 = vpop.permute.xlu0 %1592
        %1594 = vrot.lane.b32.xlu0 %v718, 28
        %v1595 = vpop.permute.xlu0 %1594
        %1596 = vrot.lane.b32.xlu0 %v719, 28
        %v1597 = vpop.permute.xlu0 %1596
        %1598 = vrot.lane.b32.xlu0 %v720, 28
        %v1599 = vpop.permute.xlu0 %1598
        %1600 = vrot.lane.b32.xlu0 %v721, 28
        %v1601 = vpop.permute.xlu0 %1600
        %1602 = vrot.lane.b32.xlu0 %v722, 28
        %v1603 = vpop.permute.xlu0 %1602
        %1604 = vrot.lane.b32.xlu0 %v723, 28
        %v1605 = vpop.permute.xlu0 %1604
        %1606 = vrot.lane.b32.xlu0 %v724, 28
        %v1607 = vpop.permute.xlu0 %1606
        %1608 = vrot.lane.b32.xlu0 %v725, 28
        %v1609 = vpop.permute.xlu0 %1608
        %1610 = vrot.lane.b32.xlu0 %v726, 28
        %v1611 = vpop.permute.xlu0 %1610
        %1612 = vrot.lane.b32.xlu0 %v727, 28
        %v1613 = vpop.permute.xlu0 %1612
        %1614 = vrot.lane.b32.xlu0 %v728, 28
        %v1615 = vpop.permute.xlu0 %1614
        %1616 = vrot.lane.b32.xlu0 %v729, 28
        %v1617 = vpop.permute.xlu0 %1616
        %1618 = vrot.lane.b32.xlu0 %v730, 28
        %v1619 = vpop.permute.xlu0 %1618
        %1620 = vrot.lane.b32.xlu0 %v731, 28
        %v1621 = vpop.permute.xlu0 %1620
        %1622 = vrot.lane.b32.xlu0 %v732, 28
        %v1623 = vpop.permute.xlu0 %1622
        %1624 = vrot.lane.b32.xlu0 %v733, 28
        %v1625 = vpop.permute.xlu0 %1624
        %1626 = vrot.lane.b32.xlu0 %v734, 28
        %v1627 = vpop.permute.xlu0 %1626
        %1628 = vrot.lane.b32.xlu0 %v735, 28
        %v1629 = vpop.permute.xlu0 %1628
        %1630 = vrot.lane.b32.xlu0 %v736, 28
        %v1631 = vpop.permute.xlu0 %1630
        %1632 = vrot.lane.b32.xlu0 %v737, 28
        %v1633 = vpop.permute.xlu0 %1632
        %1698 = vrot.lane.b32.xlu0 %v738, 32
        %v1699 = vpop.permute.xlu0 %1698
        %1700 = vrot.lane.b32.xlu0 %v739, 32
        %v1701 = vpop.permute.xlu0 %1700
        %1702 = vrot.lane.b32.xlu0 %v740, 32
        %v1703 = vpop.permute.xlu0 %1702
        %1704 = vrot.lane.b32.xlu0 %v741, 32
        %v1705 = vpop.permute.xlu0 %1704
        %1706 = vrot.lane.b32.xlu0 %v742, 32
        %v1707 = vpop.permute.xlu0 %1706
        %1708 = vrot.lane.b32.xlu0 %v743, 32
        %v1709 = vpop.permute.xlu0 %1708
        %1710 = vrot.lane.b32.xlu0 %v744, 32
        %v1711 = vpop.permute.xlu0 %1710
        %1712 = vrot.lane.b32.xlu0 %v745, 32
        %v1713 = vpop.permute.xlu0 %1712
        %1714 = vrot.lane.b32.xlu0 %v746, 32
        %v1715 = vpop.permute.xlu0 %1714
        %1716 = vrot.lane.b32.xlu0 %v747, 32
        %v1717 = vpop.permute.xlu0 %1716
        %1718 = vrot.lane.b32.xlu0 %v748, 32
        %v1719 = vpop.permute.xlu0 %1718
        %1720 = vrot.lane.b32.xlu0 %v749, 32
        %v1721 = vpop.permute.xlu0 %1720
        %1722 = vrot.lane.b32.xlu0 %v750, 32
        %v1723 = vpop.permute.xlu0 %1722
        %1724 = vrot.lane.b32.xlu0 %v751, 32
        %v1725 = vpop.permute.xlu0 %1724
        %1726 = vrot.lane.b32.xlu0 %v752, 32
        %v1727 = vpop.permute.xlu0 %1726
        %1728 = vrot.lane.b32.xlu0 %v753, 32
        %v1729 = vpop.permute.xlu0 %1728
        %1730 = vrot.lane.b32.xlu0 %v754, 32
        %v1731 = vpop.permute.xlu0 %1730
        %1732 = vrot.lane.b32.xlu0 %v755, 32
        %v1733 = vpop.permute.xlu0 %1732
        %1734 = vrot.lane.b32.xlu0 %v756, 32
        %v1735 = vpop.permute.xlu0 %1734
        %1736 = vrot.lane.b32.xlu0 %v757, 32
        %v1737 = vpop.permute.xlu0 %1736
        %1738 = vrot.lane.b32.xlu0 %v758, 32
        %v1739 = vpop.permute.xlu0 %1738
        %1740 = vrot.lane.b32.xlu0 %v759, 32
        %v1741 = vpop.permute.xlu0 %1740
        %1742 = vrot.lane.b32.xlu0 %v760, 32
        %v1743 = vpop.permute.xlu0 %1742
        %1744 = vrot.lane.b32.xlu0 %v761, 32
        %v1745 = vpop.permute.xlu0 %1744
        %1746 = vrot.lane.b32.xlu0 %v762, 32
        %v1747 = vpop.permute.xlu0 %1746
        %1748 = vrot.lane.b32.xlu0 %v763, 32
        %v1749 = vpop.permute.xlu0 %1748
        %1750 = vrot.lane.b32.xlu0 %v764, 32
        %v1751 = vpop.permute.xlu0 %1750
        %1752 = vrot.lane.b32.xlu0 %v765, 32
        %v1753 = vpop.permute.xlu0 %1752
        %1754 = vrot.lane.b32.xlu0 %v766, 32
        %v1755 = vpop.permute.xlu0 %1754
        %1756 = vrot.lane.b32.xlu0 %v767, 32
        %v1757 = vpop.permute.xlu0 %1756
        %1758 = vrot.lane.b32.xlu0 %v768, 32
        %v1759 = vpop.permute.xlu0 %1758
        %1760 = vrot.lane.b32.xlu0 %v769, 32
        %v1761 = vpop.permute.xlu0 %1760
        %v1794 = vsel %vm448, %v481, %v803
        %v1795 = vsel %vm448, %v482, %v805
        %v1796 = vsel %vm448, %v483, %v807
        %v1797 = vsel %vm448, %v484, %v809
        %v1798 = vsel %vm448, %v485, %v811
        %v1799 = vsel %vm448, %v486, %v813
        %v1800 = vsel %vm448, %v487, %v815
        %v1801 = vsel %vm448, %v488, %v817
        %v1802 = vsel %vm448, %v489, %v819
        %v1803 = vsel %vm448, %v490, %v821
        %v1804 = vsel %vm448, %v491, %v823
        %v1805 = vsel %vm448, %v492, %v825
        %v1806 = vsel %vm448, %v493, %v827
        %v1807 = vsel %vm448, %v494, %v829
        %v1808 = vsel %vm448, %v495, %v831
        %v1809 = vsel %vm448, %v496, %v833
        %v1810 = vsel %vm448, %v497, %v835
        %v1811 = vsel %vm448, %v498, %v837
        %v1812 = vsel %vm448, %v499, %v839
        %v1813 = vsel %vm448, %v500, %v841
        %v1814 = vsel %vm448, %v501, %v843
        %v1815 = vsel %vm448, %v502, %v845
        %v1816 = vsel %vm448, %v503, %v847
        %v1817 = vsel %vm448, %v504, %v849
        %v1818 = vsel %vm448, %v505, %v851
        %v1819 = vsel %vm448, %v506, %v853
        %v1820 = vsel %vm448, %v507, %v855
        %v1821 = vsel %vm448, %v508, %v857
        %v1822 = vsel %vm448, %v509, %v859
        %v1823 = vsel %vm448, %v510, %v861
        %v1824 = vsel %vm448, %v511, %v863
        %v1825 = vsel %vm448, %v512, %v865
        %vm1826 = vcmask 64512
        %v1827 = vsel %vm1826, %v1794, %v931
        %v1828 = vsel %vm1826, %v1795, %v933
        %v1829 = vsel %vm1826, %v1796, %v935
        %v1830 = vsel %vm1826, %v1797, %v937
        %v1831 = vsel %vm1826, %v1798, %v939
        %v1832 = vsel %vm1826, %v1799, %v941
        %v1833 = vsel %vm1826, %v1800, %v943
        %v1834 = vsel %vm1826, %v1801, %v945
        %v1835 = vsel %vm1826, %v1802, %v947
        %v1836 = vsel %vm1826, %v1803, %v949
        %v1837 = vsel %vm1826, %v1804, %v951
        %v1838 = vsel %vm1826, %v1805, %v953
        %v1839 = vsel %vm1826, %v1806, %v955
        %v1840 = vsel %vm1826, %v1807, %v957
        %v1841 = vsel %vm1826, %v1808, %v959
        %v1842 = vsel %vm1826, %v1809, %v961
        %v1843 = vsel %vm1826, %v1810, %v963
        %v1844 = vsel %vm1826, %v1811, %v965
        %v1845 = vsel %vm1826, %v1812, %v967
        %v1846 = vsel %vm1826, %v1813, %v969
        %v1847 = vsel %vm1826, %v1814, %v971
        %v1848 = vsel %vm1826, %v1815, %v973
        %v1849 = vsel %vm1826, %v1816, %v975
        %v1850 = vsel %vm1826, %v1817, %v977
        %v1851 = vsel %vm1826, %v1818, %v979
        %v1852 = vsel %vm1826, %v1819, %v981
        %v1853 = vsel %vm1826, %v1820, %v983
        %v1854 = vsel %vm1826, %v1821, %v985
        %v1855 = vsel %vm1826, %v1822, %v987
        %v1856 = vsel %vm1826, %v1823, %v989
        %v1857 = vsel %vm1826, %v1824, %v991
        %v1858 = vsel %vm1826, %v1825, %v993
        %vm1859 = vcmask 97280
        %v1860 = vsel %vm1859, %v1827, %v1059
        %v1861 = vsel %vm1859, %v1828, %v1061
        %v1862 = vsel %vm1859, %v1829, %v1063
        %v1863 = vsel %vm1859, %v1830, %v1065
        %v1864 = vsel %vm1859, %v1831, %v1067
        %v1865 = vsel %vm1859, %v1832, %v1069
        %v1866 = vsel %vm1859, %v1833, %v1071
        %v1867 = vsel %vm1859, %v1834, %v1073
        %v1868 = vsel %vm1859, %v1835, %v1075
        %v1869 = vsel %vm1859, %v1836, %v1077
        %v1870 = vsel %vm1859, %v1837, %v1079
        %v1871 = vsel %vm1859, %v1838, %v1081
        %v1872 = vsel %vm1859, %v1839, %v1083
        %v1873 = vsel %vm1859, %v1840, %v1085
        %v1874 = vsel %vm1859, %v1841, %v1087
        %v1875 = vsel %vm1859, %v1842, %v1089
        %v1876 = vsel %vm1859, %v1843, %v1091
        %v1877 = vsel %vm1859, %v1844, %v1093
        %v1878 = vsel %vm1859, %v1845, %v1095
        %v1879 = vsel %vm1859, %v1846, %v1097
        %v1880 = vsel %vm1859, %v1847, %v1099
        %v1881 = vsel %vm1859, %v1848, %v1101
        %v1882 = vsel %vm1859, %v1849, %v1103
        %v1883 = vsel %vm1859, %v1850, %v1105
        %v1884 = vsel %vm1859, %v1851, %v1107
        %v1885 = vsel %vm1859, %v1852, %v1109
        %v1886 = vsel %vm1859, %v1853, %v1111
        %v1887 = vsel %vm1859, %v1854, %v1113
        %v1888 = vsel %vm1859, %v1855, %v1115
        %v1889 = vsel %vm1859, %v1856, %v1117
        %v1890 = vsel %vm1859, %v1857, %v1119
        %v1891 = vsel %vm1859, %v1858, %v1121
        %vm1892 = vcmask 130048
        %v1893 = vsel %vm1892, %v1860, %v1187
        %v1894 = vsel %vm1892, %v1861, %v1189
        %v1895 = vsel %vm1892, %v1862, %v1191
        %v1896 = vsel %vm1892, %v1863, %v1193
        %v1897 = vsel %vm1892, %v1864, %v1195
        %v1898 = vsel %vm1892, %v1865, %v1197
        %v1899 = vsel %vm1892, %v1866, %v1199
        %v1900 = vsel %vm1892, %v1867, %v1201
        %v1901 = vsel %vm1892, %v1868, %v1203
        %v1902 = vsel %vm1892, %v1869, %v1205
        %v1903 = vsel %vm1892, %v1870, %v1207
        %v1904 = vsel %vm1892, %v1871, %v1209
        %v1905 = vsel %vm1892, %v1872, %v1211
        %v1906 = vsel %vm1892, %v1873, %v1213
        %v1907 = vsel %vm1892, %v1874, %v1215
        %v1908 = vsel %vm1892, %v1875, %v1217
        %v1909 = vsel %vm1892, %v1876, %v1219
        %v1910 = vsel %vm1892, %v1877, %v1221
        %v1911 = vsel %vm1892, %v1878, %v1223
        %v1912 = vsel %vm1892, %v1879, %v1225
        %v1913 = vsel %vm1892, %v1880, %v1227
        %v1914 = vsel %vm1892, %v1881, %v1229
        %v1915 = vsel %vm1892, %v1882, %v1231
        %v1916 = vsel %vm1892, %v1883, %v1233
        %v1917 = vsel %vm1892, %v1884, %v1235
        %v1918 = vsel %vm1892, %v1885, %v1237
        %v1919 = vsel %vm1892, %v1886, %v1239
        %v1920 = vsel %vm1892, %v1887, %v1241
        %v1921 = vsel %vm1892, %v1888, %v1243
        %v1922 = vsel %vm1892, %v1889, %v1245
        %v1923 = vsel %vm1892, %v1890, %v1247
        %v1924 = vsel %vm1892, %v1891, %v1249
        %vm1925 = vcmask 162816
        %v1926 = vsel %vm1925, %v1893, %v1315
        %v1927 = vsel %vm1925, %v1894, %v1317
        %v1928 = vsel %vm1925, %v1895, %v1319
        %v1929 = vsel %vm1925, %v1896, %v1321
        %v1930 = vsel %vm1925, %v1897, %v1323
        %v1931 = vsel %vm1925, %v1898, %v1325
        %v1932 = vsel %vm1925, %v1899, %v1327
        %v1933 = vsel %vm1925, %v1900, %v1329
        %v1934 = vsel %vm1925, %v1901, %v1331
        %v1935 = vsel %vm1925, %v1902, %v1333
        %v1936 = vsel %vm1925, %v1903, %v1335
        %v1937 = vsel %vm1925, %v1904, %v1337
        %v1938 = vsel %vm1925, %v1905, %v1339
        %v1939 = vsel %vm1925, %v1906, %v1341
        %v1940 = vsel %vm1925, %v1907, %v1343
        %v1941 = vsel %vm1925, %v1908, %v1345
        %v1942 = vsel %vm1925, %v1909, %v1347
        %v1943 = vsel %vm1925, %v1910, %v1349
        %v1944 = vsel %vm1925, %v1911, %v1351
        %v1945 = vsel %vm1925, %v1912, %v1353
        %v1946 = vsel %vm1925, %v1913, %v1355
        %v1947 = vsel %vm1925, %v1914, %v1357
        %v1948 = vsel %vm1925, %v1915, %v1359
        %v1949 = vsel %vm1925, %v1916, %v1361
        %v1950 = vsel %vm1925, %v1917, %v1363
        %v1951 = vsel %vm1925, %v1918, %v1365
        %v1952 = vsel %vm1925, %v1919, %v1367
        %v1953 = vsel %vm1925, %v1920, %v1369
        %v1954 = vsel %vm1925, %v1921, %v1371
        %v1955 = vsel %vm1925, %v1922, %v1373
        %v1956 = vsel %vm1925, %v1923, %v1375
        %v1957 = vsel %vm1925, %v1924, %v1377
        %vm1958 = vcmask 195584
        %v1959 = vsel %vm1958, %v1926, %v1443
        %v1960 = vsel %vm1958, %v1927, %v1445
        %v1961 = vsel %vm1958, %v1928, %v1447
        %v1962 = vsel %vm1958, %v1929, %v1449
        %v1963 = vsel %vm1958, %v1930, %v1451
        %v1964 = vsel %vm1958, %v1931, %v1453
        %v1965 = vsel %vm1958, %v1932, %v1455
        %v1966 = vsel %vm1958, %v1933, %v1457
        %v1967 = vsel %vm1958, %v1934, %v1459
        %v1968 = vsel %vm1958, %v1935, %v1461
        %v1969 = vsel %vm1958, %v1936, %v1463
        %v1970 = vsel %vm1958, %v1937, %v1465
        %v1971 = vsel %vm1958, %v1938, %v1467
        %v1972 = vsel %vm1958, %v1939, %v1469
        %v1973 = vsel %vm1958, %v1940, %v1471
        %v1974 = vsel %vm1958, %v1941, %v1473
        %v1975 = vsel %vm1958, %v1942, %v1475
        %v1976 = vsel %vm1958, %v1943, %v1477
        %v1977 = vsel %vm1958, %v1944, %v1479
        %v1978 = vsel %vm1958, %v1945, %v1481
        %v1979 = vsel %vm1958, %v1946, %v1483
        %v1980 = vsel %vm1958, %v1947, %v1485
        %v1981 = vsel %vm1958, %v1948, %v1487
        %v1982 = vsel %vm1958, %v1949, %v1489
        %v1983 = vsel %vm1958, %v1950, %v1491
        %v1984 = vsel %vm1958, %v1951, %v1493
        %v1985 = vsel %vm1958, %v1952, %v1495
        %v1986 = vsel %vm1958, %v1953, %v1497
        %v1987 = vsel %vm1958, %v1954, %v1499
        %v1988 = vsel %vm1958, %v1955, %v1501
        %v1989 = vsel %vm1958, %v1956, %v1503
        %v1990 = vsel %vm1958, %v1957, %v1505
        %vm1991 = vcmask 228352
        %v1992 = vsel %vm1991, %v1959, %v1571
        %v1993 = vsel %vm1991, %v1960, %v1573
        %v1994 = vsel %vm1991, %v1961, %v1575
        %v1995 = vsel %vm1991, %v1962, %v1577
        %v1996 = vsel %vm1991, %v1963, %v1579
        %v1997 = vsel %vm1991, %v1964, %v1581
        %v1998 = vsel %vm1991, %v1965, %v1583
        %v1999 = vsel %vm1991, %v1966, %v1585
        %v2000 = vsel %vm1991, %v1967, %v1587
        %v2001 = vsel %vm1991, %v1968, %v1589
        %v2002 = vsel %vm1991, %v1969, %v1591
        %v2003 = vsel %vm1991, %v1970, %v1593
        %v2004 = vsel %vm1991, %v1971, %v1595
        %v2005 = vsel %vm1991, %v1972, %v1597
        %v2006 = vsel %vm1991, %v1973, %v1599
        %v2007 = vsel %vm1991, %v1974, %v1601
        %v2008 = vsel %vm1991, %v1975, %v1603
        %v2009 = vsel %vm1991, %v1976, %v1605
        %v2010 = vsel %vm1991, %v1977, %v1607
        %v2011 = vsel %vm1991, %v1978, %v1609
        %v2012 = vsel %vm1991, %v1979, %v1611
        %v2013 = vsel %vm1991, %v1980, %v1613
        %v2014 = vsel %vm1991, %v1981, %v1615
        %v2015 = vsel %vm1991, %v1982, %v1617
        %v2016 = vsel %vm1991, %v1983, %v1619
        %v2017 = vsel %vm1991, %v1984, %v1621
        %v2018 = vsel %vm1991, %v1985, %v1623
        %v2019 = vsel %vm1991, %v1986, %v1625
        %v2020 = vsel %vm1991, %v1987, %v1627
        %v2021 = vsel %vm1991, %v1988, %v1629
        %v2022 = vsel %vm1991, %v1989, %v1631
        %v2023 = vsel %vm1991, %v1990, %v1633
        %vm2024 = vcmask 261120
        %v2025 = vsel %vm2024, %v1992, %v1699
        %v2026 = vsel %vm2024, %v1993, %v1701
        %v2027 = vsel %vm2024, %v1994, %v1703
        %v2028 = vsel %vm2024, %v1995, %v1705
        %v2029 = vsel %vm2024, %v1996, %v1707
        %v2030 = vsel %vm2024, %v1997, %v1709
        %v2031 = vsel %vm2024, %v1998, %v1711
        %v2032 = vsel %vm2024, %v1999, %v1713
        %v2033 = vsel %vm2024, %v2000, %v1715
        %v2034 = vsel %vm2024, %v2001, %v1717
        %v2035 = vsel %vm2024, %v2002, %v1719
        %v2036 = vsel %vm2024, %v2003, %v1721
        %v2037 = vsel %vm2024, %v2004, %v1723
        %v2038 = vsel %vm2024, %v2005, %v1725
        %v2039 = vsel %vm2024, %v2006, %v1727
        %v2040 = vsel %vm2024, %v2007, %v1729
        %v2041 = vsel %vm2024, %v2008, %v1731
        %v2042 = vsel %vm2024, %v2009, %v1733
        %v2043 = vsel %vm2024, %v2010, %v1735
        %v2044 = vsel %vm2024, %v2011, %v1737
        %v2045 = vsel %vm2024, %v2012, %v1739
        %v2046 = vsel %vm2024, %v2013, %v1741
        %v2047 = vsel %vm2024, %v2014, %v1743
        %v2048 = vsel %vm2024, %v2015, %v1745
        %v2049 = vsel %vm2024, %v2016, %v1747
        %v2050 = vsel %vm2024, %v2017, %v1749
        %v2051 = vsel %vm2024, %v2018, %v1751
        %v2052 = vsel %vm2024, %v2019, %v1753
        %v2053 = vsel %vm2024, %v2020, %v1755
        %v2054 = vsel %vm2024, %v2021, %v1757
        %v2055 = vsel %vm2024, %v2022, %v1759
        %v2056 = vsel %vm2024, %v2023, %v1761
        %v2057 = vpack.c.bf16 %v2026, %v2025
        %v2058 = vpack.c.bf16 %v2028, %v2027
        %v2059 = vpack.c.bf16 %v2030, %v2029
        %v2060 = vpack.c.bf16 %v2032, %v2031
        %v2061 = vpack.c.bf16 %v2034, %v2033
        %v2062 = vpack.c.bf16 %v2036, %v2035
        %v2063 = vpack.c.bf16 %v2038, %v2037
        %v2064 = vpack.c.bf16 %v2040, %v2039
        %v2065 = vpack.c.bf16 %v2042, %v2041
        %v2066 = vpack.c.bf16 %v2044, %v2043
        %v2067 = vpack.c.bf16 %v2046, %v2045
        %v2068 = vpack.c.bf16 %v2048, %v2047
        %v2069 = vpack.c.bf16 %v2050, %v2049
        %v2070 = vpack.c.bf16 %v2052, %v2051
        %v2071 = vpack.c.bf16 %v2054, %v2053
        %v2072 = vpack.c.bf16 %v2056, %v2055
        %v2073 = vld [vmem:[#allocation3] sm:$0xff]
        %v2074 = vld [vmem:[#allocation3 + $0x8] sm:$0xff]
        %v2075 = vld [vmem:[#allocation3 + $0x18] sm:$0xff]
        %v2076 = vld [vmem:[#allocation3 + $0x20] sm:$0xff]
        %v2077 = vld [vmem:[#allocation3 + $0x30] sm:$0xff]
        %v2078 = vld [vmem:[#allocation3 + $0x38] sm:$0xff]
        %v2079 = vld [vmem:[#allocation3 + $0x48] sm:$0xff]
        %v2080 = vld [vmem:[#allocation3 + $0x50] sm:$0xff]
        %v2081 = vld [vmem:[#allocation3 + $0x60] sm:$0xff]
        %v2082 = vld [vmem:[#allocation3 + $0x68] sm:$0xff]
        %v2083 = vld [vmem:[#allocation3 + $0x78] sm:$0xff]
        %v2084 = vld [vmem:[#allocation3 + $0x80] sm:$0xff]
        %v2085 = vld [vmem:[#allocation3 + $0x90] sm:$0xff]
        %v2086 = vld [vmem:[#allocation3 + $0x98] sm:$0xff]
        %v2087 = vld [vmem:[#allocation3 + $0xa8] sm:$0xff]
        %v2088 = vld [vmem:[#allocation3 + $0xb0] sm:$0xff]
        %v2089 = vld [vmem:[#allocation3 + $0xc0] sm:$0xff]
        %v2090 = vld [vmem:[#allocation3 + $0xc8] sm:$0xff]
        %v2091 = vld [vmem:[#allocation3 + $0xd8] sm:$0xff]
        %v2092 = vld [vmem:[#allocation3 + $0xe0] sm:$0xff]
        %v2093 = vld [vmem:[#allocation3 + $0xf0] sm:$0xff]
        %v2094 = vld [vmem:[#allocation3 + $0xf8] sm:$0xff]
        %v2095 = vld [vmem:[#allocation3 + $0x108] sm:$0xff]
        %v2096 = vld [vmem:[#allocation3 + $0x110] sm:$0xff]
        %v2097 = vld [vmem:[#allocation3 + $0x120] sm:$0xff]
        %v2098 = vld [vmem:[#allocation3 + $0x128] sm:$0xff]
        %v2099 = vld [vmem:[#allocation3 + $0x138] sm:$0xff]
        %v2100 = vld [vmem:[#allocation3 + $0x140] sm:$0xff]
        %v2101 = vld [vmem:[#allocation3 + $0x150] sm:$0xff]
        %v2102 = vld [vmem:[#allocation3 + $0x158] sm:$0xff]
        %v2103 = vld [vmem:[#allocation3 + $0x168] sm:$0xff]
        %v2104 = vld [vmem:[#allocation3 + $0x170] sm:$0xff]
        %v2105 = vld [vmem:[#allocation3 + $0x1] sm:$0xff]
        %v2106 = vld [vmem:[#allocation3 + $0x9] sm:$0xff]
        %v2107 = vld [vmem:[#allocation3 + $0x19] sm:$0xff]
        %v2108 = vld [vmem:[#allocation3 + $0x21] sm:$0xff]
        %v2109 = vld [vmem:[#allocation3 + $0x31] sm:$0xff]
        %v2110 = vld [vmem:[#allocation3 + $0x39] sm:$0xff]
        %v2111 = vld [vmem:[#allocation3 + $0x49] sm:$0xff]
        %v2112 = vld [vmem:[#allocation3 + $0x51] sm:$0xff]
        %v2113 = vld [vmem:[#allocation3 + $0x61] sm:$0xff]
        %v2114 = vld [vmem:[#allocation3 + $0x69] sm:$0xff]
        %v2115 = vld [vmem:[#allocation3 + $0x79] sm:$0xff]
        %v2116 = vld [vmem:[#allocation3 + $0x81] sm:$0xff]
        %v2117 = vld [vmem:[#allocation3 + $0x91] sm:$0xff]
        %v2118 = vld [vmem:[#allocation3 + $0x99] sm:$0xff]
        %v2119 = vld [vmem:[#allocation3 + $0xa9] sm:$0xff]
        %v2120 = vld [vmem:[#allocation3 + $0xb1] sm:$0xff]
        %v2121 = vld [vmem:[#allocation3 + $0xc1] sm:$0xff]
        %v2122 = vld [vmem:[#allocation3 + $0xc9] sm:$0xff]
        %v2123 = vld [vmem:[#allocation3 + $0xd9] sm:$0xff]
        %v2124 = vld [vmem:[#allocation3 + $0xe1] sm:$0xff]
        %v2125 = vld [vmem:[#allocation3 + $0xf1] sm:$0xff]
        %v2126 = vld [vmem:[#allocation3 + $0xf9] sm:$0xff]
        %v2127 = vld [vmem:[#allocation3 + $0x109] sm:$0xff]
        %v2128 = vld [vmem:[#allocation3 + $0x111] sm:$0xff]
        %v2129 = vld [vmem:[#allocation3 + $0x121] sm:$0xff]
        %v2130 = vld [vmem:[#allocation3 + $0x129] sm:$0xff]
        %v2131 = vld [vmem:[#allocation3 + $0x139] sm:$0xff]
        %v2132 = vld [vmem:[#allocation3 + $0x141] sm:$0xff]
        %v2133 = vld [vmem:[#allocation3 + $0x151] sm:$0xff]
        %v2134 = vld [vmem:[#allocation3 + $0x159] sm:$0xff]
        %v2135 = vld [vmem:[#allocation3 + $0x169] sm:$0xff]
        %v2136 = vld [vmem:[#allocation3 + $0x171] sm:$0xff]
        %v2137 = vld [vmem:[#allocation3 + $0x2] sm:$0xff]
        %v2138 = vld [vmem:[#allocation3 + $0xa] sm:$0xff]
        %v2139 = vld [vmem:[#allocation3 + $0x1a] sm:$0xff]
        %v2140 = vld [vmem:[#allocation3 + $0x22] sm:$0xff]
        %v2141 = vld [vmem:[#allocation3 + $0x32] sm:$0xff]
        %v2142 = vld [vmem:[#allocation3 + $0x3a] sm:$0xff]
        %v2143 = vld [vmem:[#allocation3 + $0x4a] sm:$0xff]
        %v2144 = vld [vmem:[#allocation3 + $0x52] sm:$0xff]
        %v2145 = vld [vmem:[#allocation3 + $0x62] sm:$0xff]
        %v2146 = vld [vmem:[#allocation3 + $0x6a] sm:$0xff]
        %v2147 = vld [vmem:[#allocation3 + $0x7a] sm:$0xff]
        %v2148 = vld [vmem:[#allocation3 + $0x82] sm:$0xff]
        %v2149 = vld [vmem:[#allocation3 + $0x92] sm:$0xff]
        %v2150 = vld [vmem:[#allocation3 + $0x9a] sm:$0xff]
        %v2151 = vld [vmem:[#allocation3 + $0xaa] sm:$0xff]
        %v2152 = vld [vmem:[#allocation3 + $0xb2] sm:$0xff]
        %v2153 = vld [vmem:[#allocation3 + $0xc2] sm:$0xff]
        %v2154 = vld [vmem:[#allocation3 + $0xca] sm:$0xff]
        %v2155 = vld [vmem:[#allocation3 + $0xda] sm:$0xff]
        %v2156 = vld [vmem:[#allocation3 + $0xe2] sm:$0xff]
        %v2157 = vld [vmem:[#allocation3 + $0xf2] sm:$0xff]
        %v2158 = vld [vmem:[#allocation3 + $0xfa] sm:$0xff]
        %v2159 = vld [vmem:[#allocation3 + $0x10a] sm:$0xff]
        %v2160 = vld [vmem:[#allocation3 + $0x112] sm:$0xff]
        %v2161 = vld [vmem:[#allocation3 + $0x122] sm:$0xff]
        %v2162 = vld [vmem:[#allocation3 + $0x12a] sm:$0xff]
        %v2163 = vld [vmem:[#allocation3 + $0x13a] sm:$0xff]
        %v2164 = vld [vmem:[#allocation3 + $0x142] sm:$0xff]
        %v2165 = vld [vmem:[#allocation3 + $0x152] sm:$0xff]
        %v2166 = vld [vmem:[#allocation3 + $0x15a] sm:$0xff]
        %v2167 = vld [vmem:[#allocation3 + $0x16a] sm:$0xff]
        %v2168 = vld [vmem:[#allocation3 + $0x172] sm:$0xff]
        %s2169 = scalar_lea.vmem [#allocation3], 24
        %v2170 = vld [vmem:[%s2169] sm:$0xff]
        %v2171 = vld [vmem:[%s2169 + $0x8] sm:$0xff]
        %v2172 = vld [vmem:[%s2169 + $0x18] sm:$0xff]
        %v2173 = vld [vmem:[%s2169 + $0x20] sm:$0xff]
        %v2174 = vld [vmem:[%s2169 + $0x30] sm:$0xff]
        %v2175 = vld [vmem:[%s2169 + $0x38] sm:$0xff]
        %v2176 = vld [vmem:[%s2169 + $0x48] sm:$0xff]
        %v2177 = vld [vmem:[%s2169 + $0x50] sm:$0xff]
        %v2178 = vld [vmem:[%s2169 + $0x60] sm:$0xff]
        %v2179 = vld [vmem:[%s2169 + $0x68] sm:$0xff]
        %v2180 = vld [vmem:[%s2169 + $0x78] sm:$0xff]
        %v2181 = vld [vmem:[%s2169 + $0x80] sm:$0xff]
        %v2182 = vld [vmem:[%s2169 + $0x90] sm:$0xff]
        %v2183 = vld [vmem:[%s2169 + $0x98] sm:$0xff]
        %v2184 = vld [vmem:[%s2169 + $0xa8] sm:$0xff]
        %v2185 = vld [vmem:[%s2169 + $0xb0] sm:$0xff]
        %v2186 = vld [vmem:[%s2169 + $0xc0] sm:$0xff]
        %v2187 = vld [vmem:[%s2169 + $0xc8] sm:$0xff]
        %v2188 = vld [vmem:[%s2169 + $0xd8] sm:$0xff]
        %v2189 = vld [vmem:[%s2169 + $0xe0] sm:$0xff]
        %v2190 = vld [vmem:[%s2169 + $0xf0] sm:$0xff]
        %v2191 = vld [vmem:[%s2169 + $0xf8] sm:$0xff]
        %v2192 = vld [vmem:[%s2169 + $0x108] sm:$0xff]
        %v2193 = vld [vmem:[%s2169 + $0x110] sm:$0xff]
        %v2194 = vld [vmem:[%s2169 + $0x120] sm:$0xff]
        %v2195 = vld [vmem:[%s2169 + $0x128] sm:$0xff]
        %v2196 = vld [vmem:[%s2169 + $0x138] sm:$0xff]
        %v2197 = vld [vmem:[%s2169 + $0x140] sm:$0xff]
        %v2198 = vld [vmem:[%s2169 + $0x150] sm:$0xff]
        %v2199 = vld [vmem:[%s2169 + $0x158] sm:$0xff]
        %v2200 = vld [vmem:[%s2169 + $0x168] sm:$0xff]
        %v2201 = vld [vmem:[%s2169 + $0x170] sm:$0xff]
        %v2202 = vld [vmem:[%s2169 + $0x1] sm:$0xff]
        %v2203 = vld [vmem:[%s2169 + $0x9] sm:$0xff]
        %v2204 = vld [vmem:[%s2169 + $0x19] sm:$0xff]
        %v2205 = vld [vmem:[%s2169 + $0x21] sm:$0xff]
        %v2206 = vld [vmem:[%s2169 + $0x31] sm:$0xff]
        %v2207 = vld [vmem:[%s2169 + $0x39] sm:$0xff]
        %v2208 = vld [vmem:[%s2169 + $0x49] sm:$0xff]
        %v2209 = vld [vmem:[%s2169 + $0x51] sm:$0xff]
        %v2210 = vld [vmem:[%s2169 + $0x61] sm:$0xff]
        %v2211 = vld [vmem:[%s2169 + $0x69] sm:$0xff]
        %v2212 = vld [vmem:[%s2169 + $0x79] sm:$0xff]
        %v2213 = vld [vmem:[%s2169 + $0x81] sm:$0xff]
        %v2214 = vld [vmem:[%s2169 + $0x91] sm:$0xff]
        %v2215 = vld [vmem:[%s2169 + $0x99] sm:$0xff]
        %v2216 = vld [vmem:[%s2169 + $0xa9] sm:$0xff]
        %v2217 = vld [vmem:[%s2169 + $0xb1] sm:$0xff]
        %v2218 = vld [vmem:[%s2169 + $0xc1] sm:$0xff]
        %v2219 = vld [vmem:[%s2169 + $0xc9] sm:$0xff]
        %v2220 = vld [vmem:[%s2169 + $0xd9] sm:$0xff]
        %v2221 = vld [vmem:[%s2169 + $0xe1] sm:$0xff]
        %v2222 = vld [vmem:[%s2169 + $0xf1] sm:$0xff]
        %v2223 = vld [vmem:[%s2169 + $0xf9] sm:$0xff]
        %v2224 = vld [vmem:[%s2169 + $0x109] sm:$0xff]
        %v2225 = vld [vmem:[%s2169 + $0x111] sm:$0xff]
        %v2226 = vld [vmem:[%s2169 + $0x121] sm:$0xff]
        %v2227 = vld [vmem:[%s2169 + $0x129] sm:$0xff]
        %v2228 = vld [vmem:[%s2169 + $0x139] sm:$0xff]
        %v2229 = vld [vmem:[%s2169 + $0x141] sm:$0xff]
        %v2230 = vld [vmem:[%s2169 + $0x151] sm:$0xff]
        %v2231 = vld [vmem:[%s2169 + $0x159] sm:$0xff]
        %v2232 = vld [vmem:[%s2169 + $0x169] sm:$0xff]
        %v2233 = vld [vmem:[%s2169 + $0x171] sm:$0xff]
        %v2234 = vld [vmem:[%s2169 + $0x2] sm:$0xff]
        %v2235 = vld [vmem:[%s2169 + $0xa] sm:$0xff]
        %v2236 = vld [vmem:[%s2169 + $0x1a] sm:$0xff]
        %v2237 = vld [vmem:[%s2169 + $0x22] sm:$0xff]
        %v2238 = vld [vmem:[%s2169 + $0x32] sm:$0xff]
        %v2239 = vld [vmem:[%s2169 + $0x3a] sm:$0xff]
        %v2240 = vld [vmem:[%s2169 + $0x4a] sm:$0xff]
        %v2241 = vld [vmem:[%s2169 + $0x52] sm:$0xff]
        %v2242 = vld [vmem:[%s2169 + $0x62] sm:$0xff]
        %v2243 = vld [vmem:[%s2169 + $0x6a] sm:$0xff]
        %v2244 = vld [vmem:[%s2169 + $0x7a] sm:$0xff]
        %v2245 = vld [vmem:[%s2169 + $0x82] sm:$0xff]
        %v2246 = vld [vmem:[%s2169 + $0x92] sm:$0xff]
        %v2247 = vld [vmem:[%s2169 + $0x9a] sm:$0xff]
        %v2248 = vld [vmem:[%s2169 + $0xaa] sm:$0xff]
        %v2249 = vld [vmem:[%s2169 + $0xb2] sm:$0xff]
        %v2250 = vld [vmem:[%s2169 + $0xc2] sm:$0xff]
        %v2251 = vld [vmem:[%s2169 + $0xca] sm:$0xff]
        %v2252 = vld [vmem:[%s2169 + $0xda] sm:$0xff]
        %v2253 = vld [vmem:[%s2169 + $0xe2] sm:$0xff]
        %v2254 = vld [vmem:[%s2169 + $0xf2] sm:$0xff]
        %v2255 = vld [vmem:[%s2169 + $0xfa] sm:$0xff]
        %v2256 = vld [vmem:[%s2169 + $0x10a] sm:$0xff]
        %v2257 = vld [vmem:[%s2169 + $0x112] sm:$0xff]
        %v2258 = vld [vmem:[%s2169 + $0x122] sm:$0xff]
        %v2259 = vld [vmem:[%s2169 + $0x12a] sm:$0xff]
        %v2260 = vld [vmem:[%s2169 + $0x13a] sm:$0xff]
        %v2261 = vld [vmem:[%s2169 + $0x142] sm:$0xff]
        %v2262 = vld [vmem:[%s2169 + $0x152] sm:$0xff]
        %v2263 = vld [vmem:[%s2169 + $0x15a] sm:$0xff]
        %v2264 = vld [vmem:[%s2169 + $0x16a] sm:$0xff]
        %v2265 = vld [vmem:[%s2169 + $0x172] sm:$0xff]
        %s2266 = scalar_lea.vmem [#allocation3], 48
        %v2267 = vld [vmem:[%s2266] sm:$0xff]
        %v2268 = vld [vmem:[%s2266 + $0x8] sm:$0xff]
        %v2269 = vld [vmem:[%s2266 + $0x18] sm:$0xff]
        %v2270 = vld [vmem:[%s2266 + $0x20] sm:$0xff]
        %v2271 = vld [vmem:[%s2266 + $0x30] sm:$0xff]
        %v2272 = vld [vmem:[%s2266 + $0x38] sm:$0xff]
        %v2273 = vld [vmem:[%s2266 + $0x48] sm:$0xff]
        %v2274 = vld [vmem:[%s2266 + $0x50] sm:$0xff]
        %v2275 = vld [vmem:[%s2266 + $0x60] sm:$0xff]
        %v2276 = vld [vmem:[%s2266 + $0x68] sm:$0xff]
        %v2277 = vld [vmem:[%s2266 + $0x78] sm:$0xff]
        %v2278 = vld [vmem:[%s2266 + $0x80] sm:$0xff]
        %v2279 = vld [vmem:[%s2266 + $0x90] sm:$0xff]
        %v2280 = vld [vmem:[%s2266 + $0x98] sm:$0xff]
        %v2281 = vld [vmem:[%s2266 + $0xa8] sm:$0xff]
        %v2282 = vld [vmem:[%s2266 + $0xb0] sm:$0xff]
        %v2283 = vld [vmem:[%s2266 + $0xc0] sm:$0xff]
        %v2284 = vld [vmem:[%s2266 + $0xc8] sm:$0xff]
        %v2285 = vld [vmem:[%s2266 + $0xd8] sm:$0xff]
        %v2286 = vld [vmem:[%s2266 + $0xe0] sm:$0xff]
        %v2287 = vld [vmem:[%s2266 + $0xf0] sm:$0xff]
        %v2288 = vld [vmem:[%s2266 + $0xf8] sm:$0xff]
        %v2289 = vld [vmem:[%s2266 + $0x108] sm:$0xff]
        %v2290 = vld [vmem:[%s2266 + $0x110] sm:$0xff]
        %v2291 = vld [vmem:[%s2266 + $0x120] sm:$0xff]
        %v2292 = vld [vmem:[%s2266 + $0x128] sm:$0xff]
        %v2293 = vld [vmem:[%s2266 + $0x138] sm:$0xff]
        %v2294 = vld [vmem:[%s2266 + $0x140] sm:$0xff]
        %v2295 = vld [vmem:[%s2266 + $0x150] sm:$0xff]
        %v2296 = vld [vmem:[%s2266 + $0x158] sm:$0xff]
        %v2297 = vld [vmem:[%s2266 + $0x168] sm:$0xff]
        %v2298 = vld [vmem:[%s2266 + $0x170] sm:$0xff]
        %v2299 = vld [vmem:[%s2266 + $0x1] sm:$0xff]
        %v2300 = vld [vmem:[%s2266 + $0x9] sm:$0xff]
        %v2301 = vld [vmem:[%s2266 + $0x19] sm:$0xff]
        %v2302 = vld [vmem:[%s2266 + $0x21] sm:$0xff]
        %v2303 = vld [vmem:[%s2266 + $0x31] sm:$0xff]
        %v2304 = vld [vmem:[%s2266 + $0x39] sm:$0xff]
        %v2305 = vld [vmem:[%s2266 + $0x49] sm:$0xff]
        %v2306 = vld [vmem:[%s2266 + $0x51] sm:$0xff]
        %v2307 = vld [vmem:[%s2266 + $0x61] sm:$0xff]
        %v2308 = vld [vmem:[%s2266 + $0x69] sm:$0xff]
        %v2309 = vld [vmem:[%s2266 + $0x79] sm:$0xff]
        %v2310 = vld [vmem:[%s2266 + $0x81] sm:$0xff]
        %v2311 = vld [vmem:[%s2266 + $0x91] sm:$0xff]
        %v2312 = vld [vmem:[%s2266 + $0x99] sm:$0xff]
        %v2313 = vld [vmem:[%s2266 + $0xa9] sm:$0xff]
        %v2314 = vld [vmem:[%s2266 + $0xb1] sm:$0xff]
        %v2315 = vld [vmem:[%s2266 + $0xc1] sm:$0xff]
        %v2316 = vld [vmem:[%s2266 + $0xc9] sm:$0xff]
        %v2317 = vld [vmem:[%s2266 + $0xd9] sm:$0xff]
        %v2318 = vld [vmem:[%s2266 + $0xe1] sm:$0xff]
        %v2319 = vld [vmem:[%s2266 + $0xf1] sm:$0xff]
        %v2320 = vld [vmem:[%s2266 + $0xf9] sm:$0xff]
        %v2321 = vld [vmem:[%s2266 + $0x109] sm:$0xff]
        %v2322 = vld [vmem:[%s2266 + $0x111] sm:$0xff]
        %v2323 = vld [vmem:[%s2266 + $0x121] sm:$0xff]
        %v2324 = vld [vmem:[%s2266 + $0x129] sm:$0xff]
        %v2325 = vld [vmem:[%s2266 + $0x139] sm:$0xff]
        %v2326 = vld [vmem:[%s2266 + $0x141] sm:$0xff]
        %v2327 = vld [vmem:[%s2266 + $0x151] sm:$0xff]
        %v2328 = vld [vmem:[%s2266 + $0x159] sm:$0xff]
        %v2329 = vld [vmem:[%s2266 + $0x169] sm:$0xff]
        %v2330 = vld [vmem:[%s2266 + $0x171] sm:$0xff]
        %v2331 = vld [vmem:[%s2266 + $0x2] sm:$0xff]
        %v2332 = vld [vmem:[%s2266 + $0xa] sm:$0xff]
        %v2333 = vld [vmem:[%s2266 + $0x1a] sm:$0xff]
        %v2334 = vld [vmem:[%s2266 + $0x22] sm:$0xff]
        %v2335 = vld [vmem:[%s2266 + $0x32] sm:$0xff]
        %v2336 = vld [vmem:[%s2266 + $0x3a] sm:$0xff]
        %v2337 = vld [vmem:[%s2266 + $0x4a] sm:$0xff]
        %v2338 = vld [vmem:[%s2266 + $0x52] sm:$0xff]
        %v2339 = vld [vmem:[%s2266 + $0x62] sm:$0xff]
        %v2340 = vld [vmem:[%s2266 + $0x6a] sm:$0xff]
        %v2341 = vld [vmem:[%s2266 + $0x7a] sm:$0xff]
        %v2342 = vld [vmem:[%s2266 + $0x82] sm:$0xff]
        %v2343 = vld [vmem:[%s2266 + $0x92] sm:$0xff]
        %v2344 = vld [vmem:[%s2266 + $0x9a] sm:$0xff]
        %v2345 = vld [vmem:[%s2266 + $0xaa] sm:$0xff]
        %v2346 = vld [vmem:[%s2266 + $0xb2] sm:$0xff]
        %v2347 = vld [vmem:[%s2266 + $0xc2] sm:$0xff]
        %v2348 = vld [vmem:[%s2266 + $0xca] sm:$0xff]
        %v2349 = vld [vmem:[%s2266 + $0xda] sm:$0xff]
        %v2350 = vld [vmem:[%s2266 + $0xe2] sm:$0xff]
        %v2351 = vld [vmem:[%s2266 + $0xf2] sm:$0xff]
        %v2352 = vld [vmem:[%s2266 + $0xfa] sm:$0xff]
        %v2353 = vld [vmem:[%s2266 + $0x10a] sm:$0xff]
        %v2354 = vld [vmem:[%s2266 + $0x112] sm:$0xff]
        %v2355 = vld [vmem:[%s2266 + $0x122] sm:$0xff]
        %v2356 = vld [vmem:[%s2266 + $0x12a] sm:$0xff]
        %v2357 = vld [vmem:[%s2266 + $0x13a] sm:$0xff]
        %v2358 = vld [vmem:[%s2266 + $0x142] sm:$0xff]
        %v2359 = vld [vmem:[%s2266 + $0x152] sm:$0xff]
        %v2360 = vld [vmem:[%s2266 + $0x15a] sm:$0xff]
        %v2361 = vld [vmem:[%s2266 + $0x16a] sm:$0xff]
        %v2362 = vld [vmem:[%s2266 + $0x172] sm:$0xff]
        %2395 = vrot.lane.b32.xlu0 %v2105, 32
        %v2396 = vpop.permute.xlu0 %2395
        %2397 = vrot.lane.b32.xlu0 %v2106, 32
        %v2398 = vpop.permute.xlu0 %2397
        %2399 = vrot.lane.b32.xlu0 %v2107, 32
        %v2400 = vpop.permute.xlu0 %2399
        %2401 = vrot.lane.b32.xlu0 %v2108, 32
        %v2402 = vpop.permute.xlu0 %2401
        %2403 = vrot.lane.b32.xlu0 %v2109, 32
        %v2404 = vpop.permute.xlu0 %2403
        %2405 = vrot.lane.b32.xlu0 %v2110, 32
        %v2406 = vpop.permute.xlu0 %2405
        %2407 = vrot.lane.b32.xlu0 %v2111, 32
        %v2408 = vpop.permute.xlu0 %2407
        %2409 = vrot.lane.b32.xlu0 %v2112, 32
        %v2410 = vpop.permute.xlu0 %2409
        %2411 = vrot.lane.b32.xlu0 %v2113, 32
        %v2412 = vpop.permute.xlu0 %2411
        %2413 = vrot.lane.b32.xlu0 %v2114, 32
        %v2414 = vpop.permute.xlu0 %2413
        %2415 = vrot.lane.b32.xlu0 %v2115, 32
        %v2416 = vpop.permute.xlu0 %2415
        %2417 = vrot.lane.b32.xlu0 %v2116, 32
        %v2418 = vpop.permute.xlu0 %2417
        %2419 = vrot.lane.b32.xlu0 %v2117, 32
        %v2420 = vpop.permute.xlu0 %2419
        %2421 = vrot.lane.b32.xlu0 %v2118, 32
        %v2422 = vpop.permute.xlu0 %2421
        %2423 = vrot.lane.b32.xlu0 %v2119, 32
        %v2424 = vpop.permute.xlu0 %2423
        %2425 = vrot.lane.b32.xlu0 %v2120, 32
        %v2426 = vpop.permute.xlu0 %2425
        %2427 = vrot.lane.b32.xlu0 %v2121, 32
        %v2428 = vpop.permute.xlu0 %2427
        %2429 = vrot.lane.b32.xlu0 %v2122, 32
        %v2430 = vpop.permute.xlu0 %2429
        %2431 = vrot.lane.b32.xlu0 %v2123, 32
        %v2432 = vpop.permute.xlu0 %2431
        %2433 = vrot.lane.b32.xlu0 %v2124, 32
        %v2434 = vpop.permute.xlu0 %2433
        %2435 = vrot.lane.b32.xlu0 %v2125, 32
        %v2436 = vpop.permute.xlu0 %2435
        %2437 = vrot.lane.b32.xlu0 %v2126, 32
        %v2438 = vpop.permute.xlu0 %2437
        %2439 = vrot.lane.b32.xlu0 %v2127, 32
        %v2440 = vpop.permute.xlu0 %2439
        %2441 = vrot.lane.b32.xlu0 %v2128, 32
        %v2442 = vpop.permute.xlu0 %2441
        %2443 = vrot.lane.b32.xlu0 %v2129, 32
        %v2444 = vpop.permute.xlu0 %2443
        %2445 = vrot.lane.b32.xlu0 %v2130, 32
        %v2446 = vpop.permute.xlu0 %2445
        %2447 = vrot.lane.b32.xlu0 %v2131, 32
        %v2448 = vpop.permute.xlu0 %2447
        %2449 = vrot.lane.b32.xlu0 %v2132, 32
        %v2450 = vpop.permute.xlu0 %2449
        %2451 = vrot.lane.b32.xlu0 %v2133, 32
        %v2452 = vpop.permute.xlu0 %2451
        %2453 = vrot.lane.b32.xlu0 %v2134, 32
        %v2454 = vpop.permute.xlu0 %2453
        %2455 = vrot.lane.b32.xlu0 %v2135, 32
        %v2456 = vpop.permute.xlu0 %2455
        %2457 = vrot.lane.b32.xlu0 %v2136, 32
        %v2458 = vpop.permute.xlu0 %2457
        %2523 = vrot.lane.b32.xlu0 %v2137, 64
        %v2524 = vpop.permute.xlu0 %2523
        %2525 = vrot.lane.b32.xlu0 %v2138, 64
        %v2526 = vpop.permute.xlu0 %2525
        %2527 = vrot.lane.b32.xlu0 %v2139, 64
        %v2528 = vpop.permute.xlu0 %2527
        %2529 = vrot.lane.b32.xlu0 %v2140, 64
        %v2530 = vpop.permute.xlu0 %2529
        %2531 = vrot.lane.b32.xlu0 %v2141, 64
        %v2532 = vpop.permute.xlu0 %2531
        %2533 = vrot.lane.b32.xlu0 %v2142, 64
        %v2534 = vpop.permute.xlu0 %2533
        %2535 = vrot.lane.b32.xlu0 %v2143, 64
        %v2536 = vpop.permute.xlu0 %2535
        %2537 = vrot.lane.b32.xlu0 %v2144, 64
        %v2538 = vpop.permute.xlu0 %2537
        %2539 = vrot.lane.b32.xlu0 %v2145, 64
        %v2540 = vpop.permute.xlu0 %2539
        %2541 = vrot.lane.b32.xlu0 %v2146, 64
        %v2542 = vpop.permute.xlu0 %2541
        %2543 = vrot.lane.b32.xlu0 %v2147, 64
        %v2544 = vpop.permute.xlu0 %2543
        %2545 = vrot.lane.b32.xlu0 %v2148, 64
        %v2546 = vpop.permute.xlu0 %2545
        %2547 = vrot.lane.b32.xlu0 %v2149, 64
        %v2548 = vpop.permute.xlu0 %2547
        %2549 = vrot.lane.b32.xlu0 %v2150, 64
        %v2550 = vpop.permute.xlu0 %2549
        %2551 = vrot.lane.b32.xlu0 %v2151, 64
        %v2552 = vpop.permute.xlu0 %2551
        %2553 = vrot.lane.b32.xlu0 %v2152, 64
        %v2554 = vpop.permute.xlu0 %2553
        %2555 = vrot.lane.b32.xlu0 %v2153, 64
        %v2556 = vpop.permute.xlu0 %2555
        %2557 = vrot.lane.b32.xlu0 %v2154, 64
        %v2558 = vpop.permute.xlu0 %2557
        %2559 = vrot.lane.b32.xlu0 %v2155, 64
        %v2560 = vpop.permute.xlu0 %2559
        %2561 = vrot.lane.b32.xlu0 %v2156, 64
        %v2562 = vpop.permute.xlu0 %2561
        %2563 = vrot.lane.b32.xlu0 %v2157, 64
        %v2564 = vpop.permute.xlu0 %2563
        %2565 = vrot.lane.b32.xlu0 %v2158, 64
        %v2566 = vpop.permute.xlu0 %2565
        %2567 = vrot.lane.b32.xlu0 %v2159, 64
        %v2568 = vpop.permute.xlu0 %2567
        %2569 = vrot.lane.b32.xlu0 %v2160, 64
        %v2570 = vpop.permute.xlu0 %2569
        %2571 = vrot.lane.b32.xlu0 %v2161, 64
        %v2572 = vpop.permute.xlu0 %2571
        %2573 = vrot.lane.b32.xlu0 %v2162, 64
        %v2574 = vpop.permute.xlu0 %2573
        %2575 = vrot.lane.b32.xlu0 %v2163, 64
        %v2576 = vpop.permute.xlu0 %2575
        %2577 = vrot.lane.b32.xlu0 %v2164, 64
        %v2578 = vpop.permute.xlu0 %2577
        %2579 = vrot.lane.b32.xlu0 %v2165, 64
        %v2580 = vpop.permute.xlu0 %2579
        %2581 = vrot.lane.b32.xlu0 %v2166, 64
        %v2582 = vpop.permute.xlu0 %2581
        %2583 = vrot.lane.b32.xlu0 %v2167, 64
        %v2584 = vpop.permute.xlu0 %2583
        %2585 = vrot.lane.b32.xlu0 %v2168, 64
        %v2586 = vpop.permute.xlu0 %2585
        %2651 = vrot.lane.b32.xlu0 %v2170, 96
        %v2652 = vpop.permute.xlu0 %2651
        %2653 = vrot.lane.b32.xlu0 %v2171, 96
        %v2654 = vpop.permute.xlu0 %2653
        %2655 = vrot.lane.b32.xlu0 %v2172, 96
        %v2656 = vpop.permute.xlu0 %2655
        %2657 = vrot.lane.b32.xlu0 %v2173, 96
        %v2658 = vpop.permute.xlu0 %2657
        %2659 = vrot.lane.b32.xlu0 %v2174, 96
        %v2660 = vpop.permute.xlu0 %2659
        %2661 = vrot.lane.b32.xlu0 %v2175, 96
        %v2662 = vpop.permute.xlu0 %2661
        %2663 = vrot.lane.b32.xlu0 %v2176, 96
        %v2664 = vpop.permute.xlu0 %2663
        %2665 = vrot.lane.b32.xlu0 %v2177, 96
        %v2666 = vpop.permute.xlu0 %2665
        %2667 = vrot.lane.b32.xlu0 %v2178, 96
        %v2668 = vpop.permute.xlu0 %2667
        %2669 = vrot.lane.b32.xlu0 %v2179, 96
        %v2670 = vpop.permute.xlu0 %2669
        %2671 = vrot.lane.b32.xlu0 %v2180, 96
        %v2672 = vpop.permute.xlu0 %2671
        %2673 = vrot.lane.b32.xlu0 %v2181, 96
        %v2674 = vpop.permute.xlu0 %2673
        %2675 = vrot.lane.b32.xlu0 %v2182, 96
        %v2676 = vpop.permute.xlu0 %2675
        %2677 = vrot.lane.b32.xlu0 %v2183, 96
        %v2678 = vpop.permute.xlu0 %2677
        %2679 = vrot.lane.b32.xlu0 %v2184, 96
        %v2680 = vpop.permute.xlu0 %2679
        %2681 = vrot.lane.b32.xlu0 %v2185, 96
        %v2682 = vpop.permute.xlu0 %2681
        %2683 = vrot.lane.b32.xlu0 %v2186, 96
        %v2684 = vpop.permute.xlu0 %2683
        %2685 = vrot.lane.b32.xlu0 %v2187, 96
        %v2686 = vpop.permute.xlu0 %2685
        %2687 = vrot.lane.b32.xlu0 %v2188, 96
        %v2688 = vpop.permute.xlu0 %2687
        %2689 = vrot.lane.b32.xlu0 %v2189, 96
        %v2690 = vpop.permute.xlu0 %2689
        %2691 = vrot.lane.b32.xlu0 %v2190, 96
        %v2692 = vpop.permute.xlu0 %2691
        %2693 = vrot.lane.b32.xlu0 %v2191, 96
        %v2694 = vpop.permute.xlu0 %2693
        %2695 = vrot.lane.b32.xlu0 %v2192, 96
        %v2696 = vpop.permute.xlu0 %2695
        %2697 = vrot.lane.b32.xlu0 %v2193, 96
        %v2698 = vpop.permute.xlu0 %2697
        %2699 = vrot.lane.b32.xlu0 %v2194, 96
        %v2700 = vpop.permute.xlu0 %2699
        %2701 = vrot.lane.b32.xlu0 %v2195, 96
        %v2702 = vpop.permute.xlu0 %2701
        %2703 = vrot.lane.b32.xlu0 %v2196, 96
        %v2704 = vpop.permute.xlu0 %2703
        %2705 = vrot.lane.b32.xlu0 %v2197, 96
        %v2706 = vpop.permute.xlu0 %2705
        %2707 = vrot.lane.b32.xlu0 %v2198, 96
        %v2708 = vpop.permute.xlu0 %2707
        %2709 = vrot.lane.b32.xlu0 %v2199, 96
        %v2710 = vpop.permute.xlu0 %2709
        %2711 = vrot.lane.b32.xlu0 %v2200, 96
        %v2712 = vpop.permute.xlu0 %2711
        %2713 = vrot.lane.b32.xlu0 %v2201, 96
        %v2714 = vpop.permute.xlu0 %2713
        %2779 = vrot.lane.b32.xlu0 %v2234, 32
        %v2780 = vpop.permute.xlu0 %2779
        %2781 = vrot.lane.b32.xlu0 %v2235, 32
        %v2782 = vpop.permute.xlu0 %2781
        %2783 = vrot.lane.b32.xlu0 %v2236, 32
        %v2784 = vpop.permute.xlu0 %2783
        %2785 = vrot.lane.b32.xlu0 %v2237, 32
        %v2786 = vpop.permute.xlu0 %2785
        %2787 = vrot.lane.b32.xlu0 %v2238, 32
        %v2788 = vpop.permute.xlu0 %2787
        %2789 = vrot.lane.b32.xlu0 %v2239, 32
        %v2790 = vpop.permute.xlu0 %2789
        %2791 = vrot.lane.b32.xlu0 %v2240, 32
        %v2792 = vpop.permute.xlu0 %2791
        %2793 = vrot.lane.b32.xlu0 %v2241, 32
        %v2794 = vpop.permute.xlu0 %2793
        %2795 = vrot.lane.b32.xlu0 %v2242, 32
        %v2796 = vpop.permute.xlu0 %2795
        %2797 = vrot.lane.b32.xlu0 %v2243, 32
        %v2798 = vpop.permute.xlu0 %2797
        %2799 = vrot.lane.b32.xlu0 %v2244, 32
        %v2800 = vpop.permute.xlu0 %2799
        %2801 = vrot.lane.b32.xlu0 %v2245, 32
        %v2802 = vpop.permute.xlu0 %2801
        %2803 = vrot.lane.b32.xlu0 %v2246, 32
        %v2804 = vpop.permute.xlu0 %2803
        %2805 = vrot.lane.b32.xlu0 %v2247, 32
        %v2806 = vpop.permute.xlu0 %2805
        %2807 = vrot.lane.b32.xlu0 %v2248, 32
        %v2808 = vpop.permute.xlu0 %2807
        %2809 = vrot.lane.b32.xlu0 %v2249, 32
        %v2810 = vpop.permute.xlu0 %2809
        %2811 = vrot.lane.b32.xlu0 %v2250, 32
        %v2812 = vpop.permute.xlu0 %2811
        %2813 = vrot.lane.b32.xlu0 %v2251, 32
        %v2814 = vpop.permute.xlu0 %2813
        %2815 = vrot.lane.b32.xlu0 %v2252, 32
        %v2816 = vpop.permute.xlu0 %2815
        %2817 = vrot.lane.b32.xlu0 %v2253, 32
        %v2818 = vpop.permute.xlu0 %2817
        %2819 = vrot.lane.b32.xlu0 %v2254, 32
        %v2820 = vpop.permute.xlu0 %2819
        %2821 = vrot.lane.b32.xlu0 %v2255, 32
        %v2822 = vpop.permute.xlu0 %2821
        %2823 = vrot.lane.b32.xlu0 %v2256, 32
        %v2824 = vpop.permute.xlu0 %2823
        %2825 = vrot.lane.b32.xlu0 %v2257, 32
        %v2826 = vpop.permute.xlu0 %2825
        %2827 = vrot.lane.b32.xlu0 %v2258, 32
        %v2828 = vpop.permute.xlu0 %2827
        %2829 = vrot.lane.b32.xlu0 %v2259, 32
        %v2830 = vpop.permute.xlu0 %2829
        %2831 = vrot.lane.b32.xlu0 %v2260, 32
        %v2832 = vpop.permute.xlu0 %2831
        %2833 = vrot.lane.b32.xlu0 %v2261, 32
        %v2834 = vpop.permute.xlu0 %2833
        %2835 = vrot.lane.b32.xlu0 %v2262, 32
        %v2836 = vpop.permute.xlu0 %2835
        %2837 = vrot.lane.b32.xlu0 %v2263, 32
        %v2838 = vpop.permute.xlu0 %2837
        %2839 = vrot.lane.b32.xlu0 %v2264, 32
        %v2840 = vpop.permute.xlu0 %2839
        %2841 = vrot.lane.b32.xlu0 %v2265, 32
        %v2842 = vpop.permute.xlu0 %2841
        %2907 = vrot.lane.b32.xlu0 %v2267, 64
        %v2908 = vpop.permute.xlu0 %2907
        %2909 = vrot.lane.b32.xlu0 %v2268, 64
        %v2910 = vpop.permute.xlu0 %2909
        %2911 = vrot.lane.b32.xlu0 %v2269, 64
        %v2912 = vpop.permute.xlu0 %2911
        %2913 = vrot.lane.b32.xlu0 %v2270, 64
        %v2914 = vpop.permute.xlu0 %2913
        %2915 = vrot.lane.b32.xlu0 %v2271, 64
        %v2916 = vpop.permute.xlu0 %2915
        %2917 = vrot.lane.b32.xlu0 %v2272, 64
        %v2918 = vpop.permute.xlu0 %2917
        %2919 = vrot.lane.b32.xlu0 %v2273, 64
        %v2920 = vpop.permute.xlu0 %2919
        %2921 = vrot.lane.b32.xlu0 %v2274, 64
        %v2922 = vpop.permute.xlu0 %2921
        %2923 = vrot.lane.b32.xlu0 %v2275, 64
        %v2924 = vpop.permute.xlu0 %2923
        %2925 = vrot.lane.b32.xlu0 %v2276, 64
        %v2926 = vpop.permute.xlu0 %2925
        %2927 = vrot.lane.b32.xlu0 %v2277, 64
        %v2928 = vpop.permute.xlu0 %2927
        %2929 = vrot.lane.b32.xlu0 %v2278, 64
        %v2930 = vpop.permute.xlu0 %2929
        %2931 = vrot.lane.b32.xlu0 %v2279, 64
        %v2932 = vpop.permute.xlu0 %2931
        %2933 = vrot.lane.b32.xlu0 %v2280, 64
        %v2934 = vpop.permute.xlu0 %2933
        %2935 = vrot.lane.b32.xlu0 %v2281, 64
        %v2936 = vpop.permute.xlu0 %2935
        %2937 = vrot.lane.b32.xlu0 %v2282, 64
        %v2938 = vpop.permute.xlu0 %2937
        %2939 = vrot.lane.b32.xlu0 %v2283, 64
        %v2940 = vpop.permute.xlu0 %2939
        %2941 = vrot.lane.b32.xlu0 %v2284, 64
        %v2942 = vpop.permute.xlu0 %2941
        %2943 = vrot.lane.b32.xlu0 %v2285, 64
        %v2944 = vpop.permute.xlu0 %2943
        %2945 = vrot.lane.b32.xlu0 %v2286, 64
        %v2946 = vpop.permute.xlu0 %2945
        %2947 = vrot.lane.b32.xlu0 %v2287, 64
        %v2948 = vpop.permute.xlu0 %2947
        %2949 = vrot.lane.b32.xlu0 %v2288, 64
        %v2950 = vpop.permute.xlu0 %2949
        %2951 = vrot.lane.b32.xlu0 %v2289, 64
        %v2952 = vpop.permute.xlu0 %2951
        %2953 = vrot.lane.b32.xlu0 %v2290, 64
        %v2954 = vpop.permute.xlu0 %2953
        %2955 = vrot.lane.b32.xlu0 %v2291, 64
        %v2956 = vpop.permute.xlu0 %2955
        %2957 = vrot.lane.b32.xlu0 %v2292, 64
        %v2958 = vpop.permute.xlu0 %2957
        %2959 = vrot.lane.b32.xlu0 %v2293, 64
        %v2960 = vpop.permute.xlu0 %2959
        %2961 = vrot.lane.b32.xlu0 %v2294, 64
        %v2962 = vpop.permute.xlu0 %2961
        %2963 = vrot.lane.b32.xlu0 %v2295, 64
        %v2964 = vpop.permute.xlu0 %2963
        %2965 = vrot.lane.b32.xlu0 %v2296, 64
        %v2966 = vpop.permute.xlu0 %2965
        %2967 = vrot.lane.b32.xlu0 %v2297, 64
        %v2968 = vpop.permute.xlu0 %2967
        %2969 = vrot.lane.b32.xlu0 %v2298, 64
        %v2970 = vpop.permute.xlu0 %2969
        %3035 = vrot.lane.b32.xlu0 %v2299, 96
        %v3036 = vpop.permute.xlu0 %3035
        %3037 = vrot.lane.b32.xlu0 %v2300, 96
        %v3038 = vpop.permute.xlu0 %3037
        %3039 = vrot.lane.b32.xlu0 %v2301, 96
        %v3040 = vpop.permute.xlu0 %3039
        %3041 = vrot.lane.b32.xlu0 %v2302, 96
        %v3042 = vpop.permute.xlu0 %3041
        %3043 = vrot.lane.b32.xlu0 %v2303, 96
        %v3044 = vpop.permute.xlu0 %3043
        %3045 = vrot.lane.b32.xlu0 %v2304, 96
        %v3046 = vpop.permute.xlu0 %3045
        %3047 = vrot.lane.b32.xlu0 %v2305, 96
        %v3048 = vpop.permute.xlu0 %3047
        %3049 = vrot.lane.b32.xlu0 %v2306, 96
        %v3050 = vpop.permute.xlu0 %3049
        %3051 = vrot.lane.b32.xlu0 %v2307, 96
        %v3052 = vpop.permute.xlu0 %3051
        %3053 = vrot.lane.b32.xlu0 %v2308, 96
        %v3054 = vpop.permute.xlu0 %3053
        %3055 = vrot.lane.b32.xlu0 %v2309, 96
        %v3056 = vpop.permute.xlu0 %3055
        %3057 = vrot.lane.b32.xlu0 %v2310, 96
        %v3058 = vpop.permute.xlu0 %3057
        %3059 = vrot.lane.b32.xlu0 %v2311, 96
        %v3060 = vpop.permute.xlu0 %3059
        %3061 = vrot.lane.b32.xlu0 %v2312, 96
        %v3062 = vpop.permute.xlu0 %3061
        %3063 = vrot.lane.b32.xlu0 %v2313, 96
        %v3064 = vpop.permute.xlu0 %3063
        %3065 = vrot.lane.b32.xlu0 %v2314, 96
        %v3066 = vpop.permute.xlu0 %3065
        %3067 = vrot.lane.b32.xlu0 %v2315, 96
        %v3068 = vpop.permute.xlu0 %3067
        %3069 = vrot.lane.b32.xlu0 %v2316, 96
        %v3070 = vpop.permute.xlu0 %3069
        %3071 = vrot.lane.b32.xlu0 %v2317, 96
        %v3072 = vpop.permute.xlu0 %3071
        %3073 = vrot.lane.b32.xlu0 %v2318, 96
        %v3074 = vpop.permute.xlu0 %3073
        %3075 = vrot.lane.b32.xlu0 %v2319, 96
        %v3076 = vpop.permute.xlu0 %3075
        %3077 = vrot.lane.b32.xlu0 %v2320, 96
        %v3078 = vpop.permute.xlu0 %3077
        %3079 = vrot.lane.b32.xlu0 %v2321, 96
        %v3080 = vpop.permute.xlu0 %3079
        %3081 = vrot.lane.b32.xlu0 %v2322, 96
        %v3082 = vpop.permute.xlu0 %3081
        %3083 = vrot.lane.b32.xlu0 %v2323, 96
        %v3084 = vpop.permute.xlu0 %3083
        %3085 = vrot.lane.b32.xlu0 %v2324, 96
        %v3086 = vpop.permute.xlu0 %3085
        %3087 = vrot.lane.b32.xlu0 %v2325, 96
        %v3088 = vpop.permute.xlu0 %3087
        %3089 = vrot.lane.b32.xlu0 %v2326, 96
        %v3090 = vpop.permute.xlu0 %3089
        %3091 = vrot.lane.b32.xlu0 %v2327, 96
        %v3092 = vpop.permute.xlu0 %3091
        %3093 = vrot.lane.b32.xlu0 %v2328, 96
        %v3094 = vpop.permute.xlu0 %3093
        %3095 = vrot.lane.b32.xlu0 %v2329, 96
        %v3096 = vpop.permute.xlu0 %3095
        %3097 = vrot.lane.b32.xlu0 %v2330, 96
        %v3098 = vpop.permute.xlu0 %3097
        %v3131 = vsel %vm2024, %v2073, %v2396
        %v3132 = vsel %vm2024, %v2074, %v2398
        %v3133 = vsel %vm2024, %v2075, %v2400
        %v3134 = vsel %vm2024, %v2076, %v2402
        %v3135 = vsel %vm2024, %v2077, %v2404
        %v3136 = vsel %vm2024, %v2078, %v2406
        %v3137 = vsel %vm2024, %v2079, %v2408
        %v3138 = vsel %vm2024, %v2080, %v2410
        %v3139 = vsel %vm2024, %v2081, %v2412
        %v3140 = vsel %vm2024, %v2082, %v2414
        %v3141 = vsel %vm2024, %v2083, %v2416
        %v3142 = vsel %vm2024, %v2084, %v2418
        %v3143 = vsel %vm2024, %v2085, %v2420
        %v3144 = vsel %vm2024, %v2086, %v2422
        %v3145 = vsel %vm2024, %v2087, %v2424
        %v3146 = vsel %vm2024, %v2088, %v2426
        %v3147 = vsel %vm2024, %v2089, %v2428
        %v3148 = vsel %vm2024, %v2090, %v2430
        %v3149 = vsel %vm2024, %v2091, %v2432
        %v3150 = vsel %vm2024, %v2092, %v2434
        %v3151 = vsel %vm2024, %v2093, %v2436
        %v3152 = vsel %vm2024, %v2094, %v2438
        %v3153 = vsel %vm2024, %v2095, %v2440
        %v3154 = vsel %vm2024, %v2096, %v2442
        %v3155 = vsel %vm2024, %v2097, %v2444
        %v3156 = vsel %vm2024, %v2098, %v2446
        %v3157 = vsel %vm2024, %v2099, %v2448
        %v3158 = vsel %vm2024, %v2100, %v2450
        %v3159 = vsel %vm2024, %v2101, %v2452
        %v3160 = vsel %vm2024, %v2102, %v2454
        %v3161 = vsel %vm2024, %v2103, %v2456
        %v3162 = vsel %vm2024, %v2104, %v2458
        %vm3163 = vcmask 523264
        %v3164 = vsel %vm3163, %v3131, %v2524
        %v3165 = vsel %vm3163, %v3132, %v2526
        %v3166 = vsel %vm3163, %v3133, %v2528
        %v3167 = vsel %vm3163, %v3134, %v2530
        %v3168 = vsel %vm3163, %v3135, %v2532
        %v3169 = vsel %vm3163, %v3136, %v2534
        %v3170 = vsel %vm3163, %v3137, %v2536
        %v3171 = vsel %vm3163, %v3138, %v2538
        %v3172 = vsel %vm3163, %v3139, %v2540
        %v3173 = vsel %vm3163, %v3140, %v2542
        %v3174 = vsel %vm3163, %v3141, %v2544
        %v3175 = vsel %vm3163, %v3142, %v2546
        %v3176 = vsel %vm3163, %v3143, %v2548
        %v3177 = vsel %vm3163, %v3144, %v2550
        %v3178 = vsel %vm3163, %v3145, %v2552
        %v3179 = vsel %vm3163, %v3146, %v2554
        %v3180 = vsel %vm3163, %v3147, %v2556
        %v3181 = vsel %vm3163, %v3148, %v2558
        %v3182 = vsel %vm3163, %v3149, %v2560
        %v3183 = vsel %vm3163, %v3150, %v2562
        %v3184 = vsel %vm3163, %v3151, %v2564
        %v3185 = vsel %vm3163, %v3152, %v2566
        %v3186 = vsel %vm3163, %v3153, %v2568
        %v3187 = vsel %vm3163, %v3154, %v2570
        %v3188 = vsel %vm3163, %v3155, %v2572
        %v3189 = vsel %vm3163, %v3156, %v2574
        %v3190 = vsel %vm3163, %v3157, %v2576
        %v3191 = vsel %vm3163, %v3158, %v2578
        %v3192 = vsel %vm3163, %v3159, %v2580
        %v3193 = vsel %vm3163, %v3160, %v2582
        %v3194 = vsel %vm3163, %v3161, %v2584
        %v3195 = vsel %vm3163, %v3162, %v2586
        %vm3196 = vcmask 785408
        %v3197 = vsel %vm3196, %v3164, %v2652
        %v3198 = vsel %vm3196, %v3165, %v2654
        %v3199 = vsel %vm3196, %v3166, %v2656
        %v3200 = vsel %vm3196, %v3167, %v2658
        %v3201 = vsel %vm3196, %v3168, %v2660
        %v3202 = vsel %vm3196, %v3169, %v2662
        %v3203 = vsel %vm3196, %v3170, %v2664
        %v3204 = vsel %vm3196, %v3171, %v2666
        %v3205 = vsel %vm3196, %v3172, %v2668
        %v3206 = vsel %vm3196, %v3173, %v2670
        %v3207 = vsel %vm3196, %v3174, %v2672
        %v3208 = vsel %vm3196, %v3175, %v2674
        %v3209 = vsel %vm3196, %v3176, %v2676
        %v3210 = vsel %vm3196, %v3177, %v2678
        %v3211 = vsel %vm3196, %v3178, %v2680
        %v3212 = vsel %vm3196, %v3179, %v2682
        %v3213 = vsel %vm3196, %v3180, %v2684
        %v3214 = vsel %vm3196, %v3181, %v2686
        %v3215 = vsel %vm3196, %v3182, %v2688
        %v3216 = vsel %vm3196, %v3183, %v2690
        %v3217 = vsel %vm3196, %v3184, %v2692
        %v3218 = vsel %vm3196, %v3185, %v2694
        %v3219 = vsel %vm3196, %v3186, %v2696
        %v3220 = vsel %vm3196, %v3187, %v2698
        %v3221 = vsel %vm3196, %v3188, %v2700
        %v3222 = vsel %vm3196, %v3189, %v2702
        %v3223 = vsel %vm3196, %v3190, %v2704
        %v3224 = vsel %vm3196, %v3191, %v2706
        %v3225 = vsel %vm3196, %v3192, %v2708
        %v3226 = vsel %vm3196, %v3193, %v2710
        %v3227 = vsel %vm3196, %v3194, %v2712
        %v3228 = vsel %vm3196, %v3195, %v2714
        %v3229 = vsel %vm2024, %v2202, %v2780
        %v3230 = vsel %vm2024, %v2203, %v2782
        %v3231 = vsel %vm2024, %v2204, %v2784
        %v3232 = vsel %vm2024, %v2205, %v2786
        %v3233 = vsel %vm2024, %v2206, %v2788
        %v3234 = vsel %vm2024, %v2207, %v2790
        %v3235 = vsel %vm2024, %v2208, %v2792
        %v3236 = vsel %vm2024, %v2209, %v2794
        %v3237 = vsel %vm2024, %v2210, %v2796
        %v3238 = vsel %vm2024, %v2211, %v2798
        %v3239 = vsel %vm2024, %v2212, %v2800
        %v3240 = vsel %vm2024, %v2213, %v2802
        %v3241 = vsel %vm2024, %v2214, %v2804
        %v3242 = vsel %vm2024, %v2215, %v2806
        %v3243 = vsel %vm2024, %v2216, %v2808
        %v3244 = vsel %vm2024, %v2217, %v2810
        %v3245 = vsel %vm2024, %v2218, %v2812
        %v3246 = vsel %vm2024, %v2219, %v2814
        %v3247 = vsel %vm2024, %v2220, %v2816
        %v3248 = vsel %vm2024, %v2221, %v2818
        %v3249 = vsel %vm2024, %v2222, %v2820
        %v3250 = vsel %vm2024, %v2223, %v2822
        %v3251 = vsel %vm2024, %v2224, %v2824
        %v3252 = vsel %vm2024, %v2225, %v2826
        %v3253 = vsel %vm2024, %v2226, %v2828
        %v3254 = vsel %vm2024, %v2227, %v2830
        %v3255 = vsel %vm2024, %v2228, %v2832
        %v3256 = vsel %vm2024, %v2229, %v2834
        %v3257 = vsel %vm2024, %v2230, %v2836
        %v3258 = vsel %vm2024, %v2231, %v2838
        %v3259 = vsel %vm2024, %v2232, %v2840
        %v3260 = vsel %vm2024, %v2233, %v2842
        %v3261 = vsel %vm3163, %v3229, %v2908
        %v3262 = vsel %vm3163, %v3230, %v2910
        %v3263 = vsel %vm3163, %v3231, %v2912
        %v3264 = vsel %vm3163, %v3232, %v2914
        %v3265 = vsel %vm3163, %v3233, %v2916
        %v3266 = vsel %vm3163, %v3234, %v2918
        %v3267 = vsel %vm3163, %v3235, %v2920
        %v3268 = vsel %vm3163, %v3236, %v2922
        %v3269 = vsel %vm3163, %v3237, %v2924
        %v3270 = vsel %vm3163, %v3238, %v2926
        %v3271 = vsel %vm3163, %v3239, %v2928
        %v3272 = vsel %vm3163, %v3240, %v2930
        %v3273 = vsel %vm3163, %v3241, %v2932
        %v3274 = vsel %vm3163, %v3242, %v2934
        %v3275 = vsel %vm3163, %v3243, %v2936
        %v3276 = vsel %vm3163, %v3244, %v2938
        %v3277 = vsel %vm3163, %v3245, %v2940
        %v3278 = vsel %vm3163, %v3246, %v2942
        %v3279 = vsel %vm3163, %v3247, %v2944
        %v3280 = vsel %vm3163, %v3248, %v2946
        %v3281 = vsel %vm3163, %v3249, %v2948
        %v3282 = vsel %vm3163, %v3250, %v2950
        %v3283 = vsel %vm3163, %v3251, %v2952
        %v3284 = vsel %vm3163, %v3252, %v2954
        %v3285 = vsel %vm3163, %v3253, %v2956
        %v3286 = vsel %vm3163, %v3254, %v2958
        %v3287 = vsel %vm3163, %v3255, %v2960
        %v3288 = vsel %vm3163, %v3256, %v2962
        %v3289 = vsel %vm3163, %v3257, %v2964
        %v3290 = vsel %vm3163, %v3258, %v2966
        %v3291 = vsel %vm3163, %v3259, %v2968
        %v3292 = vsel %vm3163, %v3260, %v2970
        %v3293 = vsel %vm3196, %v3261, %v3036
        %v3294 = vsel %vm3196, %v3262, %v3038
        %v3295 = vsel %vm3196, %v3263, %v3040
        %v3296 = vsel %vm3196, %v3264, %v3042
        %v3297 = vsel %vm3196, %v3265, %v3044
        %v3298 = vsel %vm3196, %v3266, %v3046
        %v3299 = vsel %vm3196, %v3267, %v3048
        %v3300 = vsel %vm3196, %v3268, %v3050
        %v3301 = vsel %vm3196, %v3269, %v3052
        %v3302 = vsel %vm3196, %v3270, %v3054
        %v3303 = vsel %vm3196, %v3271, %v3056
        %v3304 = vsel %vm3196, %v3272, %v3058
        %v3305 = vsel %vm3196, %v3273, %v3060
        %v3306 = vsel %vm3196, %v3274, %v3062
        %v3307 = vsel %vm3196, %v3275, %v3064
        %v3308 = vsel %vm3196, %v3276, %v3066
        %v3309 = vsel %vm3196, %v3277, %v3068
        %v3310 = vsel %vm3196, %v3278, %v3070
        %v3311 = vsel %vm3196, %v3279, %v3072
        %v3312 = vsel %vm3196, %v3280, %v3074
        %v3313 = vsel %vm3196, %v3281, %v3076
        %v3314 = vsel %vm3196, %v3282, %v3078
        %v3315 = vsel %vm3196, %v3283, %v3080
        %v3316 = vsel %vm3196, %v3284, %v3082
        %v3317 = vsel %vm3196, %v3285, %v3084
        %v3318 = vsel %vm3196, %v3286, %v3086
        %v3319 = vsel %vm3196, %v3287, %v3088
        %v3320 = vsel %vm3196, %v3288, %v3090
        %v3321 = vsel %vm3196, %v3289, %v3092
        %v3322 = vsel %vm3196, %v3290, %v3094
        %v3323 = vsel %vm3196, %v3291, %v3096
        %v3324 = vsel %vm3196, %v3292, %v3098
        %v3325 = vpack.c.bf16 %v3198, %v3197
        %v3326 = vpack.c.bf16 %v3294, %v3293
        %v3327 = vpack.c.bf16 %v2332, %v2331
        %v3328 = vpack.c.bf16 %v3200, %v3199
        %v3329 = vpack.c.bf16 %v3296, %v3295
        %v3330 = vpack.c.bf16 %v2334, %v2333
        %v3331 = vpack.c.bf16 %v3202, %v3201
        %v3332 = vpack.c.bf16 %v3298, %v3297
        %v3333 = vpack.c.bf16 %v2336, %v2335
        %v3334 = vpack.c.bf16 %v3204, %v3203
        %v3335 = vpack.c.bf16 %v3300, %v3299
        %v3336 = vpack.c.bf16 %v2338, %v2337
        %v3337 = vpack.c.bf16 %v3206, %v3205
        %v3338 = vpack.c.bf16 %v3302, %v3301
        %v3339 = vpack.c.bf16 %v2340, %v2339
        %v3340 = vpack.c.bf16 %v3208, %v3207
        %v3341 = vpack.c.bf16 %v3304, %v3303
        %v3342 = vpack.c.bf16 %v2342, %v2341
        %v3343 = vpack.c.bf16 %v3210, %v3209
        %v3344 = vpack.c.bf16 %v3306, %v3305
        %v3345 = vpack.c.bf16 %v2344, %v2343
        %v3346 = vpack.c.bf16 %v3212, %v3211
        %v3347 = vpack.c.bf16 %v3308, %v3307
        %v3348 = vpack.c.bf16 %v2346, %v2345
        %v3349 = vpack.c.bf16 %v3214, %v3213
        %v3350 = vpack.c.bf16 %v3310, %v3309
        %v3351 = vpack.c.bf16 %v2348, %v2347
        %v3352 = vpack.c.bf16 %v3216, %v3215
        %v3353 = vpack.c.bf16 %v3312, %v3311
        %v3354 = vpack.c.bf16 %v2350, %v2349
        %v3355 = vpack.c.bf16 %v3218, %v3217
        %v3356 = vpack.c.bf16 %v3314, %v3313
        %v3357 = vpack.c.bf16 %v2352, %v2351
        %v3358 = vpack.c.bf16 %v3220, %v3219
        %v3359 = vpack.c.bf16 %v3316, %v3315
        %v3360 = vpack.c.bf16 %v2354, %v2353
        %v3361 = vpack.c.bf16 %v3222, %v3221
        %v3362 = vpack.c.bf16 %v3318, %v3317
        %v3363 = vpack.c.bf16 %v2356, %v2355
        %v3364 = vpack.c.bf16 %v3224, %v3223
        %v3365 = vpack.c.bf16 %v3320, %v3319
        %v3366 = vpack.c.bf16 %v2358, %v2357
        %v3367 = vpack.c.bf16 %v3226, %v3225
        %v3368 = vpack.c.bf16 %v3322, %v3321
        %v3369 = vpack.c.bf16 %v2360, %v2359
        %v3370 = vpack.c.bf16 %v3228, %v3227
        %v3371 = vpack.c.bf16 %v3324, %v3323
        %v3372 = vpack.c.bf16 %v2362, %v2361
        %v3373 = vld [vmem:[%s1] sm:$0xf]
        %v3374 = vld [vmem:[%s1 + $0x4] sm:$0xf]
        %v3375 = vld [vmem:[%s1 + $0x8] sm:$0xf]
        %v3376 = vld [vmem:[%s1 + $0xc] sm:$0xf]
        %v3377 = vld [vmem:[%s1 + $0x10] sm:$0x3]
        %v3378 = vld [vmem:[%s2] sm:$0xf]
        %v3379 = vld [vmem:[%s2 + $0x4] sm:$0xf]
        %v3380 = vld [vmem:[%s2 + $0x8] sm:$0xf]
        %v3381 = vld [vmem:[%s2 + $0xc] sm:$0xf]
        %v3382 = vld [vmem:[%s2 + $0x10] sm:$0xf]
        %v3383 = vld [vmem:[%s2 + $0x14] sm:$0xf]
        %v3384 = vld [vmem:[%s2 + $0x18] sm:$0xf]
        %v3385 = vld [vmem:[%s2 + $0x1c] sm:$0xf]
        %v3386 = vld [vmem:[%s2 + $0x20] sm:$0xf]
        %v3387 = vld [vmem:[%s2 + $0x24] sm:$0xf]
        %v3388 = vld [vmem:[%s2 + $0x28] sm:$0xf]
        %v3389 = vld [vmem:[%s2 + $0x2c] sm:$0xf]
        %v3390 = vld [vmem:[%s2 + $0x30] sm:$0xf]
        %v3391 = vld [vmem:[%s2 + $0x34] sm:$0xf]
        %v3392 = vld [vmem:[%s2 + $0x38] sm:$0xf]
        %v3393 = vld [vmem:[%s2 + $0x3c] sm:$0xf]
        %v3394 = vld [vmem:[%s2 + $0x40] sm:$0xf]
        %v3395 = vld [vmem:[%s2 + $0x44] sm:$0xf]
        %v3396 = vld [vmem:[%s2 + $0x48] sm:$0xf]
        %v3397 = vld [vmem:[%s2 + $0x4c] sm:$0xf]
        %v3398 = vld [vmem:[%s2 + $0x50] sm:$0xf]
        %v3399 = vld [vmem:[%s2 + $0x54] sm:$0xf]
        %v3400 = vld [vmem:[%s2 + $0x58] sm:$0xf]
        %v3401 = vld [vmem:[%s2 + $0x5c] sm:$0xf]
        %v3402 = vld [vmem:[%s2 + $0x60] sm:$0xf]
        %v3403 = vld [vmem:[%s2 + $0x64] sm:$0xf]
        %v3404 = vld [vmem:[%s2 + $0x68] sm:$0xf]
        %v3405 = vld [vmem:[%s2 + $0x6c] sm:$0xf]
        %v3406 = vld [vmem:[%s2 + $0x70] sm:$0xf]
        %v3407 = vld [vmem:[%s2 + $0x74] sm:$0xf]
        %v3408 = vld [vmem:[%s2 + $0x78] sm:$0xf]
        %v3409 = vld [vmem:[%s2 + $0x7c] sm:$0xf]
        %v3410 = vld [vmem:[%s2 + $0x80] sm:$0xf]
        %v3411 = vld [vmem:[%s2 + $0x84] sm:$0xf]
        %v3412 = vld [vmem:[%s2 + $0x88] sm:$0xf]
        %v3413 = vld [vmem:[%s2 + $0x8c] sm:$0xf]
        %v3450 = vunpack.c.l.b16 %v3378
        %v3451 = vunpack.c.l.b16 %v3379
        %v3452 = vunpack.c.l.b16 %v3380
        %v3453 = vunpack.c.l.b16 %v3381
        %v3454 = vunpack.c.l.b16 %v3382
        %v3455 = vunpack.c.l.b16 %v3383
        %v3456 = vunpack.c.l.b16 %v3384
        %v3457 = vunpack.c.l.b16 %v3385
        %v3458 = vunpack.c.l.b16 %v3386
        %v3459 = vunpack.c.l.b16 %v3387
        %v3460 = vunpack.c.l.b16 %v3388
        %v3461 = vunpack.c.l.b16 %v3389
        %v3462 = vunpack.c.l.b16 %v3390
        %v3463 = vunpack.c.l.b16 %v3391
        %v3464 = vunpack.c.l.b16 %v3392
        %v3465 = vunpack.c.l.b16 %v3393
        %v3466 = vunpack.c.l.b16 %v3394
        %v3467 = vunpack.c.l.b16 %v3395
        %v3468 = vunpack.c.l.b16 %v3396
        %v3469 = vunpack.c.l.b16 %v3397
        %v3470 = vunpack.c.l.b16 %v3398
        %v3471 = vunpack.c.l.b16 %v3399
        %v3472 = vunpack.c.l.b16 %v3400
        %v3473 = vunpack.c.l.b16 %v3401
        %v3474 = vunpack.c.l.b16 %v3402
        %v3475 = vunpack.c.l.b16 %v3403
        %v3476 = vunpack.c.l.b16 %v3404
        %v3477 = vunpack.c.l.b16 %v3405
        %v3478 = vunpack.c.l.b16 %v3406
        %v3479 = vunpack.c.l.b16 %v3407
        %v3480 = vunpack.c.l.b16 %v3408
        %v3481 = vunpack.c.l.b16 %v3409
        %v3482 = vunpack.c.l.b16 %v3410
        %v3483 = vunpack.c.l.b16 %v3411
        %v3484 = vunpack.c.l.b16 %v3412
        %v3485 = vunpack.c.l.b16 %v3413
        %v3486 = vpack.c.b16 %v3451, %v3450
        %v3487 = vpack.c.b16 %v3453, %v3452
        %v3488 = vpack.c.b16 %v3455, %v3454
        %v3489 = vpack.c.b16 %v3457, %v3456
        %v3490 = vpack.c.b16 %v3459, %v3458
        %v3491 = vpack.c.b16 %v3461, %v3460
        %v3492 = vpack.c.b16 %v3463, %v3462
        %v3493 = vpack.c.b16 %v3465, %v3464
        %v3494 = vpack.c.b16 %v3467, %v3466
        %v3495 = vpack.c.b16 %v3469, %v3468
        %v3496 = vpack.c.b16 %v3471, %v3470
        %v3497 = vpack.c.b16 %v3473, %v3472
        %v3498 = vpack.c.b16 %v3475, %v3474
        %v3499 = vpack.c.b16 %v3477, %v3476
        %v3500 = vpack.c.b16 %v3479, %v3478
        %v3501 = vpack.c.b16 %v3481, %v3480
        %v3502 = vpack.c.b16 %v3483, %v3482
        %v3503 = vpack.c.b16 %v3485, %v3484
        %v3523 = vsel %vm2024, %v3327, 0
        %v3526 = vsel %vm2024, %v3330, 0
        %v3529 = vsel %vm2024, %v3333, 0
        %v3532 = vsel %vm2024, %v3336, 0
        %v3535 = vsel %vm2024, %v3339, 0
        %v3538 = vsel %vm2024, %v3342, 0
        %v3541 = vsel %vm2024, %v3345, 0
        %v3544 = vsel %vm2024, %v3348, 0
        %v3547 = vsel %vm2024, %v3351, 0
        %v3550 = vsel %vm2024, %v3354, 0
        %v3553 = vsel %vm2024, %v3357, 0
        %v3556 = vsel %vm2024, %v3360, 0
        %v3559 = vsel %vm2024, %v3363, 0
        %v3562 = vsel %vm2024, %v3366, 0
        %v3565 = vsel %vm2024, %v3369, 0
        %v3568 = vsel %vm2024, %v3372, 0
        %3570 = vmatprep.subr.bf16.mxu0 0
        %3571 = vmatpush1.bf16.msra.mxu0 %v3486
        %3572 = vmatprep.subr.bf16.mxu0 0
        %3573 = vmatpush1.bf16.msra.mxu0 %v3487
        %3574 = vmatprep.subr.bf16.mxu0 0
        %3575 = vmatpush1.bf16.msra.mxu0 %v3488
        %3576 = vmatprep.subr.bf16.mxu0 0
        %3577 = vmatpush1.bf16.msra.mxu0 %v3489
        %3578 = vmatprep.subr.bf16.mxu0 0
        %3579 = vmatpush1.bf16.msra.mxu0 %v3490
        %3580 = vmatprep.subr.bf16.mxu0 0
        %3581 = vmatpush1.bf16.msra.mxu0 %v3491
        %3582 = vmatprep.subr.bf16.mxu0 0
        %3583 = vmatpush1.bf16.msra.mxu0 %v3492
        %3584 = vmatprep.subr.bf16.mxu0 0
        %3585 = vmatpush1.bf16.msra.mxu0 %v3493
        %3586 = vmatprep.subr.bf16.mxu0 0
        %3587 = vmatpush1.bf16.msra.mxu0 %v3494
        %3588 = vmatprep.subr.bf16.mxu0 0
        %3589 = vmatpush1.bf16.msra.mxu0 %v3495
        %3590 = vmatprep.subr.bf16.mxu0 0
        %3591 = vmatpush1.bf16.msra.mxu0 %v3496
        %3592 = vmatprep.subr.bf16.mxu0 0
        %3593 = vmatpush1.bf16.msra.mxu0 %v3497
        %3594 = vmatprep.subr.bf16.mxu0 0
        %3595 = vmatpush1.bf16.msra.mxu0 %v3498
        %3596 = vmatprep.subr.bf16.mxu0 0
        %3597 = vmatpush1.bf16.msra.mxu0 %v3499
        %3598 = vmatprep.subr.bf16.mxu0 0
        %3599 = vmatpush1.bf16.msra.mxu0 %v3500
        %3600 = vmatprep.subr.bf16.mxu0 0
        %3601 = vmatpush1.bf16.msra.mxu0 %v3501
        %3602 = vmatprep.mubr.bf16.mxu0 %v3326
        %3603 = vmatmul.mubr.bf16.gmra.mrb[0].mxu0 %v3325
        %v3604 = vpop.f32.mrb[0].mxu0
        %v3605 = vadd.f32 0.0, %v3604
        %v3606 = vpop.f32.mrb[0].mxu0
        %v3607 = vpop.f32.mrb[0].mxu0
        %v3608 = vadd.f32 0.0, %v3607
        %v3609 = vpop.f32.mrb[0].mxu0
        %3610 = vmatprep.mubr.bf16.mxu0 %v3329
        %3611 = vmatmul.mubr.bf16.gmra.mrb[0].mxu0 %v3328
        %v3612 = vpop.f32.mrb[0].mxu0
        %v3613 = vadd.f32 0.0, %v3612
        %v3614 = vpop.f32.mrb[0].mxu0
        %v3615 = vpop.f32.mrb[0].mxu0
        %v3616 = vadd.f32 0.0, %v3615
        %v3617 = vpop.f32.mrb[0].mxu0
        %3618 = vmatprep.mubr.bf16.mxu0 %v3332
        %3619 = vmatmul.mubr.bf16.gmra.mrb[0].mxu0 %v3331
        %v3620 = vpop.f32.mrb[0].mxu0
        %v3621 = vadd.f32 0.0, %v3620
        %v3622 = vpop.f32.mrb[0].mxu0
        %v3623 = vpop.f32.mrb[0].mxu0
        %v3624 = vadd.f32 0.0, %v3623
        %v3625 = vpop.f32.mrb[0].mxu0
        %3626 = vmatprep.mubr.bf16.mxu0 %v3335
        %3627 = vmatmul.mubr.bf16.gmra.mrb[0].mxu0 %v3334
        %v3628 = vpop.f32.mrb[0].mxu0
        %v3629 = vadd.f32 0.0, %v3628
        %v3630 = vpop.f32.mrb[0].mxu0
        %v3631 = vpop.f32.mrb[0].mxu0
        %v3632 = vadd.f32 0.0, %v3631
        %v3633 = vpop.f32.mrb[0].mxu0
        %3634 = vmatprep.mubr.bf16.mxu0 %v3338
        %3635 = vmatmul.mubr.bf16.gmra.mrb[0].mxu0 %v3337
        %v3636 = vpop.f32.mrb[0].mxu0
        %v3637 = vadd.f32 0.0, %v3636
        %v3638 = vpop.f32.mrb[0].mxu0
        %v3639 = vpop.f32.mrb[0].mxu0
        %v3640 = vadd.f32 0.0, %v3639
        %v3641 = vpop.f32.mrb[0].mxu0
        %3642 = vmatprep.mubr.bf16.mxu0 %v3341
        %3643 = vmatmul.mubr.bf16.gmra.mrb[0].mxu0 %v3340
        %v3644 = vpop.f32.mrb[0].mxu0
        %v3645 = vadd.f32 0.0, %v3644
        %v3646 = vpop.f32.mrb[0].mxu0
        %v3647 = vpop.f32.mrb[0].mxu0
        %v3648 = vadd.f32 0.0, %v3647
        %v3649 = vpop.f32.mrb[0].mxu0
        %3650 = vmatprep.mubr.bf16.mxu0 %v3344
        %3651 = vmatmul.mubr.bf16.gmra.mrb[0].mxu0 %v3343
        %v3652 = vpop.f32.mrb[0].mxu0
        %v3653 = vadd.f32 0.0, %v3652
        %v3654 = vpop.f32.mrb[0].mxu0
        %v3655 = vpop.f32.mrb[0].mxu0
        %v3656 = vadd.f32 0.0, %v3655
        %v3657 = vpop.f32.mrb[0].mxu0
        %3658 = vmatprep.mubr.bf16.mxu0 %v3347
        %3659 = vmatmul.mubr.bf16.gmra.mrb[0].mxu0 %v3346
        %v3660 = vpop.f32.mrb[0].mxu0
        %v3661 = vadd.f32 0.0, %v3660
        %v3662 = vpop.f32.mrb[0].mxu0
        %v3663 = vpop.f32.mrb[0].mxu0
        %v3664 = vadd.f32 0.0, %v3663
        %v3665 = vpop.f32.mrb[0].mxu0
        %3666 = vmatprep.mubr.bf16.mxu0 %v3350
        %3667 = vmatmul.mubr.bf16.gmra.mrb[0].mxu0 %v3349
        %v3668 = vpop.f32.mrb[0].mxu0
        %v3669 = vadd.f32 0.0, %v3668
        %v3670 = vpop.f32.mrb[0].mxu0
        %v3671 = vpop.f32.mrb[0].mxu0
        %v3672 = vadd.f32 0.0, %v3671
        %v3673 = vpop.f32.mrb[0].mxu0
        %3674 = vmatprep.mubr.bf16.mxu0 %v3353
        %3675 = vmatmul.mubr.bf16.gmra.mrb[0].mxu0 %v3352
        %v3676 = vpop.f32.mrb[0].mxu0
        %v3677 = vadd.f32 0.0, %v3676
        %v3678 = vpop.f32.mrb[0].mxu0
        %v3679 = vpop.f32.mrb[0].mxu0
        %v3680 = vadd.f32 0.0, %v3679
        %v3681 = vpop.f32.mrb[0].mxu0
        %3682 = vmatprep.mubr.bf16.mxu0 %v3356
        %3683 = vmatmul.mubr.bf16.gmra.mrb[0].mxu0 %v3355
        %v3684 = vpop.f32.mrb[0].mxu0
        %v3685 = vadd.f32 0.0, %v3684
        %v3686 = vpop.f32.mrb[0].mxu0
        %v3687 = vpop.f32.mrb[0].mxu0
        %v3688 = vadd.f32 0.0, %v3687
        %v3689 = vpop.f32.mrb[0].mxu0
        %3690 = vmatprep.mubr.bf16.mxu0 %v3359
        %3691 = vmatmul.mubr.bf16.gmra.mrb[0].mxu0 %v3358
        %v3692 = vpop.f32.mrb[0].mxu0
        %v3693 = vadd.f32 0.0, %v3692
        %v3694 = vpop.f32.mrb[0].mxu0
        %v3695 = vpop.f32.mrb[0].mxu0
        %v3696 = vadd.f32 0.0, %v3695
        %v3697 = vpop.f32.mrb[0].mxu0
        %3698 = vmatprep.mubr.bf16.mxu0 %v3362
        %3699 = vmatmul.mubr.bf16.gmra.mrb[0].mxu0 %v3361
        %v3700 = vpop.f32.mrb[0].mxu0
        %v3701 = vadd.f32 0.0, %v3700
        %v3702 = vpop.f32.mrb[0].mxu0
        %v3703 = vpop.f32.mrb[0].mxu0
        %v3704 = vadd.f32 0.0, %v3703
        %v3705 = vpop.f32.mrb[0].mxu0
        %3706 = vmatprep.mubr.bf16.mxu0 %v3365
        %3707 = vmatmul.mubr.bf16.gmra.mrb[0].mxu0 %v3364
        %v3708 = vpop.f32.mrb[0].mxu0
        %v3709 = vadd.f32 0.0, %v3708
        %v3710 = vpop.f32.mrb[0].mxu0
        %v3711 = vpop.f32.mrb[0].mxu0
        %v3712 = vadd.f32 0.0, %v3711
        %v3713 = vpop.f32.mrb[0].mxu0
        %3714 = vmatprep.mubr.bf16.mxu0 %v3368
        %3715 = vmatmul.mubr.bf16.gmra.mrb[0].mxu0 %v3367
        %v3716 = vpop.f32.mrb[0].mxu0
        %v3717 = vadd.f32 0.0, %v3716
        %v3718 = vpop.f32.mrb[0].mxu0
        %v3719 = vpop.f32.mrb[0].mxu0
        %v3720 = vadd.f32 0.0, %v3719
        %v3721 = vpop.f32.mrb[0].mxu0
        %3722 = vmatprep.mubr.bf16.mxu0 %v3371
        %3723 = vmatmul.mubr.bf16.gmra.mrb[0].mxu0 %v3370
        %v3724 = vpop.f32.mrb[0].mxu0
        %v3725 = vadd.f32 0.0, %v3724
        %v3726 = vpop.f32.mrb[0].mxu0
        %v3727 = vpop.f32.mrb[0].mxu0
        %v3728 = vadd.f32 0.0, %v3727
        %v3729 = vpop.f32.mrb[0].mxu0
        %3730 = vdwg.mxu0
        %3731 = vmatprep.subr.bf16.mxu0 0
        %3732 = vmatpush1.bf16.msra.mxu0 %v3502
        %3733 = vmatprep.subr.bf16.mxu0 0
        %3734 = vmatpush1.bf16.msra.mxu0 %v3503
        %3735 = vmatprep.subr.bf16.mxu0 0
        %3736 = vmatpush1.bf16.msra.mxu0 0
        %3737 = vmatprep.subr.bf16.mxu0 0
        %3738 = vmatpush1.bf16.msra.mxu0 0
        %3739 = vmatprep.subr.bf16.mxu0 0
        %3740 = vmatpush1.bf16.msra.mxu0 0
        %3741 = vmatprep.subr.bf16.mxu0 0
        %3742 = vmatpush1.bf16.msra.mxu0 0
        %3743 = vmatprep.subr.bf16.mxu0 0
        %3744 = vmatpush1.bf16.msra.mxu0 0
        %3745 = vmatprep.subr.bf16.mxu0 0
        %3746 = vmatpush1.bf16.msra.mxu0 0
        %3747 = vmatprep.subr.bf16.mxu0 0
        %3748 = vmatpush1.bf16.msra.mxu0 0
        %3749 = vmatprep.subr.bf16.mxu0 0
        %3750 = vmatpush1.bf16.msra.mxu0 0
        %3751 = vmatprep.subr.bf16.mxu0 0
        %3752 = vmatpush1.bf16.msra.mxu0 0
        %3753 = vmatprep.subr.bf16.mxu0 0
        %3754 = vmatpush1.bf16.msra.mxu0 0
        %3755 = vmatprep.subr.bf16.mxu0 0
        %3756 = vmatpush1.bf16.msra.mxu0 0
        %3757 = vmatprep.subr.bf16.mxu0 0
        %3758 = vmatpush1.bf16.msra.mxu0 0
        %3759 = vmatprep.subr.bf16.mxu0 0
        %3760 = vmatpush1.bf16.msra.mxu0 0
        %3761 = vmatprep.subr.bf16.mxu0 0
        %3762 = vmatpush1.bf16.msra.mxu0 0
        %3763 = vmatprep.mubr.bf16.mxu0 0
        %3764 = vmatmul.mubr.bf16.gmra.mrb[0].mxu0 %v3523
        %v3765 = vpop.f32.mrb[0].mxu0
        %v3766 = vadd.f32 %v3605, %v3765
        %v3767 = vpop.f32.mrb[0].mxu0
        %v3768 = vpop.f32.mrb[0].mxu0
        %v3769 = vadd.f32 %v3608, %v3768
        %v3770 = vpop.f32.mrb[0].mxu0
        %3771 = vmatprep.mubr.bf16.mxu0 0
        %3772 = vmatmul.mubr.bf16.gmra.mrb[0].mxu0 %v3526
        %v3773 = vpop.f32.mrb[0].mxu0
        %v3774 = vadd.f32 %v3613, %v3773
        %v3775 = vpop.f32.mrb[0].mxu0
        %v3776 = vpop.f32.mrb[0].mxu0
        %v3777 = vadd.f32 %v3616, %v3776
        %v3778 = vpop.f32.mrb[0].mxu0
        %3779 = vmatprep.mubr.bf16.mxu0 0
        %3780 = vmatmul.mubr.bf16.gmra.mrb[0].mxu0 %v3529
        %v3781 = vpop.f32.mrb[0].mxu0
        %v3782 = vadd.f32 %v3621, %v3781
        %v3783 = vpop.f32.mrb[0].mxu0
        %v3784 = vpop.f32.mrb[0].mxu0
        %v3785 = vadd.f32 %v3624, %v3784
        %v3786 = vpop.f32.mrb[0].mxu0
        %3787 = vmatprep.mubr.bf16.mxu0 0
        %3788 = vmatmul.mubr.bf16.gmra.mrb[0].mxu0 %v3532
        %v3789 = vpop.f32.mrb[0].mxu0
        %v3790 = vadd.f32 %v3629, %v3789
        %v3791 = vpop.f32.mrb[0].mxu0
        %v3792 = vpop.f32.mrb[0].mxu0
        %v3793 = vadd.f32 %v3632, %v3792
        %v3794 = vpop.f32.mrb[0].mxu0
        %3795 = vmatprep.mubr.bf16.mxu0 0
        %3796 = vmatmul.mubr.bf16.gmra.mrb[0].mxu0 %v3535
        %v3797 = vpop.f32.mrb[0].mxu0
        %v3798 = vadd.f32 %v3637, %v3797
        %v3799 = vpop.f32.mrb[0].mxu0
        %v3800 = vpop.f32.mrb[0].mxu0
        %v3801 = vadd.f32 %v3640, %v3800
        %v3802 = vpop.f32.mrb[0].mxu0
        %3803 = vmatprep.mubr.bf16.mxu0 0
        %3804 = vmatmul.mubr.bf16.gmra.mrb[0].mxu0 %v3538
        %v3805 = vpop.f32.mrb[0].mxu0
        %v3806 = vadd.f32 %v3645, %v3805
        %v3807 = vpop.f32.mrb[0].mxu0
        %v3808 = vpop.f32.mrb[0].mxu0
        %v3809 = vadd.f32 %v3648, %v3808
        %v3810 = vpop.f32.mrb[0].mxu0
        %3811 = vmatprep.mubr.bf16.mxu0 0
        %3812 = vmatmul.mubr.bf16.gmra.mrb[0].mxu0 %v3541
        %v3813 = vpop.f32.mrb[0].mxu0
        %v3814 = vadd.f32 %v3653, %v3813
        %v3815 = vpop.f32.mrb[0].mxu0
        %v3816 = vpop.f32.mrb[0].mxu0
        %v3817 = vadd.f32 %v3656, %v3816
        %v3818 = vpop.f32.mrb[0].mxu0
        %3819 = vmatprep.mubr.bf16.mxu0 0
        %3820 = vmatmul.mubr.bf16.gmra.mrb[0].mxu0 %v3544
        %v3821 = vpop.f32.mrb[0].mxu0
        %v3822 = vadd.f32 %v3661, %v3821
        %v3823 = vpop.f32.mrb[0].mxu0
        %v3824 = vpop.f32.mrb[0].mxu0
        %v3825 = vadd.f32 %v3664, %v3824
        %v3826 = vpop.f32.mrb[0].mxu0
        %3827 = vmatprep.mubr.bf16.mxu0 0
        %3828 = vmatmul.mubr.bf16.gmra.mrb[0].mxu0 %v3547
        %v3829 = vpop.f32.mrb[0].mxu0
        %v3830 = vadd.f32 %v3669, %v3829
        %v3831 = vpop.f32.mrb[0].mxu0
        %v3832 = vpop.f32.mrb[0].mxu0
        %v3833 = vadd.f32 %v3672, %v3832
        %v3834 = vpop.f32.mrb[0].mxu0
        %3835 = vmatprep.mubr.bf16.mxu0 0
        %3836 = vmatmul.mubr.bf16.gmra.mrb[0].mxu0 %v3550
        %v3837 = vpop.f32.mrb[0].mxu0
        %v3838 = vadd.f32 %v3677, %v3837
        %v3839 = vpop.f32.mrb[0].mxu0
        %v3840 = vpop.f32.mrb[0].mxu0
        %v3841 = vadd.f32 %v3680, %v3840
        %v3842 = vpop.f32.mrb[0].mxu0
        %3843 = vmatprep.mubr.bf16.mxu0 0
        %3844 = vmatmul.mubr.bf16.gmra.mrb[0].mxu0 %v3553
        %v3845 = vpop.f32.mrb[0].mxu0
        %v3846 = vadd.f32 %v3685, %v3845
        %v3847 = vpop.f32.mrb[0].mxu0
        %v3848 = vpop.f32.mrb[0].mxu0
        %v3849 = vadd.f32 %v3688, %v3848
        %v3850 = vpop.f32.mrb[0].mxu0
        %3851 = vmatprep.mubr.bf16.mxu0 0
        %3852 = vmatmul.mubr.bf16.gmra.mrb[0].mxu0 %v3556
        %v3853 = vpop.f32.mrb[0].mxu0
        %v3854 = vadd.f32 %v3693, %v3853
        %v3855 = vpop.f32.mrb[0].mxu0
        %v3856 = vpop.f32.mrb[0].mxu0
        %v3857 = vadd.f32 %v3696, %v3856
        %v3858 = vpop.f32.mrb[0].mxu0
        %3859 = vmatprep.mubr.bf16.mxu0 0
        %3860 = vmatmul.mubr.bf16.gmra.mrb[0].mxu0 %v3559
        %v3861 = vpop.f32.mrb[0].mxu0
        %v3862 = vadd.f32 %v3701, %v3861
        %v3863 = vpop.f32.mrb[0].mxu0
        %v3864 = vpop.f32.mrb[0].mxu0
        %v3865 = vadd.f32 %v3704, %v3864
        %v3866 = vpop.f32.mrb[0].mxu0
        %3867 = vmatprep.mubr.bf16.mxu0 0
        %3868 = vmatmul.mubr.bf16.gmra.mrb[0].mxu0 %v3562
        %v3869 = vpop.f32.mrb[0].mxu0
        %v3870 = vadd.f32 %v3709, %v3869
        %v3871 = vpop.f32.mrb[0].mxu0
        %v3872 = vpop.f32.mrb[0].mxu0
        %v3873 = vadd.f32 %v3712, %v3872
        %v3874 = vpop.f32.mrb[0].mxu0
        %3875 = vmatprep.mubr.bf16.mxu0 0
        %3876 = vmatmul.mubr.bf16.gmra.mrb[0].mxu0 %v3565
        %v3877 = vpop.f32.mrb[0].mxu0
        %v3878 = vadd.f32 %v3717, %v3877
        %v3879 = vpop.f32.mrb[0].mxu0
        %v3880 = vpop.f32.mrb[0].mxu0
        %v3881 = vadd.f32 %v3720, %v3880
        %v3882 = vpop.f32.mrb[0].mxu0
        %3883 = vmatprep.mubr.bf16.mxu0 0
        %3884 = vmatmul.mubr.bf16.gmra.mrb[0].mxu0 %v3568
        %v3885 = vpop.f32.mrb[0].mxu0
        %v3886 = vadd.f32 %v3725, %v3885
        %v3887 = vpop.f32.mrb[0].mxu0
        %v3888 = vpop.f32.mrb[0].mxu0
        %v3889 = vadd.f32 %v3728, %v3888
        %v3890 = vpop.f32.mrb[0].mxu0
        %3891 = vdwg.mxu0
        %v3897 = vunpack.c.l.b16 %v3373
        %v3898 = vunpack.c.l.b16 %v3374
        %v3899 = vunpack.c.l.b16 %v3375
        %v3900 = vunpack.c.l.b16 %v3376
        %v3901 = vunpack.c.l.b16 %v3377
        %v3902 = vpack.c.b16 %v3898, %v3897
        %v3903 = vpack.c.b16 %v3900, %v3899
        %v3904 = vpack.c.b16 %v3901, %v3901
        %vm3907 = vcmask 293888
        %v3909 = vsel %vm3907, %v2057, 0
        %v3912 = vsel %vm3907, %v2058, 0
        %v3915 = vsel %vm3907, %v2059, 0
        %v3918 = vsel %vm3907, %v2060, 0
        %v3921 = vsel %vm3907, %v2061, 0
        %v3924 = vsel %vm3907, %v2062, 0
        %v3927 = vsel %vm3907, %v2063, 0
        %v3930 = vsel %vm3907, %v2064, 0
        %v3933 = vsel %vm3907, %v2065, 0
        %v3936 = vsel %vm3907, %v2066, 0
        %v3939 = vsel %vm3907, %v2067, 0
        %v3942 = vsel %vm3907, %v2068, 0
        %v3945 = vsel %vm3907, %v2069, 0
        %v3948 = vsel %vm3907, %v2070, 0
        %v3951 = vsel %vm3907, %v2071, 0
        %v3954 = vsel %vm3907, %v2072, 0
        %vm3956 = vcmask 1041408
        %v3958 = vsel %vm3956, %v3904, 0
        %3960 = vmatprep.subr.bf16.mxu0 0
        %3961 = vmatpush1.bf16.msra.mxu0 %v3902
        %3962 = vmatprep.subr.bf16.mxu0 0
        %3963 = vmatpush1.bf16.msra.mxu0 %v3903
        %3964 = vmatprep.subr.bf16.mxu0 0
        %3965 = vmatpush1.bf16.msra.mxu0 %v3958
        %3966 = vmatprep.subr.bf16.mxu0 0
        %3967 = vmatpush1.bf16.msra.mxu0 0
        %3968 = vmatprep.subr.bf16.mxu0 0
        %3969 = vmatpush1.bf16.msra.mxu0 0
        %3970 = vmatprep.subr.bf16.mxu0 0
        %3971 = vmatpush1.bf16.msra.mxu0 0
        %3972 = vmatprep.subr.bf16.mxu0 0
        %3973 = vmatpush1.bf16.msra.mxu0 0
        %3974 = vmatprep.subr.bf16.mxu0 0
        %3975 = vmatpush1.bf16.msra.mxu0 0
        %3976 = vmatprep.subr.bf16.mxu0 0
        %3977 = vmatpush1.bf16.msra.mxu0 0
        %3978 = vmatprep.subr.bf16.mxu0 0
        %3979 = vmatpush1.bf16.msra.mxu0 0
        %3980 = vmatprep.subr.bf16.mxu0 0
        %3981 = vmatpush1.bf16.msra.mxu0 0
        %3982 = vmatprep.subr.bf16.mxu0 0
        %3983 = vmatpush1.bf16.msra.mxu0 0
        %3984 = vmatprep.subr.bf16.mxu0 0
        %3985 = vmatpush1.bf16.msra.mxu0 0
        %3986 = vmatprep.subr.bf16.mxu0 0
        %3987 = vmatpush1.bf16.msra.mxu0 0
        %3988 = vmatprep.subr.bf16.mxu0 0
        %3989 = vmatpush1.bf16.msra.mxu0 0
        %3990 = vmatprep.subr.bf16.mxu0 0
        %3991 = vmatpush1.bf16.msra.mxu0 0
        %3992 = vmatprep.mubr.bf16.mxu0 0
        %3993 = vmatmul.mubr.bf16.gmra.mrb[0].mxu0 %v3909
        %v3994 = vpop.f32.mrb[0].mxu0
        %v3995 = vadd.f32 %v3766, %v3994
        %v3996 = vpop.f32.mrb[0].mxu0
        %v3997 = vpop.f32.mrb[0].mxu0
        %v3998 = vadd.f32 %v3769, %v3997
        %v3999 = vpop.f32.mrb[0].mxu0
        %4000 = vmatprep.mubr.bf16.mxu0 0
        %4001 = vmatmul.mubr.bf16.gmra.mrb[0].mxu0 %v3912
        %v4002 = vpop.f32.mrb[0].mxu0
        %v4003 = vadd.f32 %v3774, %v4002
        %v4004 = vpop.f32.mrb[0].mxu0
        %v4005 = vpop.f32.mrb[0].mxu0
        %v4006 = vadd.f32 %v3777, %v4005
        %v4007 = vpop.f32.mrb[0].mxu0
        %4008 = vmatprep.mubr.bf16.mxu0 0
        %4009 = vmatmul.mubr.bf16.gmra.mrb[0].mxu0 %v3915
        %v4010 = vpop.f32.mrb[0].mxu0
        %v4011 = vadd.f32 %v3782, %v4010
        %v4012 = vpop.f32.mrb[0].mxu0
        %v4013 = vpop.f32.mrb[0].mxu0
        %v4014 = vadd.f32 %v3785, %v4013
        %v4015 = vpop.f32.mrb[0].mxu0
        %4016 = vmatprep.mubr.bf16.mxu0 0
        %4017 = vmatmul.mubr.bf16.gmra.mrb[0].mxu0 %v3918
        %v4018 = vpop.f32.mrb[0].mxu0
        %v4019 = vadd.f32 %v3790, %v4018
        %v4020 = vpop.f32.mrb[0].mxu0
        %v4021 = vpop.f32.mrb[0].mxu0
        %v4022 = vadd.f32 %v3793, %v4021
        %v4023 = vpop.f32.mrb[0].mxu0
        %4024 = vmatprep.mubr.bf16.mxu0 0
        %4025 = vmatmul.mubr.bf16.gmra.mrb[0].mxu0 %v3921
        %v4026 = vpop.f32.mrb[0].mxu0
        %v4027 = vadd.f32 %v3798, %v4026
        %v4028 = vpop.f32.mrb[0].mxu0
        %v4029 = vpop.f32.mrb[0].mxu0
        %v4030 = vadd.f32 %v3801, %v4029
        %v4031 = vpop.f32.mrb[0].mxu0
        %4032 = vmatprep.mubr.bf16.mxu0 0
        %4033 = vmatmul.mubr.bf16.gmra.mrb[0].mxu0 %v3924
        %v4034 = vpop.f32.mrb[0].mxu0
        %v4035 = vadd.f32 %v3806, %v4034
        %v4036 = vpop.f32.mrb[0].mxu0
        %v4037 = vpop.f32.mrb[0].mxu0
        %v4038 = vadd.f32 %v3809, %v4037
        %v4039 = vpop.f32.mrb[0].mxu0
        %4040 = vmatprep.mubr.bf16.mxu0 0
        %4041 = vmatmul.mubr.bf16.gmra.mrb[0].mxu0 %v3927
        %v4042 = vpop.f32.mrb[0].mxu0
        %v4043 = vadd.f32 %v3814, %v4042
        %v4044 = vpop.f32.mrb[0].mxu0
        %v4045 = vpop.f32.mrb[0].mxu0
        %v4046 = vadd.f32 %v3817, %v4045
        %v4047 = vpop.f32.mrb[0].mxu0
        %4048 = vmatprep.mubr.bf16.mxu0 0
        %4049 = vmatmul.mubr.bf16.gmra.mrb[0].mxu0 %v3930
        %v4050 = vpop.f32.mrb[0].mxu0
        %v4051 = vadd.f32 %v3822, %v4050
        %v4052 = vpop.f32.mrb[0].mxu0
        %v4053 = vpop.f32.mrb[0].mxu0
        %v4054 = vadd.f32 %v3825, %v4053
        %v4055 = vpop.f32.mrb[0].mxu0
        %4056 = vmatprep.mubr.bf16.mxu0 0
        %4057 = vmatmul.mubr.bf16.gmra.mrb[0].mxu0 %v3933
        %v4058 = vpop.f32.mrb[0].mxu0
        %v4059 = vadd.f32 %v3830, %v4058
        %v4060 = vpop.f32.mrb[0].mxu0
        %v4061 = vpop.f32.mrb[0].mxu0
        %v4062 = vadd.f32 %v3833, %v4061
        %v4063 = vpop.f32.mrb[0].mxu0
        %4064 = vmatprep.mubr.bf16.mxu0 0
        %4065 = vmatmul.mubr.bf16.gmra.mrb[0].mxu0 %v3936
        %v4066 = vpop.f32.mrb[0].mxu0
        %v4067 = vadd.f32 %v3838, %v4066
        %v4068 = vpop.f32.mrb[0].mxu0
        %v4069 = vpop.f32.mrb[0].mxu0
        %v4070 = vadd.f32 %v3841, %v4069
        %v4071 = vpop.f32.mrb[0].mxu0
        %4072 = vmatprep.mubr.bf16.mxu0 0
        %4073 = vmatmul.mubr.bf16.gmra.mrb[0].mxu0 %v3939
        %v4074 = vpop.f32.mrb[0].mxu0
        %v4075 = vadd.f32 %v3846, %v4074
        %v4076 = vpop.f32.mrb[0].mxu0
        %v4077 = vpop.f32.mrb[0].mxu0
        %v4078 = vadd.f32 %v3849, %v4077
        %v4079 = vpop.f32.mrb[0].mxu0
        %4080 = vmatprep.mubr.bf16.mxu0 0
        %4081 = vmatmul.mubr.bf16.gmra.mrb[0].mxu0 %v3942
        %v4082 = vpop.f32.mrb[0].mxu0
        %v4083 = vadd.f32 %v3854, %v4082
        %v4084 = vpop.f32.mrb[0].mxu0
        %v4085 = vpop.f32.mrb[0].mxu0
        %v4086 = vadd.f32 %v3857, %v4085
        %v4087 = vpop.f32.mrb[0].mxu0
        %4088 = vmatprep.mubr.bf16.mxu0 0
        %4089 = vmatmul.mubr.bf16.gmra.mrb[0].mxu0 %v3945
        %v4090 = vpop.f32.mrb[0].mxu0
        %v4091 = vadd.f32 %v3862, %v4090
        %v4092 = vpop.f32.mrb[0].mxu0
        %v4093 = vpop.f32.mrb[0].mxu0
        %v4094 = vadd.f32 %v3865, %v4093
        %v4095 = vpop.f32.mrb[0].mxu0
        %4096 = vmatprep.mubr.bf16.mxu0 0
        %4097 = vmatmul.mubr.bf16.gmra.mrb[0].mxu0 %v3948
        %v4098 = vpop.f32.mrb[0].mxu0
        %v4099 = vadd.f32 %v3870, %v4098
        %v4100 = vpop.f32.mrb[0].mxu0
        %v4101 = vpop.f32.mrb[0].mxu0
        %v4102 = vadd.f32 %v3873, %v4101
        %v4103 = vpop.f32.mrb[0].mxu0
        %4104 = vmatprep.mubr.bf16.mxu0 0
        %4105 = vmatmul.mubr.bf16.gmra.mrb[0].mxu0 %v3951
        %v4106 = vpop.f32.mrb[0].mxu0
        %v4107 = vadd.f32 %v3878, %v4106
        %v4108 = vpop.f32.mrb[0].mxu0
        %v4109 = vpop.f32.mrb[0].mxu0
        %v4110 = vadd.f32 %v3881, %v4109
        %v4111 = vpop.f32.mrb[0].mxu0
        %4112 = vmatprep.mubr.bf16.mxu0 0
        %4113 = vmatmul.mubr.bf16.gmra.mrb[0].mxu0 %v3954
        %v4114 = vpop.f32.mrb[0].mxu0
        %v4115 = vadd.f32 %v3886, %v4114
        %v4116 = vpop.f32.mrb[0].mxu0
        %v4117 = vpop.f32.mrb[0].mxu0
        %v4118 = vadd.f32 %v3889, %v4117
        %v4119 = vpop.f32.mrb[0].mxu0
        %4120 = vdwg.mxu0
        %v4121 = vld [vmem:[%s3] sm:$0x1]
        %v4123 = vlaneseq
        %v4124 = vshrl.u32 %v4123, 7
        %v4125 = vsub.s32 0, %v4124
        %v4126 = vrot.slane %v4121, %v4125
        %v4128 = vadd.f32 %v3995, %v4126
        %v4129 = vadd.f32 %v3998, %v4126
        %v4130 = vadd.f32 %v4003, %v4126
        %v4131 = vadd.f32 %v4006, %v4126
        %v4132 = vadd.f32 %v4011, %v4126
        %v4133 = vadd.f32 %v4014, %v4126
        %v4134 = vadd.f32 %v4019, %v4126
        %v4135 = vadd.f32 %v4022, %v4126
        %v4136 = vadd.f32 %v4027, %v4126
        %v4137 = vadd.f32 %v4030, %v4126
        %v4138 = vadd.f32 %v4035, %v4126
        %v4139 = vadd.f32 %v4038, %v4126
        %v4140 = vadd.f32 %v4043, %v4126
        %v4141 = vadd.f32 %v4046, %v4126
        %v4142 = vadd.f32 %v4051, %v4126
        %v4143 = vadd.f32 %v4054, %v4126
        %v4144 = vadd.f32 %v4059, %v4126
        %v4145 = vadd.f32 %v4062, %v4126
        %v4146 = vadd.f32 %v4067, %v4126
        %v4147 = vadd.f32 %v4070, %v4126
        %v4148 = vadd.f32 %v4075, %v4126
        %v4149 = vadd.f32 %v4078, %v4126
        %v4150 = vadd.f32 %v4083, %v4126
        %v4151 = vadd.f32 %v4086, %v4126
        %v4152 = vadd.f32 %v4091, %v4126
        %v4153 = vadd.f32 %v4094, %v4126
        %v4154 = vadd.f32 %v4099, %v4126
        %v4155 = vadd.f32 %v4102, %v4126
        %v4156 = vadd.f32 %v4107, %v4126
        %v4157 = vadd.f32 %v4110, %v4126
        %v4158 = vadd.f32 %v4115, %v4126
        %v4159 = vadd.f32 %v4118, %v4126
        %v4160 = vlaneseq
        %v4161 = vand.u32 %v4160, 127
        %vm4162 = vcmp.lt.s32.totalorder %v4161, 96
        %v4163 = vxor.u32 %v4128, 2147483648
        %v4164 = vxor.u32 %v4129, 2147483648
        %v4165 = vxor.u32 %v4130, 2147483648
        %v4166 = vxor.u32 %v4131, 2147483648
        %v4167 = vxor.u32 %v4132, 2147483648
        %v4168 = vxor.u32 %v4133, 2147483648
        %v4169 = vxor.u32 %v4134, 2147483648
        %v4170 = vxor.u32 %v4135, 2147483648
        %v4171 = vxor.u32 %v4136, 2147483648
        %v4172 = vxor.u32 %v4137, 2147483648
        %v4173 = vxor.u32 %v4138, 2147483648
        %v4174 = vxor.u32 %v4139, 2147483648
        %v4175 = vxor.u32 %v4140, 2147483648
        %v4176 = vxor.u32 %v4141, 2147483648
        %v4177 = vxor.u32 %v4142, 2147483648
        %v4178 = vxor.u32 %v4143, 2147483648
        %v4179 = vxor.u32 %v4144, 2147483648
        %v4180 = vxor.u32 %v4145, 2147483648
        %v4181 = vxor.u32 %v4146, 2147483648
        %v4182 = vxor.u32 %v4147, 2147483648
        %v4183 = vxor.u32 %v4148, 2147483648
        %v4184 = vxor.u32 %v4149, 2147483648
        %v4185 = vxor.u32 %v4150, 2147483648
        %v4186 = vxor.u32 %v4151, 2147483648
        %v4187 = vxor.u32 %v4152, 2147483648
        %v4188 = vxor.u32 %v4153, 2147483648
        %v4189 = vxor.u32 %v4154, 2147483648
        %v4190 = vxor.u32 %v4155, 2147483648
        %v4191 = vxor.u32 %v4156, 2147483648
        %v4192 = vxor.u32 %v4157, 2147483648
        %v4193 = vxor.u32 %v4158, 2147483648
        %v4194 = vxor.u32 %v4159, 2147483648
        %v4195 = vmul.f32 %v4163, 1.442695
        %v4196 = vpow.pop %v4195
        %v4197 = vmul.f32 %v4164, 1.442695
        %v4198 = vpow.pop %v4197
        %v4199 = vmul.f32 %v4165, 1.442695
        %v4200 = vpow.pop %v4199
        %v4201 = vmul.f32 %v4166, 1.442695
        %v4202 = vpow.pop %v4201
        %v4203 = vmul.f32 %v4167, 1.442695
        %v4204 = vpow.pop %v4203
        %v4205 = vmul.f32 %v4168, 1.442695
        %v4206 = vpow.pop %v4205
        %v4207 = vmul.f32 %v4169, 1.442695
        %v4208 = vpow.pop %v4207
        %v4209 = vmul.f32 %v4170, 1.442695
        %v4210 = vpow.pop %v4209
        %v4211 = vmul.f32 %v4171, 1.442695
        %v4212 = vpow.pop %v4211
        %v4213 = vmul.f32 %v4172, 1.442695
        %v4214 = vpow.pop %v4213
        %v4215 = vmul.f32 %v4173, 1.442695
        %v4216 = vpow.pop %v4215
        %v4217 = vmul.f32 %v4174, 1.442695
        %v4218 = vpow.pop %v4217
        %v4219 = vmul.f32 %v4175, 1.442695
        %v4220 = vpow.pop %v4219
        %v4221 = vmul.f32 %v4176, 1.442695
        %v4222 = vpow.pop %v4221
        %v4223 = vmul.f32 %v4177, 1.442695
        %v4224 = vpow.pop %v4223
        %v4225 = vmul.f32 %v4178, 1.442695
        %v4226 = vpow.pop %v4225
        %v4227 = vmul.f32 %v4179, 1.442695
        %v4228 = vpow.pop %v4227
        %v4229 = vmul.f32 %v4180, 1.442695
        %v4230 = vpow.pop %v4229
        %v4231 = vmul.f32 %v4181, 1.442695
        %v4232 = vpow.pop %v4231
        %v4233 = vmul.f32 %v4182, 1.442695
        %v4234 = vpow.pop %v4233
        %v4235 = vmul.f32 %v4183, 1.442695
        %v4236 = vpow.pop %v4235
        %v4237 = vmul.f32 %v4184, 1.442695
        %v4238 = vpow.pop %v4237
        %v4239 = vmul.f32 %v4185, 1.442695
        %v4240 = vpow.pop %v4239
        %v4241 = vmul.f32 %v4186, 1.442695
        %v4242 = vpow.pop %v4241
        %v4243 = vmul.f32 %v4187, 1.442695
        %v4244 = vpow.pop %v4243
        %v4245 = vmul.f32 %v4188, 1.442695
        %v4246 = vpow.pop %v4245
        %v4247 = vmul.f32 %v4189, 1.442695
        %v4248 = vpow.pop %v4247
        %v4249 = vmul.f32 %v4190, 1.442695
        %v4250 = vpow.pop %v4249
        %v4251 = vmul.f32 %v4191, 1.442695
        %v4252 = vpow.pop %v4251
        %v4253 = vmul.f32 %v4192, 1.442695
        %v4254 = vpow.pop %v4253
        %v4255 = vmul.f32 %v4193, 1.442695
        %v4256 = vpow.pop %v4255
        %v4257 = vmul.f32 %v4194, 1.442695
        %v4258 = vpow.pop %v4257
        %v4259 = vadd.f32 %v4196, 1.0
        %v4260 = vadd.f32 %v4198, 1.0
        %v4261 = vadd.f32 %v4200, 1.0
        %v4262 = vadd.f32 %v4202, 1.0
        %v4263 = vadd.f32 %v4204, 1.0
        %v4264 = vadd.f32 %v4206, 1.0
        %v4265 = vadd.f32 %v4208, 1.0
        %v4266 = vadd.f32 %v4210, 1.0
        %v4267 = vadd.f32 %v4212, 1.0
        %v4268 = vadd.f32 %v4214, 1.0
        %v4269 = vadd.f32 %v4216, 1.0
        %v4270 = vadd.f32 %v4218, 1.0
        %v4271 = vadd.f32 %v4220, 1.0
        %v4272 = vadd.f32 %v4222, 1.0
        %v4273 = vadd.f32 %v4224, 1.0
        %v4274 = vadd.f32 %v4226, 1.0
        %v4275 = vadd.f32 %v4228, 1.0
        %v4276 = vadd.f32 %v4230, 1.0
        %v4277 = vadd.f32 %v4232, 1.0
        %v4278 = vadd.f32 %v4234, 1.0
        %v4279 = vadd.f32 %v4236, 1.0
        %v4280 = vadd.f32 %v4238, 1.0
        %v4281 = vadd.f32 %v4240, 1.0
        %v4282 = vadd.f32 %v4242, 1.0
        %v4283 = vadd.f32 %v4244, 1.0
        %v4284 = vadd.f32 %v4246, 1.0
        %v4285 = vadd.f32 %v4248, 1.0
        %v4286 = vadd.f32 %v4250, 1.0
        %v4287 = vadd.f32 %v4252, 1.0
        %v4288 = vadd.f32 %v4254, 1.0
        %v4289 = vadd.f32 %v4256, 1.0
        %v4290 = vadd.f32 %v4258, 1.0
        %v4291 = vrcp.pop %v4259
        %v4292 = vmul.f32 1.0, %v4291
        %v4293 = vrcp.pop %v4260
        %v4294 = vmul.f32 1.0, %v4293
        %v4295 = vrcp.pop %v4261
        %v4296 = vmul.f32 1.0, %v4295
        %v4297 = vrcp.pop %v4262
        %v4298 = vmul.f32 1.0, %v4297
        %v4299 = vrcp.pop %v4263
        %v4300 = vmul.f32 1.0, %v4299
        %v4301 = vrcp.pop %v4264
        %v4302 = vmul.f32 1.0, %v4301
        %v4303 = vrcp.pop %v4265
        %v4304 = vmul.f32 1.0, %v4303
        %v4305 = vrcp.pop %v4266
        %v4306 = vmul.f32 1.0, %v4305
        %v4307 = vrcp.pop %v4267
        %v4308 = vmul.f32 1.0, %v4307
        %v4309 = vrcp.pop %v4268
        %v4310 = vmul.f32 1.0, %v4309
        %v4311 = vrcp.pop %v4269
        %v4312 = vmul.f32 1.0, %v4311
        %v4313 = vrcp.pop %v4270
        %v4314 = vmul.f32 1.0, %v4313
        %v4315 = vrcp.pop %v4271
        %v4316 = vmul.f32 1.0, %v4315
        %v4317 = vrcp.pop %v4272
        %v4318 = vmul.f32 1.0, %v4317
        %v4319 = vrcp.pop %v4273
        %v4320 = vmul.f32 1.0, %v4319
        %v4321 = vrcp.pop %v4274
        %v4322 = vmul.f32 1.0, %v4321
        %v4323 = vrcp.pop %v4275
        %v4324 = vmul.f32 1.0, %v4323
        %v4325 = vrcp.pop %v4276
        %v4326 = vmul.f32 1.0, %v4325
        %v4327 = vrcp.pop %v4277
        %v4328 = vmul.f32 1.0, %v4327
        %v4329 = vrcp.pop %v4278
        %v4330 = vmul.f32 1.0, %v4329
        %v4331 = vrcp.pop %v4279
        %v4332 = vmul.f32 1.0, %v4331
        %v4333 = vrcp.pop %v4280
        %v4334 = vmul.f32 1.0, %v4333
        %v4335 = vrcp.pop %v4281
        %v4336 = vmul.f32 1.0, %v4335
        %v4337 = vrcp.pop %v4282
        %v4338 = vmul.f32 1.0, %v4337
        %v4339 = vrcp.pop %v4283
        %v4340 = vmul.f32 1.0, %v4339
        %v4341 = vrcp.pop %v4284
        %v4342 = vmul.f32 1.0, %v4341
        %v4343 = vrcp.pop %v4285
        %v4344 = vmul.f32 1.0, %v4343
        %v4345 = vrcp.pop %v4286
        %v4346 = vmul.f32 1.0, %v4345
        %v4347 = vrcp.pop %v4287
        %v4348 = vmul.f32 1.0, %v4347
        %v4349 = vrcp.pop %v4288
        %v4350 = vmul.f32 1.0, %v4349
        %v4351 = vrcp.pop %v4289
        %v4352 = vmul.f32 1.0, %v4351
        %v4353 = vrcp.pop %v4290
        %v4354 = vmul.f32 1.0, %v4353
        %v4355 = vtanh.pop %v4128
        %v4356 = vtanh.pop %v4129
        %v4357 = vtanh.pop %v4130
        %v4358 = vtanh.pop %v4131
        %v4359 = vtanh.pop %v4132
        %v4360 = vtanh.pop %v4133
        %v4361 = vtanh.pop %v4134
        %v4362 = vtanh.pop %v4135
        %v4363 = vtanh.pop %v4136
        %v4364 = vtanh.pop %v4137
        %v4365 = vtanh.pop %v4138
        %v4366 = vtanh.pop %v4139
        %v4367 = vtanh.pop %v4140
        %v4368 = vtanh.pop %v4141
        %v4369 = vtanh.pop %v4142
        %v4370 = vtanh.pop %v4143
        %v4371 = vtanh.pop %v4144
        %v4372 = vtanh.pop %v4145
        %v4373 = vtanh.pop %v4146
        %v4374 = vtanh.pop %v4147
        %v4375 = vtanh.pop %v4148
        %v4376 = vtanh.pop %v4149
        %v4377 = vtanh.pop %v4150
        %v4378 = vtanh.pop %v4151
        %v4379 = vtanh.pop %v4152
        %v4380 = vtanh.pop %v4153
        %v4381 = vtanh.pop %v4154
        %v4382 = vtanh.pop %v4155
        %v4383 = vtanh.pop %v4156
        %v4384 = vtanh.pop %v4157
        %v4385 = vtanh.pop %v4158
        %v4386 = vtanh.pop %v4159
        %v4387 = vsel %vm4162, %v4292, %v4355
        %v4388 = vsel %vm4162, %v4294, %v4356
        %v4389 = vsel %vm4162, %v4296, %v4357
        %v4390 = vsel %vm4162, %v4298, %v4358
        %v4391 = vsel %vm4162, %v4300, %v4359
        %v4392 = vsel %vm4162, %v4302, %v4360
        %v4393 = vsel %vm4162, %v4304, %v4361
        %v4394 = vsel %vm4162, %v4306, %v4362
        %v4395 = vsel %vm4162, %v4308, %v4363
        %v4396 = vsel %vm4162, %v4310, %v4364
        %v4397 = vsel %vm4162, %v4312, %v4365
        %v4398 = vsel %vm4162, %v4314, %v4366
        %v4399 = vsel %vm4162, %v4316, %v4367
        %v4400 = vsel %vm4162, %v4318, %v4368
        %v4401 = vsel %vm4162, %v4320, %v4369
        %v4402 = vsel %vm4162, %v4322, %v4370
        %v4403 = vsel %vm4162, %v4324, %v4371
        %v4404 = vsel %vm4162, %v4326, %v4372
        %v4405 = vsel %vm4162, %v4328, %v4373
        %v4406 = vsel %vm4162, %v4330, %v4374
        %v4407 = vsel %vm4162, %v4332, %v4375
        %v4408 = vsel %vm4162, %v4334, %v4376
        %v4409 = vsel %vm4162, %v4336, %v4377
        %v4410 = vsel %vm4162, %v4338, %v4378
        %v4411 = vsel %vm4162, %v4340, %v4379
        %v4412 = vsel %vm4162, %v4342, %v4380
        %v4413 = vsel %vm4162, %v4344, %v4381
        %v4414 = vsel %vm4162, %v4346, %v4382
        %v4415 = vsel %vm4162, %v4348, %v4383
        %v4416 = vsel %vm4162, %v4350, %v4384
        %v4417 = vsel %vm4162, %v4352, %v4385
        %v4418 = vsel %vm4162, %v4354, %v4386
        %v4419 = vld [vmem:[#allocation4] sm:$0xff]
        %v4420 = vld [vmem:[#allocation4 + $0x8] sm:$0xff]
        %v4421 = vld [vmem:[#allocation4 + $0x10] sm:$0xff]
        %v4422 = vld [vmem:[#allocation4 + $0x18] sm:$0xff]
        %v4423 = vld [vmem:[#allocation4 + $0x20] sm:$0xff]
        %v4424 = vld [vmem:[#allocation4 + $0x28] sm:$0xff]
        %v4425 = vld [vmem:[#allocation4 + $0x30] sm:$0xff]
        %v4426 = vld [vmem:[#allocation4 + $0x38] sm:$0xff]
        %v4427 = vld [vmem:[#allocation4 + $0x40] sm:$0xff]
        %v4428 = vld [vmem:[#allocation4 + $0x48] sm:$0xff]
        %v4429 = vld [vmem:[#allocation4 + $0x50] sm:$0xff]
        %v4430 = vld [vmem:[#allocation4 + $0x58] sm:$0xff]
        %v4431 = vld [vmem:[#allocation4 + $0x60] sm:$0xff]
        %v4432 = vld [vmem:[#allocation4 + $0x68] sm:$0xff]
        %v4433 = vld [vmem:[#allocation4 + $0x70] sm:$0xff]
        %v4434 = vld [vmem:[#allocation4 + $0x78] sm:$0xff]
        %v4435 = vld [vmem:[#allocation4 + $0x80] sm:$0xff]
        %v4436 = vld [vmem:[#allocation4 + $0x88] sm:$0xff]
        %v4437 = vld [vmem:[#allocation4 + $0x90] sm:$0xff]
        %v4438 = vld [vmem:[#allocation4 + $0x98] sm:$0xff]
        %v4439 = vld [vmem:[#allocation4 + $0xa0] sm:$0xff]
        %v4440 = vld [vmem:[#allocation4 + $0xa8] sm:$0xff]
        %v4441 = vld [vmem:[#allocation4 + $0xb0] sm:$0xff]
        %v4442 = vld [vmem:[#allocation4 + $0xb8] sm:$0xff]
        %v4443 = vld [vmem:[#allocation4 + $0xc0] sm:$0xff]
        %v4444 = vld [vmem:[#allocation4 + $0xc8] sm:$0xff]
        %v4445 = vld [vmem:[#allocation4 + $0xd0] sm:$0xff]
        %v4446 = vld [vmem:[#allocation4 + $0xd8] sm:$0xff]
        %v4447 = vld [vmem:[#allocation4 + $0xe0] sm:$0xff]
        %v4448 = vld [vmem:[#allocation4 + $0xe8] sm:$0xff]
        %v4449 = vld [vmem:[#allocation4 + $0xf0] sm:$0xff]
        %v4450 = vld [vmem:[#allocation4 + $0xf8] sm:$0xff]
        %4483 = vrot.lane.b32.xlu0 %v4419, 32
        %v4484 = vpop.permute.xlu0 %4483
        %4485 = vrot.lane.b32.xlu0 %v4420, 32
        %v4486 = vpop.permute.xlu0 %4485
        %4487 = vrot.lane.b32.xlu0 %v4421, 32
        %v4488 = vpop.permute.xlu0 %4487
        %4489 = vrot.lane.b32.xlu0 %v4422, 32
        %v4490 = vpop.permute.xlu0 %4489
        %4491 = vrot.lane.b32.xlu0 %v4423, 32
        %v4492 = vpop.permute.xlu0 %4491
        %4493 = vrot.lane.b32.xlu0 %v4424, 32
        %v4494 = vpop.permute.xlu0 %4493
        %4495 = vrot.lane.b32.xlu0 %v4425, 32
        %v4496 = vpop.permute.xlu0 %4495
        %4497 = vrot.lane.b32.xlu0 %v4426, 32
        %v4498 = vpop.permute.xlu0 %4497
        %4499 = vrot.lane.b32.xlu0 %v4427, 32
        %v4500 = vpop.permute.xlu0 %4499
        %4501 = vrot.lane.b32.xlu0 %v4428, 32
        %v4502 = vpop.permute.xlu0 %4501
        %4503 = vrot.lane.b32.xlu0 %v4429, 32
        %v4504 = vpop.permute.xlu0 %4503
        %4505 = vrot.lane.b32.xlu0 %v4430, 32
        %v4506 = vpop.permute.xlu0 %4505
        %4507 = vrot.lane.b32.xlu0 %v4431, 32
        %v4508 = vpop.permute.xlu0 %4507
        %4509 = vrot.lane.b32.xlu0 %v4432, 32
        %v4510 = vpop.permute.xlu0 %4509
        %4511 = vrot.lane.b32.xlu0 %v4433, 32
        %v4512 = vpop.permute.xlu0 %4511
        %4513 = vrot.lane.b32.xlu0 %v4434, 32
        %v4514 = vpop.permute.xlu0 %4513
        %4515 = vrot.lane.b32.xlu0 %v4435, 32
        %v4516 = vpop.permute.xlu0 %4515
        %4517 = vrot.lane.b32.xlu0 %v4436, 32
        %v4518 = vpop.permute.xlu0 %4517
        %4519 = vrot.lane.b32.xlu0 %v4437, 32
        %v4520 = vpop.permute.xlu0 %4519
        %4521 = vrot.lane.b32.xlu0 %v4438, 32
        %v4522 = vpop.permute.xlu0 %4521
        %4523 = vrot.lane.b32.xlu0 %v4439, 32
        %v4524 = vpop.permute.xlu0 %4523
        %4525 = vrot.lane.b32.xlu0 %v4440, 32
        %v4526 = vpop.permute.xlu0 %4525
        %4527 = vrot.lane.b32.xlu0 %v4441, 32
        %v4528 = vpop.permute.xlu0 %4527
        %4529 = vrot.lane.b32.xlu0 %v4442, 32
        %v4530 = vpop.permute.xlu0 %4529
        %4531 = vrot.lane.b32.xlu0 %v4443, 32
        %v4532 = vpop.permute.xlu0 %4531
        %4533 = vrot.lane.b32.xlu0 %v4444, 32
        %v4534 = vpop.permute.xlu0 %4533
        %4535 = vrot.lane.b32.xlu0 %v4445, 32
        %v4536 = vpop.permute.xlu0 %4535
        %4537 = vrot.lane.b32.xlu0 %v4446, 32
        %v4538 = vpop.permute.xlu0 %4537
        %4539 = vrot.lane.b32.xlu0 %v4447, 32
        %v4540 = vpop.permute.xlu0 %4539
        %4541 = vrot.lane.b32.xlu0 %v4448, 32
        %v4542 = vpop.permute.xlu0 %4541
        %4543 = vrot.lane.b32.xlu0 %v4449, 32
        %v4544 = vpop.permute.xlu0 %4543
        %4545 = vrot.lane.b32.xlu0 %v4450, 32
        %v4546 = vpop.permute.xlu0 %4545
        %v4579 = vmul.f32 %v4387, %v4484
        %v4580 = vmul.f32 %v4388, %v4486
        %v4581 = vmul.f32 %v4389, %v4488
        %v4582 = vmul.f32 %v4390, %v4490
        %v4583 = vmul.f32 %v4391, %v4492
        %v4584 = vmul.f32 %v4392, %v4494
        %v4585 = vmul.f32 %v4393, %v4496
        %v4586 = vmul.f32 %v4394, %v4498
        %v4587 = vmul.f32 %v4395, %v4500
        %v4588 = vmul.f32 %v4396, %v4502
        %v4589 = vmul.f32 %v4397, %v4504
        %v4590 = vmul.f32 %v4398, %v4506
        %v4591 = vmul.f32 %v4399, %v4508
        %v4592 = vmul.f32 %v4400, %v4510
        %v4593 = vmul.f32 %v4401, %v4512
        %v4594 = vmul.f32 %v4402, %v4514
        %v4595 = vmul.f32 %v4403, %v4516
        %v4596 = vmul.f32 %v4404, %v4518
        %v4597 = vmul.f32 %v4405, %v4520
        %v4598 = vmul.f32 %v4406, %v4522
        %v4599 = vmul.f32 %v4407, %v4524
        %v4600 = vmul.f32 %v4408, %v4526
        %v4601 = vmul.f32 %v4409, %v4528
        %v4602 = vmul.f32 %v4410, %v4530
        %v4603 = vmul.f32 %v4411, %v4532
        %v4604 = vmul.f32 %v4412, %v4534
        %v4605 = vmul.f32 %v4413, %v4536
        %v4606 = vmul.f32 %v4414, %v4538
        %v4607 = vmul.f32 %v4415, %v4540
        %v4608 = vmul.f32 %v4416, %v4542
        %v4609 = vmul.f32 %v4417, %v4544
        %v4610 = vmul.f32 %v4418, %v4546
        %4643 = vrot.lane.b32.xlu0 %v4387, 32
        %v4644 = vpop.permute.xlu0 %4643
        %4645 = vrot.lane.b32.xlu0 %v4388, 32
        %v4646 = vpop.permute.xlu0 %4645
        %4647 = vrot.lane.b32.xlu0 %v4389, 32
        %v4648 = vpop.permute.xlu0 %4647
        %4649 = vrot.lane.b32.xlu0 %v4390, 32
        %v4650 = vpop.permute.xlu0 %4649
        %4651 = vrot.lane.b32.xlu0 %v4391, 32
        %v4652 = vpop.permute.xlu0 %4651
        %4653 = vrot.lane.b32.xlu0 %v4392, 32
        %v4654 = vpop.permute.xlu0 %4653
        %4655 = vrot.lane.b32.xlu0 %v4393, 32
        %v4656 = vpop.permute.xlu0 %4655
        %4657 = vrot.lane.b32.xlu0 %v4394, 32
        %v4658 = vpop.permute.xlu0 %4657
        %4659 = vrot.lane.b32.xlu0 %v4395, 32
        %v4660 = vpop.permute.xlu0 %4659
        %4661 = vrot.lane.b32.xlu0 %v4396, 32
        %v4662 = vpop.permute.xlu0 %4661
        %4663 = vrot.lane.b32.xlu0 %v4397, 32
        %v4664 = vpop.permute.xlu0 %4663
        %4665 = vrot.lane.b32.xlu0 %v4398, 32
        %v4666 = vpop.permute.xlu0 %4665
        %4667 = vrot.lane.b32.xlu0 %v4399, 32
        %v4668 = vpop.permute.xlu0 %4667
        %4669 = vrot.lane.b32.xlu0 %v4400, 32
        %v4670 = vpop.permute.xlu0 %4669
        %4671 = vrot.lane.b32.xlu0 %v4401, 32
        %v4672 = vpop.permute.xlu0 %4671
        %4673 = vrot.lane.b32.xlu0 %v4402, 32
        %v4674 = vpop.permute.xlu0 %4673
        %4675 = vrot.lane.b32.xlu0 %v4403, 32
        %v4676 = vpop.permute.xlu0 %4675
        %4677 = vrot.lane.b32.xlu0 %v4404, 32
        %v4678 = vpop.permute.xlu0 %4677
        %4679 = vrot.lane.b32.xlu0 %v4405, 32
        %v4680 = vpop.permute.xlu0 %4679
        %4681 = vrot.lane.b32.xlu0 %v4406, 32
        %v4682 = vpop.permute.xlu0 %4681
        %4683 = vrot.lane.b32.xlu0 %v4407, 32
        %v4684 = vpop.permute.xlu0 %4683
        %4685 = vrot.lane.b32.xlu0 %v4408, 32
        %v4686 = vpop.permute.xlu0 %4685
        %4687 = vrot.lane.b32.xlu0 %v4409, 32
        %v4688 = vpop.permute.xlu0 %4687
        %4689 = vrot.lane.b32.xlu0 %v4410, 32
        %v4690 = vpop.permute.xlu0 %4689
        %4691 = vrot.lane.b32.xlu0 %v4411, 32
        %v4692 = vpop.permute.xlu0 %4691
        %4693 = vrot.lane.b32.xlu0 %v4412, 32
        %v4694 = vpop.permute.xlu0 %4693
        %4695 = vrot.lane.b32.xlu0 %v4413, 32
        %v4696 = vpop.permute.xlu0 %4695
        %4697 = vrot.lane.b32.xlu0 %v4414, 32
        %v4698 = vpop.permute.xlu0 %4697
        %4699 = vrot.lane.b32.xlu0 %v4415, 32
        %v4700 = vpop.permute.xlu0 %4699
        %4701 = vrot.lane.b32.xlu0 %v4416, 32
        %v4702 = vpop.permute.xlu0 %4701
        %4703 = vrot.lane.b32.xlu0 %v4417, 32
        %v4704 = vpop.permute.xlu0 %4703
        %4705 = vrot.lane.b32.xlu0 %v4418, 32
        %v4706 = vpop.permute.xlu0 %4705
        %v4739 = vmul.f32 %v4387, %v4644
        %v4740 = vmul.f32 %v4388, %v4646
        %v4741 = vmul.f32 %v4389, %v4648
        %v4742 = vmul.f32 %v4390, %v4650
        %v4743 = vmul.f32 %v4391, %v4652
        %v4744 = vmul.f32 %v4392, %v4654
        %v4745 = vmul.f32 %v4393, %v4656
        %v4746 = vmul.f32 %v4394, %v4658
        %v4747 = vmul.f32 %v4395, %v4660
        %v4748 = vmul.f32 %v4396, %v4662
        %v4749 = vmul.f32 %v4397, %v4664
        %v4750 = vmul.f32 %v4398, %v4666
        %v4751 = vmul.f32 %v4399, %v4668
        %v4752 = vmul.f32 %v4400, %v4670
        %v4753 = vmul.f32 %v4401, %v4672
        %v4754 = vmul.f32 %v4402, %v4674
        %v4755 = vmul.f32 %v4403, %v4676
        %v4756 = vmul.f32 %v4404, %v4678
        %v4757 = vmul.f32 %v4405, %v4680
        %v4758 = vmul.f32 %v4406, %v4682
        %v4759 = vmul.f32 %v4407, %v4684
        %v4760 = vmul.f32 %v4408, %v4686
        %v4761 = vmul.f32 %v4409, %v4688
        %v4762 = vmul.f32 %v4410, %v4690
        %v4763 = vmul.f32 %v4411, %v4692
        %v4764 = vmul.f32 %v4412, %v4694
        %v4765 = vmul.f32 %v4413, %v4696
        %v4766 = vmul.f32 %v4414, %v4698
        %v4767 = vmul.f32 %v4415, %v4700
        %v4768 = vmul.f32 %v4416, %v4702
        %v4769 = vmul.f32 %v4417, %v4704
        %v4770 = vmul.f32 %v4418, %v4706
        %4803 = vrot.lane.b32.xlu0 %v4739, 32
        %v4804 = vpop.permute.xlu0 %4803
        %4805 = vrot.lane.b32.xlu0 %v4740, 32
        %v4806 = vpop.permute.xlu0 %4805
        %4807 = vrot.lane.b32.xlu0 %v4741, 32
        %v4808 = vpop.permute.xlu0 %4807
        %4809 = vrot.lane.b32.xlu0 %v4742, 32
        %v4810 = vpop.permute.xlu0 %4809
        %4811 = vrot.lane.b32.xlu0 %v4743, 32
        %v4812 = vpop.permute.xlu0 %4811
        %4813 = vrot.lane.b32.xlu0 %v4744, 32
        %v4814 = vpop.permute.xlu0 %4813
        %4815 = vrot.lane.b32.xlu0 %v4745, 32
        %v4816 = vpop.permute.xlu0 %4815
        %4817 = vrot.lane.b32.xlu0 %v4746, 32
        %v4818 = vpop.permute.xlu0 %4817
        %4819 = vrot.lane.b32.xlu0 %v4747, 32
        %v4820 = vpop.permute.xlu0 %4819
        %4821 = vrot.lane.b32.xlu0 %v4748, 32
        %v4822 = vpop.permute.xlu0 %4821
        %4823 = vrot.lane.b32.xlu0 %v4749, 32
        %v4824 = vpop.permute.xlu0 %4823
        %4825 = vrot.lane.b32.xlu0 %v4750, 32
        %v4826 = vpop.permute.xlu0 %4825
        %4827 = vrot.lane.b32.xlu0 %v4751, 32
        %v4828 = vpop.permute.xlu0 %4827
        %4829 = vrot.lane.b32.xlu0 %v4752, 32
        %v4830 = vpop.permute.xlu0 %4829
        %4831 = vrot.lane.b32.xlu0 %v4753, 32
        %v4832 = vpop.permute.xlu0 %4831
        %4833 = vrot.lane.b32.xlu0 %v4754, 32
        %v4834 = vpop.permute.xlu0 %4833
        %4835 = vrot.lane.b32.xlu0 %v4755, 32
        %v4836 = vpop.permute.xlu0 %4835
        %4837 = vrot.lane.b32.xlu0 %v4756, 32
        %v4838 = vpop.permute.xlu0 %4837
        %4839 = vrot.lane.b32.xlu0 %v4757, 32
        %v4840 = vpop.permute.xlu0 %4839
        %4841 = vrot.lane.b32.xlu0 %v4758, 32
        %v4842 = vpop.permute.xlu0 %4841
        %4843 = vrot.lane.b32.xlu0 %v4759, 32
        %v4844 = vpop.permute.xlu0 %4843
        %4845 = vrot.lane.b32.xlu0 %v4760, 32
        %v4846 = vpop.permute.xlu0 %4845
        %4847 = vrot.lane.b32.xlu0 %v4761, 32
        %v4848 = vpop.permute.xlu0 %4847
        %4849 = vrot.lane.b32.xlu0 %v4762, 32
        %v4850 = vpop.permute.xlu0 %4849
        %4851 = vrot.lane.b32.xlu0 %v4763, 32
        %v4852 = vpop.permute.xlu0 %4851
        %4853 = vrot.lane.b32.xlu0 %v4764, 32
        %v4854 = vpop.permute.xlu0 %4853
        %4855 = vrot.lane.b32.xlu0 %v4765, 32
        %v4856 = vpop.permute.xlu0 %4855
        %4857 = vrot.lane.b32.xlu0 %v4766, 32
        %v4858 = vpop.permute.xlu0 %4857
        %4859 = vrot.lane.b32.xlu0 %v4767, 32
        %v4860 = vpop.permute.xlu0 %4859
        %4861 = vrot.lane.b32.xlu0 %v4768, 32
        %v4862 = vpop.permute.xlu0 %4861
        %4863 = vrot.lane.b32.xlu0 %v4769, 32
        %v4864 = vpop.permute.xlu0 %4863
        %4865 = vrot.lane.b32.xlu0 %v4770, 32
        %v4866 = vpop.permute.xlu0 %4865
        %v4899 = vadd.f32 %v4579, %v4804
        %v4900 = vadd.f32 %v4580, %v4806
        %v4901 = vadd.f32 %v4581, %v4808
        %v4902 = vadd.f32 %v4582, %v4810
        %v4903 = vadd.f32 %v4583, %v4812
        %v4904 = vadd.f32 %v4584, %v4814
        %v4905 = vadd.f32 %v4585, %v4816
        %v4906 = vadd.f32 %v4586, %v4818
        %v4907 = vadd.f32 %v4587, %v4820
        %v4908 = vadd.f32 %v4588, %v4822
        %v4909 = vadd.f32 %v4589, %v4824
        %v4910 = vadd.f32 %v4590, %v4826
        %v4911 = vadd.f32 %v4591, %v4828
        %v4912 = vadd.f32 %v4592, %v4830
        %v4913 = vadd.f32 %v4593, %v4832
        %v4914 = vadd.f32 %v4594, %v4834
        %v4915 = vadd.f32 %v4595, %v4836
        %v4916 = vadd.f32 %v4596, %v4838
        %v4917 = vadd.f32 %v4597, %v4840
        %v4918 = vadd.f32 %v4598, %v4842
        %v4919 = vadd.f32 %v4599, %v4844
        %v4920 = vadd.f32 %v4600, %v4846
        %v4921 = vadd.f32 %v4601, %v4848
        %v4922 = vadd.f32 %v4602, %v4850
        %v4923 = vadd.f32 %v4603, %v4852
        %v4924 = vadd.f32 %v4604, %v4854
        %v4925 = vadd.f32 %v4605, %v4856
        %v4926 = vadd.f32 %v4606, %v4858
        %v4927 = vadd.f32 %v4607, %v4860
        %v4928 = vadd.f32 %v4608, %v4862
        %v4929 = vadd.f32 %v4609, %v4864
        %v4930 = vadd.f32 %v4610, %v4866
        %v4931 = vtanh.pop %v4899
        %v4932 = vtanh.pop %v4900
        %v4933 = vtanh.pop %v4901
        %v4934 = vtanh.pop %v4902
        %v4935 = vtanh.pop %v4903
        %v4936 = vtanh.pop %v4904
        %v4937 = vtanh.pop %v4905
        %v4938 = vtanh.pop %v4906
        %v4939 = vtanh.pop %v4907
        %v4940 = vtanh.pop %v4908
        %v4941 = vtanh.pop %v4909
        %v4942 = vtanh.pop %v4910
        %v4943 = vtanh.pop %v4911
        %v4944 = vtanh.pop %v4912
        %v4945 = vtanh.pop %v4913
        %v4946 = vtanh.pop %v4914
        %v4947 = vtanh.pop %v4915
        %v4948 = vtanh.pop %v4916
        %v4949 = vtanh.pop %v4917
        %v4950 = vtanh.pop %v4918
        %v4951 = vtanh.pop %v4919
        %v4952 = vtanh.pop %v4920
        %v4953 = vtanh.pop %v4921
        %v4954 = vtanh.pop %v4922
        %v4955 = vtanh.pop %v4923
        %v4956 = vtanh.pop %v4924
        %v4957 = vtanh.pop %v4925
        %v4958 = vtanh.pop %v4926
        %v4959 = vtanh.pop %v4927
        %v4960 = vtanh.pop %v4928
        %v4961 = vtanh.pop %v4929
        %v4962 = vtanh.pop %v4930
        %4995 = vrot.lane.b32.xlu0 %v4931, 32
        %v4996 = vpop.permute.xlu0 %4995
        %4997 = vrot.lane.b32.xlu0 %v4932, 32
        %v4998 = vpop.permute.xlu0 %4997
        %4999 = vrot.lane.b32.xlu0 %v4933, 32
        %v5000 = vpop.permute.xlu0 %4999
        %5001 = vrot.lane.b32.xlu0 %v4934, 32
        %v5002 = vpop.permute.xlu0 %5001
        %5003 = vrot.lane.b32.xlu0 %v4935, 32
        %v5004 = vpop.permute.xlu0 %5003
        %5005 = vrot.lane.b32.xlu0 %v4936, 32
        %v5006 = vpop.permute.xlu0 %5005
        %5007 = vrot.lane.b32.xlu0 %v4937, 32
        %v5008 = vpop.permute.xlu0 %5007
        %5009 = vrot.lane.b32.xlu0 %v4938, 32
        %v5010 = vpop.permute.xlu0 %5009
        %5011 = vrot.lane.b32.xlu0 %v4939, 32
        %v5012 = vpop.permute.xlu0 %5011
        %5013 = vrot.lane.b32.xlu0 %v4940, 32
        %v5014 = vpop.permute.xlu0 %5013
        %5015 = vrot.lane.b32.xlu0 %v4941, 32
        %v5016 = vpop.permute.xlu0 %5015
        %5017 = vrot.lane.b32.xlu0 %v4942, 32
        %v5018 = vpop.permute.xlu0 %5017
        %5019 = vrot.lane.b32.xlu0 %v4943, 32
        %v5020 = vpop.permute.xlu0 %5019
        %5021 = vrot.lane.b32.xlu0 %v4944, 32
        %v5022 = vpop.permute.xlu0 %5021
        %5023 = vrot.lane.b32.xlu0 %v4945, 32
        %v5024 = vpop.permute.xlu0 %5023
        %5025 = vrot.lane.b32.xlu0 %v4946, 32
        %v5026 = vpop.permute.xlu0 %5025
        %5027 = vrot.lane.b32.xlu0 %v4947, 32
        %v5028 = vpop.permute.xlu0 %5027
        %5029 = vrot.lane.b32.xlu0 %v4948, 32
        %v5030 = vpop.permute.xlu0 %5029
        %5031 = vrot.lane.b32.xlu0 %v4949, 32
        %v5032 = vpop.permute.xlu0 %5031
        %5033 = vrot.lane.b32.xlu0 %v4950, 32
        %v5034 = vpop.permute.xlu0 %5033
        %5035 = vrot.lane.b32.xlu0 %v4951, 32
        %v5036 = vpop.permute.xlu0 %5035
        %5037 = vrot.lane.b32.xlu0 %v4952, 32
        %v5038 = vpop.permute.xlu0 %5037
        %5039 = vrot.lane.b32.xlu0 %v4953, 32
        %v5040 = vpop.permute.xlu0 %5039
        %5041 = vrot.lane.b32.xlu0 %v4954, 32
        %v5042 = vpop.permute.xlu0 %5041
        %5043 = vrot.lane.b32.xlu0 %v4955, 32
        %v5044 = vpop.permute.xlu0 %5043
        %5045 = vrot.lane.b32.xlu0 %v4956, 32
        %v5046 = vpop.permute.xlu0 %5045
        %5047 = vrot.lane.b32.xlu0 %v4957, 32
        %v5048 = vpop.permute.xlu0 %5047
        %5049 = vrot.lane.b32.xlu0 %v4958, 32
        %v5050 = vpop.permute.xlu0 %5049
        %5051 = vrot.lane.b32.xlu0 %v4959, 32
        %v5052 = vpop.permute.xlu0 %5051
        %5053 = vrot.lane.b32.xlu0 %v4960, 32
        %v5054 = vpop.permute.xlu0 %5053
        %5055 = vrot.lane.b32.xlu0 %v4961, 32
        %v5056 = vpop.permute.xlu0 %5055
        %5057 = vrot.lane.b32.xlu0 %v4962, 32
        %v5058 = vpop.permute.xlu0 %5057
        %v5091 = vmul.f32 %v4387, %v4996
        %v5092 = vmul.f32 %v4388, %v4998
        %v5093 = vmul.f32 %v4389, %v5000
        %v5094 = vmul.f32 %v4390, %v5002
        %v5095 = vmul.f32 %v4391, %v5004
        %v5096 = vmul.f32 %v4392, %v5006
        %v5097 = vmul.f32 %v4393, %v5008
        %v5098 = vmul.f32 %v4394, %v5010
        %v5099 = vmul.f32 %v4395, %v5012
        %v5100 = vmul.f32 %v4396, %v5014
        %v5101 = vmul.f32 %v4397, %v5016
        %v5102 = vmul.f32 %v4398, %v5018
        %v5103 = vmul.f32 %v4399, %v5020
        %v5104 = vmul.f32 %v4400, %v5022
        %v5105 = vmul.f32 %v4401, %v5024
        %v5106 = vmul.f32 %v4402, %v5026
        %v5107 = vmul.f32 %v4403, %v5028
        %v5108 = vmul.f32 %v4404, %v5030
        %v5109 = vmul.f32 %v4405, %v5032
        %v5110 = vmul.f32 %v4406, %v5034
        %v5111 = vmul.f32 %v4407, %v5036
        %v5112 = vmul.f32 %v4408, %v5038
        %v5113 = vmul.f32 %v4409, %v5040
        %v5114 = vmul.f32 %v4410, %v5042
        %v5115 = vmul.f32 %v4411, %v5044
        %v5116 = vmul.f32 %v4412, %v5046
        %v5117 = vmul.f32 %v4413, %v5048
        %v5118 = vmul.f32 %v4414, %v5050
        %v5119 = vmul.f32 %v4415, %v5052
        %v5120 = vmul.f32 %v4416, %v5054
        %v5121 = vmul.f32 %v4417, %v5056
        %v5122 = vmul.f32 %v4418, %v5058
        %5155 = vrot.lane.b32.xlu0 %v4899, 96
        %v5156 = vpop.permute.xlu0 %5155
        %5157 = vrot.lane.b32.xlu0 %v4900, 96
        %v5158 = vpop.permute.xlu0 %5157
        %5159 = vrot.lane.b32.xlu0 %v4901, 96
        %v5160 = vpop.permute.xlu0 %5159
        %5161 = vrot.lane.b32.xlu0 %v4902, 96
        %v5162 = vpop.permute.xlu0 %5161
        %5163 = vrot.lane.b32.xlu0 %v4903, 96
        %v5164 = vpop.permute.xlu0 %5163
        %5165 = vrot.lane.b32.xlu0 %v4904, 96
        %v5166 = vpop.permute.xlu0 %5165
        %5167 = vrot.lane.b32.xlu0 %v4905, 96
        %v5168 = vpop.permute.xlu0 %5167
        %5169 = vrot.lane.b32.xlu0 %v4906, 96
        %v5170 = vpop.permute.xlu0 %5169
        %5171 = vrot.lane.b32.xlu0 %v4907, 96
        %v5172 = vpop.permute.xlu0 %5171
        %5173 = vrot.lane.b32.xlu0 %v4908, 96
        %v5174 = vpop.permute.xlu0 %5173
        %5175 = vrot.lane.b32.xlu0 %v4909, 96
        %v5176 = vpop.permute.xlu0 %5175
        %5177 = vrot.lane.b32.xlu0 %v4910, 96
        %v5178 = vpop.permute.xlu0 %5177
        %5179 = vrot.lane.b32.xlu0 %v4911, 96
        %v5180 = vpop.permute.xlu0 %5179
        %5181 = vrot.lane.b32.xlu0 %v4912, 96
        %v5182 = vpop.permute.xlu0 %5181
        %5183 = vrot.lane.b32.xlu0 %v4913, 96
        %v5184 = vpop.permute.xlu0 %5183
        %5185 = vrot.lane.b32.xlu0 %v4914, 96
        %v5186 = vpop.permute.xlu0 %5185
        %5187 = vrot.lane.b32.xlu0 %v4915, 96
        %v5188 = vpop.permute.xlu0 %5187
        %5189 = vrot.lane.b32.xlu0 %v4916, 96
        %v5190 = vpop.permute.xlu0 %5189
        %5191 = vrot.lane.b32.xlu0 %v4917, 96
        %v5192 = vpop.permute.xlu0 %5191
        %5193 = vrot.lane.b32.xlu0 %v4918, 96
        %v5194 = vpop.permute.xlu0 %5193
        %5195 = vrot.lane.b32.xlu0 %v4919, 96
        %v5196 = vpop.permute.xlu0 %5195
        %5197 = vrot.lane.b32.xlu0 %v4920, 96
        %v5198 = vpop.permute.xlu0 %5197
        %5199 = vrot.lane.b32.xlu0 %v4921, 96
        %v5200 = vpop.permute.xlu0 %5199
        %5201 = vrot.lane.b32.xlu0 %v4922, 96
        %v5202 = vpop.permute.xlu0 %5201
        %5203 = vrot.lane.b32.xlu0 %v4923, 96
        %v5204 = vpop.permute.xlu0 %5203
        %5205 = vrot.lane.b32.xlu0 %v4924, 96
        %v5206 = vpop.permute.xlu0 %5205
        %5207 = vrot.lane.b32.xlu0 %v4925, 96
        %v5208 = vpop.permute.xlu0 %5207
        %5209 = vrot.lane.b32.xlu0 %v4926, 96
        %v5210 = vpop.permute.xlu0 %5209
        %5211 = vrot.lane.b32.xlu0 %v4927, 96
        %v5212 = vpop.permute.xlu0 %5211
        %5213 = vrot.lane.b32.xlu0 %v4928, 96
        %v5214 = vpop.permute.xlu0 %5213
        %5215 = vrot.lane.b32.xlu0 %v4929, 96
        %v5216 = vpop.permute.xlu0 %5215
        %5217 = vrot.lane.b32.xlu0 %v4930, 96
        %v5218 = vpop.permute.xlu0 %5217
        %5251 = vst.msk [vmem:[#allocation4] sm:$0xff] %vm2024, %v5156
        %5252 = vst.msk [vmem:[#allocation4 + $0x8] sm:$0xff] %vm2024, %v5158
        %5253 = vst.msk [vmem:[#allocation4 + $0x10] sm:$0xff] %vm2024, %v5160
        %5254 = vst.msk [vmem:[#allocation4 + $0x18] sm:$0xff] %vm2024, %v5162
        %5255 = vst.msk [vmem:[#allocation4 + $0x20] sm:$0xff] %vm2024, %v5164
        %5256 = vst.msk [vmem:[#allocation4 + $0x28] sm:$0xff] %vm2024, %v5166
        %5257 = vst.msk [vmem:[#allocation4 + $0x30] sm:$0xff] %vm2024, %v5168
        %5258 = vst.msk [vmem:[#allocation4 + $0x38] sm:$0xff] %vm2024, %v5170
        %5259 = vst.msk [vmem:[#allocation4 + $0x40] sm:$0xff] %vm2024, %v5172
        %5260 = vst.msk [vmem:[#allocation4 + $0x48] sm:$0xff] %vm2024, %v5174
        %5261 = vst.msk [vmem:[#allocation4 + $0x50] sm:$0xff] %vm2024, %v5176
        %5262 = vst.msk [vmem:[#allocation4 + $0x58] sm:$0xff] %vm2024, %v5178
        %5263 = vst.msk [vmem:[#allocation4 + $0x60] sm:$0xff] %vm2024, %v5180
        %5264 = vst.msk [vmem:[#allocation4 + $0x68] sm:$0xff] %vm2024, %v5182
        %5265 = vst.msk [vmem:[#allocation4 + $0x70] sm:$0xff] %vm2024, %v5184
        %5266 = vst.msk [vmem:[#allocation4 + $0x78] sm:$0xff] %vm2024, %v5186
        %5267 = vst.msk [vmem:[#allocation4 + $0x80] sm:$0xff] %vm2024, %v5188
        %5268 = vst.msk [vmem:[#allocation4 + $0x88] sm:$0xff] %vm2024, %v5190
        %5269 = vst.msk [vmem:[#allocation4 + $0x90] sm:$0xff] %vm2024, %v5192
        %5270 = vst.msk [vmem:[#allocation4 + $0x98] sm:$0xff] %vm2024, %v5194
        %5271 = vst.msk [vmem:[#allocation4 + $0xa0] sm:$0xff] %vm2024, %v5196
        %5272 = vst.msk [vmem:[#allocation4 + $0xa8] sm:$0xff] %vm2024, %v5198
        %5273 = vst.msk [vmem:[#allocation4 + $0xb0] sm:$0xff] %vm2024, %v5200
        %5274 = vst.msk [vmem:[#allocation4 + $0xb8] sm:$0xff] %vm2024, %v5202
        %5275 = vst.msk [vmem:[#allocation4 + $0xc0] sm:$0xff] %vm2024, %v5204
        %5276 = vst.msk [vmem:[#allocation4 + $0xc8] sm:$0xff] %vm2024, %v5206
        %5277 = vst.msk [vmem:[#allocation4 + $0xd0] sm:$0xff] %vm2024, %v5208
        %5278 = vst.msk [vmem:[#allocation4 + $0xd8] sm:$0xff] %vm2024, %v5210
        %5279 = vst.msk [vmem:[#allocation4 + $0xe0] sm:$0xff] %vm2024, %v5212
        %5280 = vst.msk [vmem:[#allocation4 + $0xe8] sm:$0xff] %vm2024, %v5214
        %5281 = vst.msk [vmem:[#allocation4 + $0xf0] sm:$0xff] %vm2024, %v5216
        %5282 = vst.msk [vmem:[#allocation4 + $0xf8] sm:$0xff] %vm2024, %v5218
        %5315 = vrot.lane.b32.xlu0 %v5091, 64
        %v5316 = vpop.permute.xlu0 %5315
        %5317 = vrot.lane.b32.xlu0 %v5092, 64
        %v5318 = vpop.permute.xlu0 %5317
        %5319 = vrot.lane.b32.xlu0 %v5093, 64
        %v5320 = vpop.permute.xlu0 %5319
        %5321 = vrot.lane.b32.xlu0 %v5094, 64
        %v5322 = vpop.permute.xlu0 %5321
        %5323 = vrot.lane.b32.xlu0 %v5095, 64
        %v5324 = vpop.permute.xlu0 %5323
        %5325 = vrot.lane.b32.xlu0 %v5096, 64
        %v5326 = vpop.permute.xlu0 %5325
        %5327 = vrot.lane.b32.xlu0 %v5097, 64
        %v5328 = vpop.permute.xlu0 %5327
        %5329 = vrot.lane.b32.xlu0 %v5098, 64
        %v5330 = vpop.permute.xlu0 %5329
        %5331 = vrot.lane.b32.xlu0 %v5099, 64
        %v5332 = vpop.permute.xlu0 %5331
        %5333 = vrot.lane.b32.xlu0 %v5100, 64
        %v5334 = vpop.permute.xlu0 %5333
        %5335 = vrot.lane.b32.xlu0 %v5101, 64
        %v5336 = vpop.permute.xlu0 %5335
        %5337 = vrot.lane.b32.xlu0 %v5102, 64
        %v5338 = vpop.permute.xlu0 %5337
        %5339 = vrot.lane.b32.xlu0 %v5103, 64
        %v5340 = vpop.permute.xlu0 %5339
        %5341 = vrot.lane.b32.xlu0 %v5104, 64
        %v5342 = vpop.permute.xlu0 %5341
        %5343 = vrot.lane.b32.xlu0 %v5105, 64
        %v5344 = vpop.permute.xlu0 %5343
        %5345 = vrot.lane.b32.xlu0 %v5106, 64
        %v5346 = vpop.permute.xlu0 %5345
        %5347 = vrot.lane.b32.xlu0 %v5107, 64
        %v5348 = vpop.permute.xlu0 %5347
        %5349 = vrot.lane.b32.xlu0 %v5108, 64
        %v5350 = vpop.permute.xlu0 %5349
        %5351 = vrot.lane.b32.xlu0 %v5109, 64
        %v5352 = vpop.permute.xlu0 %5351
        %5353 = vrot.lane.b32.xlu0 %v5110, 64
        %v5354 = vpop.permute.xlu0 %5353
        %5355 = vrot.lane.b32.xlu0 %v5111, 64
        %v5356 = vpop.permute.xlu0 %5355
        %5357 = vrot.lane.b32.xlu0 %v5112, 64
        %v5358 = vpop.permute.xlu0 %5357
        %5359 = vrot.lane.b32.xlu0 %v5113, 64
        %v5360 = vpop.permute.xlu0 %5359
        %5361 = vrot.lane.b32.xlu0 %v5114, 64
        %v5362 = vpop.permute.xlu0 %5361
        %5363 = vrot.lane.b32.xlu0 %v5115, 64
        %v5364 = vpop.permute.xlu0 %5363
        %5365 = vrot.lane.b32.xlu0 %v5116, 64
        %v5366 = vpop.permute.xlu0 %5365
        %5367 = vrot.lane.b32.xlu0 %v5117, 64
        %v5368 = vpop.permute.xlu0 %5367
        %5369 = vrot.lane.b32.xlu0 %v5118, 64
        %v5370 = vpop.permute.xlu0 %5369
        %5371 = vrot.lane.b32.xlu0 %v5119, 64
        %v5372 = vpop.permute.xlu0 %5371
        %5373 = vrot.lane.b32.xlu0 %v5120, 64
        %v5374 = vpop.permute.xlu0 %5373
        %5375 = vrot.lane.b32.xlu0 %v5121, 64
        %v5376 = vpop.permute.xlu0 %5375
        %5377 = vrot.lane.b32.xlu0 %v5122, 64
        %v5378 = vpop.permute.xlu0 %5377
        %5411 = vst.msk [vmem:[%s2169 + $0x1] sm:$0xff] %vm2024, %v5316
        %5412 = vst.msk [vmem:[%s2169 + $0x9] sm:$0xff] %vm2024, %v5318
        %5413 = vst.msk [vmem:[%s2169 + $0x19] sm:$0xff] %vm2024, %v5320
        %5414 = vst.msk [vmem:[%s2169 + $0x21] sm:$0xff] %vm2024, %v5322
        %5415 = vst.msk [vmem:[%s2169 + $0x31] sm:$0xff] %vm2024, %v5324
        %5416 = vst.msk [vmem:[%s2169 + $0x39] sm:$0xff] %vm2024, %v5326
        %5417 = vst.msk [vmem:[%s2169 + $0x49] sm:$0xff] %vm2024, %v5328
        %5418 = vst.msk [vmem:[%s2169 + $0x51] sm:$0xff] %vm2024, %v5330
        %5419 = vst.msk [vmem:[%s2169 + $0x61] sm:$0xff] %vm2024, %v5332
        %5420 = vst.msk [vmem:[%s2169 + $0x69] sm:$0xff] %vm2024, %v5334
        %5421 = vst.msk [vmem:[%s2169 + $0x79] sm:$0xff] %vm2024, %v5336
        %5422 = vst.msk [vmem:[%s2169 + $0x81] sm:$0xff] %vm2024, %v5338
        %5423 = vst.msk [vmem:[%s2169 + $0x91] sm:$0xff] %vm2024, %v5340
        %5424 = vst.msk [vmem:[%s2169 + $0x99] sm:$0xff] %vm2024, %v5342
        %5425 = vst.msk [vmem:[%s2169 + $0xa9] sm:$0xff] %vm2024, %v5344
        %5426 = vst.msk [vmem:[%s2169 + $0xb1] sm:$0xff] %vm2024, %v5346
        %5427 = vst.msk [vmem:[%s2169 + $0xc1] sm:$0xff] %vm2024, %v5348
        %5428 = vst.msk [vmem:[%s2169 + $0xc9] sm:$0xff] %vm2024, %v5350
        %5429 = vst.msk [vmem:[%s2169 + $0xd9] sm:$0xff] %vm2024, %v5352
        %5430 = vst.msk [vmem:[%s2169 + $0xe1] sm:$0xff] %vm2024, %v5354
        %5431 = vst.msk [vmem:[%s2169 + $0xf1] sm:$0xff] %vm2024, %v5356
        %5432 = vst.msk [vmem:[%s2169 + $0xf9] sm:$0xff] %vm2024, %v5358
        %5433 = vst.msk [vmem:[%s2169 + $0x109] sm:$0xff] %vm2024, %v5360
        %5434 = vst.msk [vmem:[%s2169 + $0x111] sm:$0xff] %vm2024, %v5362
        %5435 = vst.msk [vmem:[%s2169 + $0x121] sm:$0xff] %vm2024, %v5364
        %5436 = vst.msk [vmem:[%s2169 + $0x129] sm:$0xff] %vm2024, %v5366
        %5437 = vst.msk [vmem:[%s2169 + $0x139] sm:$0xff] %vm2024, %v5368
        %5438 = vst.msk [vmem:[%s2169 + $0x141] sm:$0xff] %vm2024, %v5370
        %5439 = vst.msk [vmem:[%s2169 + $0x151] sm:$0xff] %vm2024, %v5372
        %5440 = vst.msk [vmem:[%s2169 + $0x159] sm:$0xff] %vm2024, %v5374
        %5441 = vst.msk [vmem:[%s2169 + $0x169] sm:$0xff] %vm2024, %v5376
        %5442 = vst.msk [vmem:[%s2169 + $0x171] sm:$0xff] %vm2024, %v5378
        %5443 = vst.msk [vmem:[%s247] sm:$0xff] %vm2024, %v5316
        %5444 = vst.msk [vmem:[%s247 + $0x8] sm:$0xff] %vm2024, %v5318
        %5445 = vst.msk [vmem:[%s247 + $0x10] sm:$0xff] %vm2024, %v5320
        %5446 = vst.msk [vmem:[%s247 + $0x18] sm:$0xff] %vm2024, %v5322
        %5447 = vst.msk [vmem:[%s247 + $0x20] sm:$0xff] %vm2024, %v5324
        %5448 = vst.msk [vmem:[%s247 + $0x28] sm:$0xff] %vm2024, %v5326
        %5449 = vst.msk [vmem:[%s247 + $0x30] sm:$0xff] %vm2024, %v5328
        %5450 = vst.msk [vmem:[%s247 + $0x38] sm:$0xff] %vm2024, %v5330
        %5451 = vst.msk [vmem:[%s247 + $0x40] sm:$0xff] %vm2024, %v5332
        %5452 = vst.msk [vmem:[%s247 + $0x48] sm:$0xff] %vm2024, %v5334
        %5453 = vst.msk [vmem:[%s247 + $0x50] sm:$0xff] %vm2024, %v5336
        %5454 = vst.msk [vmem:[%s247 + $0x58] sm:$0xff] %vm2024, %v5338
        %5455 = vst.msk [vmem:[%s247 + $0x60] sm:$0xff] %vm2024, %v5340
        %5456 = vst.msk [vmem:[%s247 + $0x68] sm:$0xff] %vm2024, %v5342
        %5457 = vst.msk [vmem:[%s247 + $0x70] sm:$0xff] %vm2024, %v5344
        %5458 = vst.msk [vmem:[%s247 + $0x78] sm:$0xff] %vm2024, %v5346
        %5459 = vst.msk [vmem:[%s247 + $0x80] sm:$0xff] %vm2024, %v5348
        %5460 = vst.msk [vmem:[%s247 + $0x88] sm:$0xff] %vm2024, %v5350
        %5461 = vst.msk [vmem:[%s247 + $0x90] sm:$0xff] %vm2024, %v5352
        %5462 = vst.msk [vmem:[%s247 + $0x98] sm:$0xff] %vm2024, %v5354
        %5463 = vst.msk [vmem:[%s247 + $0xa0] sm:$0xff] %vm2024, %v5356
        %5464 = vst.msk [vmem:[%s247 + $0xa8] sm:$0xff] %vm2024, %v5358
        %5465 = vst.msk [vmem:[%s247 + $0xb0] sm:$0xff] %vm2024, %v5360
        %5466 = vst.msk [vmem:[%s247 + $0xb8] sm:$0xff] %vm2024, %v5362
        %5467 = vst.msk [vmem:[%s247 + $0xc0] sm:$0xff] %vm2024, %v5364
        %5468 = vst.msk [vmem:[%s247 + $0xc8] sm:$0xff] %vm2024, %v5366
        %5469 = vst.msk [vmem:[%s247 + $0xd0] sm:$0xff] %vm2024, %v5368
        %5470 = vst.msk [vmem:[%s247 + $0xd8] sm:$0xff] %vm2024, %v5370
        %5471 = vst.msk [vmem:[%s247 + $0xe0] sm:$0xff] %vm2024, %v5372
        %5472 = vst.msk [vmem:[%s247 + $0xe8] sm:$0xff] %vm2024, %v5374
        %5473 = vst.msk [vmem:[%s247 + $0xf0] sm:$0xff] %vm2024, %v5376
        %5474 = vst.msk [vmem:[%s247 + $0xf8] sm:$0xff] %vm2024, %v5378
        %p5475 = scmp.eq.s32.totalorder %s28, 7
        // Predicated region
        $region41: #{tpu_custom_call.1} parent=35 // pred_check
          %p5476 = pneg %p5475
        $region42: #{tpu_custom_call.1} parent=35 // pred_check_branch
          %5478 = sbr.rel (%p5476) target = $region44
        $region43: #{tpu_custom_call.1} parent=35 // pred_region
          %5479 = vst.msk [vmem:[%s254] sm:$0xff] %vm2024, %v5156
          %5480 = vst.msk [vmem:[%s254 + $0x8] sm:$0xff] %vm2024, %v5158
          %5481 = vst.msk [vmem:[%s254 + $0x10] sm:$0xff] %vm2024, %v5160
          %5482 = vst.msk [vmem:[%s254 + $0x18] sm:$0xff] %vm2024, %v5162
          %5483 = vst.msk [vmem:[%s254 + $0x20] sm:$0xff] %vm2024, %v5164
          %5484 = vst.msk [vmem:[%s254 + $0x28] sm:$0xff] %vm2024, %v5166
          %5485 = vst.msk [vmem:[%s254 + $0x30] sm:$0xff] %vm2024, %v5168
          %5486 = vst.msk [vmem:[%s254 + $0x38] sm:$0xff] %vm2024, %v5170
          %5487 = vst.msk [vmem:[%s254 + $0x40] sm:$0xff] %vm2024, %v5172
          %5488 = vst.msk [vmem:[%s254 + $0x48] sm:$0xff] %vm2024, %v5174
          %5489 = vst.msk [vmem:[%s254 + $0x50] sm:$0xff] %vm2024, %v5176
          %5490 = vst.msk [vmem:[%s254 + $0x58] sm:$0xff] %vm2024, %v5178
          %5491 = vst.msk [vmem:[%s254 + $0x60] sm:$0xff] %vm2024, %v5180
          %5492 = vst.msk [vmem:[%s254 + $0x68] sm:$0xff] %vm2024, %v5182
          %5493 = vst.msk [vmem:[%s254 + $0x70] sm:$0xff] %vm2024, %v5184
          %5494 = vst.msk [vmem:[%s254 + $0x78] sm:$0xff] %vm2024, %v5186
          %5495 = vst.msk [vmem:[%s254 + $0x80] sm:$0xff] %vm2024, %v5188
          %5496 = vst.msk [vmem:[%s254 + $0x88] sm:$0xff] %vm2024, %v5190
          %5497 = vst.msk [vmem:[%s254 + $0x90] sm:$0xff] %vm2024, %v5192
          %5498 = vst.msk [vmem:[%s254 + $0x98] sm:$0xff] %vm2024, %v5194
          %5499 = vst.msk [vmem:[%s254 + $0xa0] sm:$0xff] %vm2024, %v5196
          %5500 = vst.msk [vmem:[%s254 + $0xa8] sm:$0xff] %vm2024, %v5198
          %5501 = vst.msk [vmem:[%s254 + $0xb0] sm:$0xff] %vm2024, %v5200
          %5502 = vst.msk [vmem:[%s254 + $0xb8] sm:$0xff] %vm2024, %v5202
          %5503 = vst.msk [vmem:[%s254 + $0xc0] sm:$0xff] %vm2024, %v5204
          %5504 = vst.msk [vmem:[%s254 + $0xc8] sm:$0xff] %vm2024, %v5206
          %5505 = vst.msk [vmem:[%s254 + $0xd0] sm:$0xff] %vm2024, %v5208
          %5506 = vst.msk [vmem:[%s254 + $0xd8] sm:$0xff] %vm2024, %v5210
          %5507 = vst.msk [vmem:[%s254 + $0xe0] sm:$0xff] %vm2024, %v5212
          %5508 = vst.msk [vmem:[%s254 + $0xe8] sm:$0xff] %vm2024, %v5214
          %5509 = vst.msk [vmem:[%s254 + $0xf0] sm:$0xff] %vm2024, %v5216
          %5510 = vst.msk [vmem:[%s254 + $0xf8] sm:$0xff] %vm2024, %v5218
        $region44: #{tpu_custom_call.1} parent=35 // pred_fallthru
          _
        %s5511 = sand.u32 %s140, 1
        %s5512 = scalar_lea.sflag [#allocation6], %s5511
        %s5513 = sand.u32 %s140, 1
        %s5514 = smul.addr %s5513, 256
        %s5515 = scalar_lea.vmem [#allocation5], %s5514
        %s5516 = sand.u32 %s166, 1
        %s5517 = scalar_lea.sflag [#allocation8], %s5516
        %s5518 = sand.u32 %s166, 1
        %s5519 = smul.addr %s5518, 256
        %s5520 = scalar_lea.vmem [#allocation7], %s5519
        // Predicated region
        $region45: #{tpu_custom_call.1} parent=35 // pred_check
          %p5521 = pneg %p150
        $region46: #{tpu_custom_call.1} parent=35 // pred_check_branch
          %5523 = sbr.rel (%p5521) target = $region48
        $region47: #{tpu_custom_call.1} parent=35 // pred_region
          %s5524 = smul.u32 %s27, 8
          %s5525 = sadd.s32 %s5524, %s28
          %s5527 = ssub.s32 4096, 4096
          %5528 = vsyncadd %s5512, %s5527
          %s5529 = smul.addr %s5525, 32
          %s5530 = smul.addr %s5529, 128
          %s5531 = scalar_lea.hbm %s4, %s5530
          %s5532 = sshll.u32 %s5515, 4
          %s5533 = int_to_ptr.vmem [resolvable:$true] %s5532
          %5538 = dma.vmem_to_hbm [thread:$0]  %s5533, 4096, %s5531, %s5512, 128, 128, 8
        $region48: #{tpu_custom_call.1} parent=35 // pred_fallthru
          _
        // Predicated region
        $region49: #{tpu_custom_call.1} parent=35 // pred_check
          %p5539 = pneg %p176
        $region50: #{tpu_custom_call.1} parent=35 // pred_check_branch
          %5541 = sbr.rel (%p5539) target = $region52
        $region51: #{tpu_custom_call.1} parent=35 // pred_region
          %s5543 = ssub.s32 4096, 4096
          %5544 = vsyncadd %s5517, %s5543
          %s5545 = smul.addr %s27, 32
          %s5546 = smul.addr %s5545, 128
          %s5547 = scalar_lea.hbm %s5, %s5546
          %s5548 = sshll.u32 %s5520, 4
          %s5549 = int_to_ptr.vmem [resolvable:$true] %s5548
          %5554 = dma.vmem_to_hbm [thread:$0]  %s5549, 4096, %s5547, %s5517, 128, 128, 8
        $region52: #{tpu_custom_call.1} parent=35 // pred_fallthru
          _
      $region36: #{tpu_custom_call.1} parent=5 // pred_fallthru
        _
      %p5555 = scmp.le.s32.totalorder 2, %s18
      // Predicated region
      $region53: #{tpu_custom_call.1} parent=5 // pred_check
        %p5556 = pneg %p5555
      $region54: #{tpu_custom_call.1} parent=5 // pred_check_branch
        %5558 = sbr.rel (%p5556) target = $region56
      $region55: #{tpu_custom_call.1} parent=5 // pred_region
        %s5559 = ssub.s32 %s18, 2
        // Predicated region
        $region57: #{tpu_custom_call.1} parent=55 // pred_check
          %p5560 = pneg %p156
        $region58: #{tpu_custom_call.1} parent=55 // pred_check_branch
          %5562 = sbr.rel (%p5560) target = $region60
        $region59: #{tpu_custom_call.1} parent=55 // pred_region
          %s5563 = sand.u32 %s141, 1
          %s5564 = scalar_lea.sflag [#allocation6], %s5563
          %s5565 = sand.u32 %s141, 1
          %s5566 = smul.addr %s5565, 256
          %s5567 = scalar_lea.vmem [#allocation5], %s5566
          %5568 = dma.done %s5564, 4096
        $region60: #{tpu_custom_call.1} parent=55 // pred_fallthru
          _
        // Predicated region
        $region61: #{tpu_custom_call.1} parent=55 // pred_check
          %p5569 = pneg %p182
        $region62: #{tpu_custom_call.1} parent=55 // pred_check_branch
          %5571 = sbr.rel (%p5569) target = $region64
        $region63: #{tpu_custom_call.1} parent=55 // pred_region
          %s5572 = sand.u32 %s167, 1
          %s5573 = scalar_lea.sflag [#allocation8], %s5572
          %s5574 = sand.u32 %s167, 1
          %s5575 = smul.addr %s5574, 256
          %s5576 = scalar_lea.vmem [#allocation7], %s5575
          %5577 = dma.done %s5573, 4096
        $region64: #{tpu_custom_call.1} parent=55 // pred_fallthru
          _
      $region56: #{tpu_custom_call.1} parent=5 // pred_fallthru
        _
    $region6: #{tpu_custom_call.1} parent=1 // loop_footer
      %s22 = sadd.s32 1, %s18
    $region7: #{tpu_custom_call.1} parent=1 // loop_footer_branch
      %17 = sbr.rel target = $region3
    $region8: #{tpu_custom_call.1} parent=1 // loop_exit
      _
    %5578 = vsyncpa [#allocation6], 1
    %s5579 = scalar_lea.sflag [#allocation6], 1
    %5580 = vsyncpa %s5579, 1
    %5581 = vsyncpa [#allocation8], 1
    %s5582 = scalar_lea.sflag [#allocation8], 1
    %5583 = vsyncpa %s5582, 1

</llo_original>
